<compile_context>
chip_gen: v7x
topology: tpu7x:2x2x1
jax: 0.10.0
libtpu: 0.0.40
codegen_flags: <defaults>
</compile_context>

<pallas_src>
import jax
import jax.numpy as jnp
import numpy as np
from jax import lax
from jax.experimental import pallas as pl
from jax.experimental.pallas import tpu as pltpu

EPS = 1e-5
COUT = 64


# --------------------------------------------------------------------------
# Kernel 1: tiled im2col matmul (bf16 MXU) + per-tile BN partial statistics
# --------------------------------------------------------------------------
def _conv_stats_kernel(p_ref, w_ref, conv_ref, psum_ref, psq_ref):
    # p_ref: (TILE_M, K) bf16, w_ref: (K, C) bf16
    conv = jnp.dot(p_ref[...], w_ref[...], preferred_element_type=jnp.float32)
    conv_ref[...] = conv.astype(conv_ref.dtype)          # bf16 store
    c = conv.shape[1]
    # partial per-channel statistics for the (global) BatchNorm reduction
    psum_ref[...] = jnp.sum(conv, axis=0, keepdims=True).reshape(1, 1, c)
    psq_ref[...] = jnp.sum(conv * conv, axis=0, keepdims=True).reshape(1, 1, c)


# --------------------------------------------------------------------------
# Kernel 2: fused BN-apply + ReLU + 3x3 stride-2 pad-1 max-pool
# Input is the conv map folded lane-dense: last dim = 2*C = 128 where
# lanes [0:C)  = original even columns (2j) and lanes [C:2C) = odd columns (2j+1).
# --------------------------------------------------------------------------
def _bn_relu_pool_kernel(x_ref, scale_ref, shift_ref, o_ref):
    bt, oh, half_w, c2 = x_ref.shape        # half_w == OW//2 == PW
    c = c2 // 2
    ph = oh // 2

    x = x_ref[...].astype(jnp.float32)      # keep BN epilogue math in f32
    scale = scale_ref[...].reshape(1, 1, 1, c2)
    shift = shift_ref[...].reshape(1, 1, 1, c2)
    y = jnp.maximum(x * scale + shift, 0.0)                 # BN + ReLU, (bt,oh,half_w,2c)

    even = y[:, :, :, :c]                   # original columns 2j
    odd = y[:, :, :, c:]                    # original columns 2j+1
    # column window for pooled col p is {2p-1, 2p, 2p+1}; 2p-1 == odd[p-1].
    # p==0 filler duplicates an in-window element (col 0), so the max is exact.
    left = jnp.concatenate([even[:, :, :1, :], odd[:, :, : half_w - 1, :]], axis=2)
    cmax = jnp.maximum(jnp.maximum(even, odd), left)        # (bt, oh, pw, c)

    # row window for pooled row p is {2p-1, 2p, 2p+1}; split rows even/odd via a
    # leading-dim reshape (layout-free), shift the odd-row plane by one.
    cm5 = cmax.reshape(bt, ph, 2, half_w, c)
    r_even = cm5[:, :, 0, :, :]             # rows 2p
    r_odd = cm5[:, :, 1, :, :]              # rows 2p+1
    r_up = jnp.concatenate([cmax[:, :1, :, :], r_odd[:, : ph - 1, :, :]], axis=1)
    o_ref[...] = jnp.maximum(jnp.maximum(r_even, r_odd), r_up)


# --------------------------------------------------------------------------
# Glue
# --------------------------------------------------------------------------
def _im2col(x_nhwc, kh, kw, stride, pad):
    n, h, w, c = x_nhwc.shape
    xp = jnp.pad(x_nhwc, ((0, 0), (pad, pad), (pad, pad), (0, 0)))
    oh = (h + 2 * pad - kh) // stride + 1
    ow = (w + 2 * pad - kw) // stride + 1
    cols = []
    for i in range(kh):
        for j in range(kw):
            cols.append(
                lax.slice(
                    xp,
                    (0, i, j, 0),
                    (n, i + (oh - 1) * stride + 1, j + (ow - 1) * stride + 1, c),
                    (1, stride, stride, 1),
                )
            )
    patches = jnp.concatenate(cols, axis=-1)  # (N, OH, OW, KH*KW*Cin)
    return patches, oh, ow


def _pick_tile_m(m, target=1024):
    """Largest multiple-of-16 tile <= target that divides m (else pad m up)."""
    t = min(target, max(16, m))
    t -= t % 16
    if t >= 16:
        for cand in range(t, 15, -16):
            if m % cand == 0:
                return cand, m
    t = max(t, 16)
    return t, pl.cdiv(m, t) * t


def resnet_client_forward(x_nchw, params):
    w = params["conv1_w"]
    gamma = params["bn1_gamma"].astype(jnp.float32)
    beta = params["bn1_beta"].astype(jnp.float32)

    n, cin, h, wdim = x_nchw.shape
    cout, _, kh, kw = w.shape

    # ---- conv as a tiled im2col matmul (bf16 feeds the MXU natively) ----
    x_nhwc = jnp.transpose(x_nchw, (0, 2, 3, 1)).astype(jnp.bfloat16)
    # TODO(synk): build patches inside the kernel (manual DMA over overlapping
    # rows) to remove the HBM im2col round trip entirely.
    patches, oh, ow = _im2col(x_nhwc, kh, kw, stride=2, pad=3)
    m = n * oh * ow
    k = kh * kw * cin
    p2d = patches.reshape(m, k)
    w2d = jnp.transpose(w, (2, 3, 1, 0)).reshape(k, cout).astype(jnp.bfloat16)

    tile_m, m_pad = _pick_tile_m(m)
    if m_pad != m:
        # zero rows contribute 0 to both partial sums -> BN stats stay exact
        p2d = jnp.pad(p2d, ((0, m_pad - m), (0, 0)))
    num_tiles = m_pad // tile_m

    conv_flat, psum, psq = pl.pallas_call(
        _conv_stats_kernel,
        out_shape=(
            jax.ShapeDtypeStruct((m_pad, cout), jnp.bfloat16),
            jax.ShapeDtypeStruct((num_tiles, 1, cout), jnp.float32),
            jax.ShapeDtypeStruct((num_tiles, 1, cout), jnp.float32),
        ),
        grid=(num_tiles,),
        in_specs=[
            pl.BlockSpec((tile_m, k), lambda i: (i, 0)),
            pl.BlockSpec((k, cout), lambda i: (0, 0)),
        ],
        out_specs=(
            pl.BlockSpec((tile_m, cout), lambda i: (i, 0)),
            pl.BlockSpec((1, 1, cout), lambda i: (i, 0, 0)),
            pl.BlockSpec((1, 1, cout), lambda i: (i, 0, 0)),
        ),
        compiler_params=pltpu.CompilerParams(
            dimension_semantics=("parallel",),
            vmem_limit_bytes=32 * 1024 * 1024,
        ),
        cost_estimate=pl.CostEstimate(
            flops=2 * m_pad * k * cout,
            transcendentals=0,
            bytes_accessed=m_pad * k * 2 + k * cout * 2 + m_pad * cout * 2,
        ),
    )(p2d, w2d)

    # ---- phase-2 BN: reduce the tiny partials globally (XLA glue, ~KB) ----
    ssum = jnp.sum(psum[:, 0, :], axis=0)
    ssq = jnp.sum(psq[:, 0, :], axis=0)
    mean = ssum / m
    var = ssq / m - mean * mean                     # biased var, training-mode BN
    inv = lax.rsqrt(var + EPS)
    scale = gamma * inv
    shift = beta - mean * scale
    scale2 = jnp.concatenate([scale, scale]).reshape(1, 2 * cout)
    shift2 = jnp.concatenate([shift, shift]).reshape(1, 2 * cout)

    # ---- fused BN-apply + ReLU + maxpool ----
    assert oh % 2 == 0 and ow % 2 == 0 and oh >= 4 and ow >= 4, (oh, ow)
    ph, pw = oh // 2, ow // 2
    # lane-dense, metadata-only fold: (M, C) -> (N, OH, OW/2, 2C)
    conv_folded = conv_flat[:m].reshape(n, oh, ow // 2, 2 * cout)

    per_img_bytes = oh * (ow // 2) * (2 * cout) * 2
    bt = n if n * per_img_bytes <= (2 << 20) else 1   # batch tile per grid step

    pooled = pl.pallas_call(
        _bn_relu_pool_kernel,
        out_shape=jax.ShapeDtypeStruct((n, ph, pw, cout), jnp.float32),
        grid=(n // bt,),
        in_specs=[
            pl.BlockSpec((bt, oh, ow // 2, 2 * cout), lambda i: (i, 0, 0, 0)),
            pl.BlockSpec((1, 2 * cout), lambda i: (0, 0)),
            pl.BlockSpec((1, 2 * cout), lambda i: (0, 0)),
        ],
        out_specs=pl.BlockSpec((bt, ph, pw, cout), lambda i: (i, 0, 0, 0)),
        compiler_params=pltpu.CompilerParams(
            dimension_semantics=("parallel",),
            vmem_limit_bytes=32 * 1024 * 1024,
        ),
        cost_estimate=pl.CostEstimate(
            flops=8 * n * oh * ow * cout,
            transcendentals=0,
            bytes_accessed=n * oh * ow * cout * 2 + n * ph * pw * cout * 4,
        ),
    )(conv_folded, scale2, shift2)

    return jnp.transpose(pooled, (0, 3, 1, 2))  # back to NCHW


# --------------------------------------------------------------------------
# Deterministic parameter init (matches module __init__)
# --------------------------------------------------------------------------
def init_params(key):
    cout, cin, kh, kw = COUT, 3, 7, 7
    fan_out = cout * kh * kw  # kaiming_normal_(mode='fan_out', nonlinearity='relu')
    std = (2.0 / fan_out) ** 0.5
    w = jax.random.normal(key, (cout, cin, kh, kw), jnp.float32) * std
    gamma = jnp.ones((cout,), jnp.float32)   # BN weight = 1
    beta = jnp.zeros((cout,), jnp.float32)   # BN bias = 0
    return {"conv1_w": w, "bn1_gamma": gamma, "bn1_beta": beta}


# --------------------------------------------------------------------------
# Pure-JAX reference for validation
# --------------------------------------------------------------------------
def reference_forward(x_nchw, params):
    w = params["conv1_w"]
    y = lax.conv_general_dilated(
        x_nchw, w, window_strides=(2, 2), padding=((3, 3), (3, 3)),
        dimension_numbers=("NCHW", "OIHW", "NCHW"),
        precision=jax.lax.Precision.HIGHEST,
    )
    mean = jnp.mean(y, axis=(0, 2, 3), keepdims=True)
    var = jnp.mean(jnp.square(y - mean), axis=(0, 2, 3), keepdims=True)
    y = (y - mean) * lax.rsqrt(var + EPS) \
        * params["bn1_gamma"].reshape(1, -1, 1, 1) + params["bn1_beta"].reshape(1, -1, 1, 1)
    y = jnp.maximum(y, 0.0)
    y = lax.reduce_window(
        y, -jnp.inf, lax.max,
        window_dimensions=(1, 1, 3, 3),
        window_strides=(1, 1, 2, 2),
        padding=((0, 0), (0, 0), (1, 1), (1, 1)),
    )
    return y


if __name__ == "__main__":
    key = jax.random.PRNGKey(0)
    kp, kx = jax.random.split(key)
    params = init_params(kp)
    # small but multi-tile: M = 2*32*32 = 2048 -> 2 M-tiles in kernel 1
    x = jax.random.normal(kx, (2, 3, 64, 64), jnp.float32)  # NCHW, like PyTorch

    out = jax.jit(resnet_client_forward)(x, params)
    out = jax.block_until_ready(out)
    assert out.shape == (2, 64, 16, 16), out.shape

    ref = reference_forward(x, params)
    np.testing.assert_allclose(np.asarray(out), np.asarray(ref), rtol=2e-2, atol=2e-2)

    print("KERNEL_OK")
</pallas_src>

<mosaic_0001>
module attributes {stable_mosaic.version = 11 : i64} {
  func.func @_conv_stats_kernel(%arg0: i32, %arg1: memref<1024x147xbf16, #tpu.memory_space<vmem>>, %arg2: memref<147x64xbf16, #tpu.memory_space<vmem>>, %arg3: memref<1024x64xbf16, #tpu.memory_space<vmem>>, %arg4: memref<1x1x64xf32, #tpu.memory_space<vmem>>, %arg5: memref<1x1x64xf32, #tpu.memory_space<vmem>>) attributes {dimension_semantics = [#tpu.dimension_semantics<parallel>], iteration_bounds = array<i64: 2>, scalar_prefetch = 0 : i64, scratch_operands = 0 : i64, tpu.core_type = #tpu.core_type<tc>, window_params = [{transform_indices = @transform_0, window_bounds = array<i64: 1024, 147>}, {pipeline_mode = #tpu.pipeline_mode<synchronous>, transform_indices = @transform_1, window_bounds = array<i64: 147, 64>}, {transform_indices = @transform_2, window_bounds = array<i64: 1024, 64>}, {transform_indices = @transform_3, window_bounds = array<i64: 1, 1, 64>}, {transform_indices = @transform_4, window_bounds = array<i64: 1, 1, 64>}]} {
    %c0 = arith.constant 0 : index
    %c0_0 = arith.constant 0 : index
    %0 = vector.load %arg1[%c0, %c0_0] : memref<1024x147xbf16, #tpu.memory_space<vmem>>, vector<1024x147xbf16>
    %c0_1 = arith.constant 0 : index
    %c0_2 = arith.constant 0 : index
    %1 = vector.load %arg2[%c0_1, %c0_2] : memref<147x64xbf16, #tpu.memory_space<vmem>>, vector<147x64xbf16>
    %cst = arith.constant dense<0.000000e+00> : vector<1024x64xf32>
    %2 = tpu.matmul %0, %1, %cst {dimension_numbers = #tpu.dot_dimension_numbers<[1], [0], [0], [1], [0, 0, 1, 1], [], []>} : vector<1024x147xbf16>, vector<147x64xbf16>, vector<1024x64xf32> -> vector<1024x64xf32>
    %3 = arith.truncf %2 : vector<1024x64xf32> to vector<1024x64xbf16>
    %c0_3 = arith.constant 0 : index
    %c0_4 = arith.constant 0 : index
    %4 = vector.load %arg3[%c0_3, %c0_4] : memref<1024x64xbf16, #tpu.memory_space<vmem>>, vector<1024x64xbf16>
    tpu.vector_store %arg3[%c0_3, %c0_4], %3 {strides = array<i32>} : memref<1024x64xbf16, #tpu.memory_space<vmem>>, vector<1024x64xbf16>,
    %cst_5 = arith.constant dense<0.000000e+00> : vector<64xf32>
    %5 = vector.multi_reduction <add>, %2, %cst_5 [0] : vector<1024x64xf32> to vector<64xf32>
    %6 = vector.shape_cast %5 : vector<64xf32> to vector<1x64xf32>
    %7 = vector.shape_cast %6 : vector<1x64xf32> to vector<1x1x64xf32>
    %c0_6 = arith.constant 0 : index
    %c0_7 = arith.constant 0 : index
    %c0_8 = arith.constant 0 : index
    %8 = vector.load %arg4[%c0_6, %c0_7, %c0_8] : memref<1x1x64xf32, #tpu.memory_space<vmem>>, vector<1x1x64xf32>
    tpu.vector_store %arg4[%c0_6, %c0_7, %c0_8], %7 {strides = array<i32>} : memref<1x1x64xf32, #tpu.memory_space<vmem>>, vector<1x1x64xf32>,
    %9 = arith.mulf %2, %2 : vector<1024x64xf32>
    %cst_9 = arith.constant dense<0.000000e+00> : vector<64xf32>
    %10 = vector.multi_reduction <add>, %9, %cst_9 [0] : vector<1024x64xf32> to vector<64xf32>
    %11 = vector.shape_cast %10 : vector<64xf32> to vector<1x64xf32>
    %12 = vector.shape_cast %11 : vector<1x64xf32> to vector<1x1x64xf32>
    %c0_10 = arith.constant 0 : index
    %c0_11 = arith.constant 0 : index
    %c0_12 = arith.constant 0 : index
    %13 = vector.load %arg5[%c0_10, %c0_11, %c0_12] : memref<1x1x64xf32, #tpu.memory_space<vmem>>, vector<1x1x64xf32>
    tpu.vector_store %arg5[%c0_10, %c0_11, %c0_12], %12 {strides = array<i32>} : memref<1x1x64xf32, #tpu.memory_space<vmem>>, vector<1x1x64xf32>,
    return
  }
  func.func @transform_0(%arg0: i32) -> (i32, i32) {
    %c0_i32 = arith.constant 0 : i32
    %c0_i32_0 = arith.constant 0 : i32
    return %arg0, %c0_i32 : i32, i32
  }
  func.func @transform_1(%arg0: i32) -> (i32, i32) {
    %c0_i32 = arith.constant 0 : i32
    %c0_i32_0 = arith.constant 0 : i32
    %c0_i32_1 = arith.constant 0 : i32
    return %c0_i32, %c0_i32_0 : i32, i32
  }
  func.func @transform_2(%arg0: i32) -> (i32, i32) {
    %c0_i32 = arith.constant 0 : i32
    %c0_i32_0 = arith.constant 0 : i32
    return %arg0, %c0_i32 : i32, i32
  }
  func.func @transform_3(%arg0: i32) -> (i32, i32, i32) {
    %c0_i32 = arith.constant 0 : i32
    %c0_i32_0 = arith.constant 0 : i32
    %c0_i32_1 = arith.constant 0 : i32
    return %arg0, %c0_i32, %c0_i32_0 : i32, i32, i32
  }
  func.func @transform_4(%arg0: i32) -> (i32, i32, i32) {
    %c0_i32 = arith.constant 0 : i32
    %c0_i32_0 = arith.constant 0 : i32
    %c0_i32_1 = arith.constant 0 : i32
    return %arg0, %c0_i32, %c0_i32_0 : i32, i32, i32
  }
}

module attributes {stable_mosaic.version = 11 : i64} {
  func.func @_bn_relu_pool_kernel(%arg0: i32, %arg1: memref<2x32x16x128xbf16, #tpu.memory_space<vmem>>, %arg2: memref<1x128xf32, #tpu.memory_space<vmem>>, %arg3: memref<1x128xf32, #tpu.memory_space<vmem>>, %arg4: memref<2x16x16x64xf32, #tpu.memory_space<vmem>>) attributes {dimension_semantics = [#tpu.dimension_semantics<parallel>], iteration_bounds = array<i64: 1>, scalar_prefetch = 0 : i64, scratch_operands = 0 : i64, tpu.core_type = #tpu.core_type<tc>, window_params = [{transform_indices = @transform_0, window_bounds = array<i64: 2, 32, 16, 128>}, {pipeline_mode = #tpu.pipeline_mode<synchronous>, transform_indices = @transform_1, window_bounds = array<i64: 1, 128>}, {pipeline_mode = #tpu.pipeline_mode<synchronous>, transform_indices = @transform_2, window_bounds = array<i64: 1, 128>}, {transform_indices = @transform_3, window_bounds = array<i64: 2, 16, 16, 64>}]} {
    %c0 = arith.constant 0 : index
    %c0_0 = arith.constant 0 : index
    %c0_1 = arith.constant 0 : index
    %c0_2 = arith.constant 0 : index
    %0 = vector.load %arg1[%c0, %c0_0, %c0_1, %c0_2] : memref<2x32x16x128xbf16, #tpu.memory_space<vmem>>, vector<2x32x16x128xbf16>
    %1 = arith.extf %0 : vector<2x32x16x128xbf16> to vector<2x32x16x128xf32>
    %c0_3 = arith.constant 0 : index
    %c0_4 = arith.constant 0 : index
    %2 = vector.load %arg2[%c0_3, %c0_4] : memref<1x128xf32, #tpu.memory_space<vmem>>, vector<1x128xf32>
    %3 = vector.shape_cast %2 : vector<1x128xf32> to vector<1x1x1x128xf32>
    %c0_5 = arith.constant 0 : index
    %c0_6 = arith.constant 0 : index
    %4 = vector.load %arg3[%c0_5, %c0_6] : memref<1x128xf32, #tpu.memory_space<vmem>>, vector<1x128xf32>
    %5 = vector.shape_cast %4 : vector<1x128xf32> to vector<1x1x1x128xf32>
    %6 = vector.broadcast %3 : vector<1x1x1x128xf32> to vector<2x32x16x128xf32>
    %7 = arith.mulf %1, %6 : vector<2x32x16x128xf32>
    %8 = vector.broadcast %5 : vector<1x1x1x128xf32> to vector<2x32x16x128xf32>
    %9 = arith.addf %7, %8 : vector<2x32x16x128xf32>
    %cst = arith.constant 0.000000e+00 : f32
    %10 = vector.broadcast %cst : f32 to vector<2x32x16x128xf32>
    %11 = arith.maximumf %9, %10 : vector<2x32x16x128xf32>
    %12 = vector.extract_strided_slice %11 {offsets = [0, 0, 0, 0], sizes = [2, 32, 16, 64], strides = [1, 1, 1, 1]} : vector<2x32x16x128xf32> to vector<2x32x16x64xf32>
    %13 = vector.extract_strided_slice %11 {offsets = [0, 0, 0, 64], sizes = [2, 32, 16, 64], strides = [1, 1, 1, 1]} : vector<2x32x16x128xf32> to vector<2x32x16x64xf32>
    %14 = vector.extract_strided_slice %12 {offsets = [0, 0, 0, 0], sizes = [2, 32, 1, 64], strides = [1, 1, 1, 1]} : vector<2x32x16x64xf32> to vector<2x32x1x64xf32>
    %15 = vector.extract_strided_slice %13 {offsets = [0, 0, 0, 0], sizes = [2, 32, 15, 64], strides = [1, 1, 1, 1]} : vector<2x32x16x64xf32> to vector<2x32x15x64xf32>
    %16 = tpu.concatenate %14, %15 in 2 : vector<2x32x1x64xf32>, vector<2x32x15x64xf32> -> vector<2x32x16x64xf32>
    %17 = arith.maximumf %12, %13 : vector<2x32x16x64xf32>
    %18 = arith.maximumf %17, %16 : vector<2x32x16x64xf32>
    %19 = vector.shape_cast %18 : vector<2x32x16x64xf32> to vector<2x16x2x16x64xf32>
    %20 = vector.extract_strided_slice %19 {offsets = [0, 0, 0, 0, 0], sizes = [2, 16, 1, 16, 64], strides = [1, 1, 1, 1, 1]} : vector<2x16x2x16x64xf32> to vector<2x16x1x16x64xf32>
    %21 = vector.shape_cast %20 : vector<2x16x1x16x64xf32> to vector<2x16x16x64xf32>
    %22 = vector.extract_strided_slice %19 {offsets = [0, 0, 1, 0, 0], sizes = [2, 16, 1, 16, 64], strides = [1, 1, 1, 1, 1]} : vector<2x16x2x16x64xf32> to vector<2x16x1x16x64xf32>
    %23 = vector.shape_cast %22 : vector<2x16x1x16x64xf32> to vector<2x16x16x64xf32>
    %24 = vector.extract_strided_slice %18 {offsets = [0, 0, 0, 0], sizes = [2, 1, 16, 64], strides = [1, 1, 1, 1]} : vector<2x32x16x64xf32> to vector<2x1x16x64xf32>
    %25 = vector.extract_strided_slice %23 {offsets = [0, 0, 0, 0], sizes = [2, 15, 16, 64], strides = [1, 1, 1, 1]} : vector<2x16x16x64xf32> to vector<2x15x16x64xf32>
    %26 = tpu.concatenate %24, %25 in 1 : vector<2x1x16x64xf32>, vector<2x15x16x64xf32> -> vector<2x16x16x64xf32>
    %27 = arith.maximumf %21, %23 : vector<2x16x16x64xf32>
    %28 = arith.maximumf %27, %26 : vector<2x16x16x64xf32>
    %c0_7 = arith.constant 0 : index
    %c0_8 = arith.constant 0 : index
    %c0_9 = arith.constant 0 : index
    %c0_10 = arith.constant 0 : index
    %29 = vector.load %arg4[%c0_7, %c0_8, %c0_9, %c0_10] : memref<2x16x16x64xf32, #tpu.memory_space<vmem>>, vector<2x16x16x64xf32>
    tpu.vector_store %arg4[%c0_7, %c0_8, %c0_9, %c0_10], %28 {strides = array<i32>} : memref<2x16x16x64xf32, #tpu.memory_space<vmem>>, vector<2x16x16x64xf32>,
    return
  }
  func.func @transform_0(%arg0: i32) -> (i32, i32, i32, i32) {
    %c0_i32 = arith.constant 0 : i32
    %c0_i32_0 = arith.constant 0 : i32
    %c0_i32_1 = arith.constant 0 : i32
    %c0_i32_2 = arith.constant 0 : i32
    return %arg0, %c0_i32, %c0_i32_0, %c0_i32_1 : i32, i32, i32, i32
  }
  func.func @transform_1(%arg0: i32) -> (i32, i32) {
    %c0_i32 = arith.constant 0 : i32
    %c0_i32_0 = arith.constant 0 : i32
    %c0_i32_1 = arith.constant 0 : i32
    return %c0_i32, %c0_i32_0 : i32, i32
  }
  func.func @transform_2(%arg0: i32) -> (i32, i32) {
    %c0_i32 = arith.constant 0 : i32
    %c0_i32_0 = arith.constant 0 : i32
    %c0_i32_1 = arith.constant 0 : i32
    return %c0_i32, %c0_i32_0 : i32, i32
  }
  func.func @transform_3(%arg0: i32) -> (i32, i32, i32, i32) {
    %c0_i32 = arith.constant 0 : i32
    %c0_i32_0 = arith.constant 0 : i32
    %c0_i32_1 = arith.constant 0 : i32
    %c0_i32_2 = arith.constant 0 : i32
    return %arg0, %c0_i32, %c0_i32_0, %c0_i32_1 : i32, i32, i32, i32
  }
}

</mosaic_0001>

<llo_original>
// kernel: resnet_client_forward.3
$region0: #{resnet_client_forward.3}
  #allocation0 [shape = 'u32[]', space=smem, size = 0x4, offset = 0x4, fixed_abs, tag = 'smem constant byte address 0x4 - core index']
  #allocation1 [shape = 'u32[144,128]{1,0:T(1,128)}', space=vmem, size = 0x12000, scoped, tag = 'internal scratch']
  %s0 = inlined_call_operand.vmem [shape: bf16[2,32,16,128], index: 0, kind: input, shape index: {}]
  %s1 = inlined_call_operand.vmem [shape: f32[1,128], index: 1, kind: input, shape index: {}]
  %s2 = inlined_call_operand.vmem [shape: f32[1,128], index: 2, kind: input, shape index: {}]
  %s3 = inlined_call_operand.hbm [shape: f32[2,16,16,64], index: 3, kind: output, shape index: {}]
  %s4 = sld [smem:[#allocation0]]
  $region22: #{resnet_client_forward.3} parent=0
    _
  %s6 = ssub.s32 1, %s4
  %s7 = scalar_select 0, %s6, %s4
  $region1: #{resnet_client_forward.3} parent=0
    #allocation2 [shape = 'u8[262144]{0}', space=vmem, size = 0x40000, scoped, tag = 'output window, operand 0, single buffered']
    #allocation3 [shape = 's32[1]{0}', space=sflag, size = 0x4, scoped, tag = 'scoped memory for resnet_client_forward.3']
    %8 = vsyncpa [#allocation3], 0
    // Predicated region
    $region2: #{resnet_client_forward.3} parent=1 // pred_check
      _
    $region3: #{resnet_client_forward.3} parent=1 // pred_check_branch
      %10 = sbr.rel (0) target = $region5
    $region4: #{resnet_client_forward.3} parent=1 // pred_region
      _
    $region5: #{resnet_client_forward.3} parent=1 // pred_fallthru
      _
    // Predicated region
    $region6: #{resnet_client_forward.3} parent=1 // pred_check
      _
    $region7: #{resnet_client_forward.3} parent=1 // pred_check_branch
      %12 = sbr.rel (0) target = $region9
    $region8: #{resnet_client_forward.3} parent=1 // pred_region
      _
    $region9: #{resnet_client_forward.3} parent=1 // pred_fallthru
      _
    // Predicated region
    $region10: #{resnet_client_forward.3} parent=1 // pred_check
      _
    $region11: #{resnet_client_forward.3} parent=1 // pred_check_branch
      %14 = sbr.rel (0) target = $region13
    $region12: #{resnet_client_forward.3} parent=1 // pred_region
      _
    $region13: #{resnet_client_forward.3} parent=1 // pred_fallthru
      _
    %v15 = vld [vmem:[%s0] sm:$0xf]
    %v16 = vld [vmem:[%s0 + $0x4] sm:$0xf]
    %v17 = vld [vmem:[%s0 + $0x8] sm:$0xf]
    %v18 = vld [vmem:[%s0 + $0xc] sm:$0xf]
    %v19 = vld [vmem:[%s0 + $0x10] sm:$0xf]
    %v20 = vld [vmem:[%s0 + $0x14] sm:$0xf]
    %v21 = vld [vmem:[%s0 + $0x18] sm:$0xf]
    %v22 = vld [vmem:[%s0 + $0x1c] sm:$0xf]
    %v23 = vld [vmem:[%s0 + $0x20] sm:$0xf]
    %v24 = vld [vmem:[%s0 + $0x24] sm:$0xf]
    %v25 = vld [vmem:[%s0 + $0x28] sm:$0xf]
    %v26 = vld [vmem:[%s0 + $0x2c] sm:$0xf]
    %v27 = vld [vmem:[%s0 + $0x30] sm:$0xf]
    %v28 = vld [vmem:[%s0 + $0x34] sm:$0xf]
    %v29 = vld [vmem:[%s0 + $0x38] sm:$0xf]
    %v30 = vld [vmem:[%s0 + $0x3c] sm:$0xf]
    %v31 = vld [vmem:[%s0 + $0x40] sm:$0xf]
    %v32 = vld [vmem:[%s0 + $0x44] sm:$0xf]
    %v33 = vld [vmem:[%s0 + $0x48] sm:$0xf]
    %v34 = vld [vmem:[%s0 + $0x4c] sm:$0xf]
    %v35 = vld [vmem:[%s0 + $0x50] sm:$0xf]
    %v36 = vld [vmem:[%s0 + $0x54] sm:$0xf]
    %v37 = vld [vmem:[%s0 + $0x58] sm:$0xf]
    %v38 = vld [vmem:[%s0 + $0x5c] sm:$0xf]
    %v39 = vld [vmem:[%s0 + $0x60] sm:$0xf]
    %v40 = vld [vmem:[%s0 + $0x64] sm:$0xf]
    %v41 = vld [vmem:[%s0 + $0x68] sm:$0xf]
    %v42 = vld [vmem:[%s0 + $0x6c] sm:$0xf]
    %v43 = vld [vmem:[%s0 + $0x70] sm:$0xf]
    %v44 = vld [vmem:[%s0 + $0x74] sm:$0xf]
    %v45 = vld [vmem:[%s0 + $0x78] sm:$0xf]
    %v46 = vld [vmem:[%s0 + $0x7c] sm:$0xf]
    %v47 = vld [vmem:[%s0 + $0x80] sm:$0xf]
    %v48 = vld [vmem:[%s0 + $0x84] sm:$0xf]
    %v49 = vld [vmem:[%s0 + $0x88] sm:$0xf]
    %v50 = vld [vmem:[%s0 + $0x8c] sm:$0xf]
    %v51 = vld [vmem:[%s0 + $0x90] sm:$0xf]
    %v52 = vld [vmem:[%s0 + $0x94] sm:$0xf]
    %v53 = vld [vmem:[%s0 + $0x98] sm:$0xf]
    %v54 = vld [vmem:[%s0 + $0x9c] sm:$0xf]
    %v55 = vld [vmem:[%s0 + $0xa0] sm:$0xf]
    %v56 = vld [vmem:[%s0 + $0xa4] sm:$0xf]
    %v57 = vld [vmem:[%s0 + $0xa8] sm:$0xf]
    %v58 = vld [vmem:[%s0 + $0xac] sm:$0xf]
    %v59 = vld [vmem:[%s0 + $0xb0] sm:$0xf]
    %v60 = vld [vmem:[%s0 + $0xb4] sm:$0xf]
    %v61 = vld [vmem:[%s0 + $0xb8] sm:$0xf]
    %v62 = vld [vmem:[%s0 + $0xbc] sm:$0xf]
    %v63 = vld [vmem:[%s0 + $0xc0] sm:$0xf]
    %v64 = vld [vmem:[%s0 + $0xc4] sm:$0xf]
    %v65 = vld [vmem:[%s0 + $0xc8] sm:$0xf]
    %v66 = vld [vmem:[%s0 + $0xcc] sm:$0xf]
    %v67 = vld [vmem:[%s0 + $0xd0] sm:$0xf]
    %v68 = vld [vmem:[%s0 + $0xd4] sm:$0xf]
    %v69 = vld [vmem:[%s0 + $0xd8] sm:$0xf]
    %v70 = vld [vmem:[%s0 + $0xdc] sm:$0xf]
    %v71 = vld [vmem:[%s0 + $0xe0] sm:$0xf]
    %v72 = vld [vmem:[%s0 + $0xe4] sm:$0xf]
    %v73 = vld [vmem:[%s0 + $0xe8] sm:$0xf]
    %v74 = vld [vmem:[%s0 + $0xec] sm:$0xf]
    %v75 = vld [vmem:[%s0 + $0xf0] sm:$0xf]
    %v76 = vld [vmem:[%s0 + $0xf4] sm:$0xf]
    %v77 = vld [vmem:[%s0 + $0xf8] sm:$0xf]
    %v78 = vld [vmem:[%s0 + $0xfc] sm:$0xf]
    %v79 = vld [vmem:[%s0 + $0x100] sm:$0xf]
    %v80 = vld [vmem:[%s0 + $0x104] sm:$0xf]
    %v81 = vld [vmem:[%s0 + $0x108] sm:$0xf]
    %v82 = vld [vmem:[%s0 + $0x10c] sm:$0xf]
    %v83 = vld [vmem:[%s0 + $0x110] sm:$0xf]
    %v84 = vld [vmem:[%s0 + $0x114] sm:$0xf]
    %v85 = vld [vmem:[%s0 + $0x118] sm:$0xf]
    %v86 = vld [vmem:[%s0 + $0x11c] sm:$0xf]
    %v87 = vld [vmem:[%s0 + $0x120] sm:$0xf]
    %v88 = vld [vmem:[%s0 + $0x124] sm:$0xf]
    %v89 = vld [vmem:[%s0 + $0x128] sm:$0xf]
    %v90 = vld [vmem:[%s0 + $0x12c] sm:$0xf]
    %v91 = vld [vmem:[%s0 + $0x130] sm:$0xf]
    %v92 = vld [vmem:[%s0 + $0x134] sm:$0xf]
    %v93 = vld [vmem:[%s0 + $0x138] sm:$0xf]
    %v94 = vld [vmem:[%s0 + $0x13c] sm:$0xf]
    %v95 = vld [vmem:[%s0 + $0x140] sm:$0xf]
    %v96 = vld [vmem:[%s0 + $0x144] sm:$0xf]
    %v97 = vld [vmem:[%s0 + $0x148] sm:$0xf]
    %v98 = vld [vmem:[%s0 + $0x14c] sm:$0xf]
    %v99 = vld [vmem:[%s0 + $0x150] sm:$0xf]
    %v100 = vld [vmem:[%s0 + $0x154] sm:$0xf]
    %v101 = vld [vmem:[%s0 + $0x158] sm:$0xf]
    %v102 = vld [vmem:[%s0 + $0x15c] sm:$0xf]
    %v103 = vld [vmem:[%s0 + $0x160] sm:$0xf]
    %v104 = vld [vmem:[%s0 + $0x164] sm:$0xf]
    %v105 = vld [vmem:[%s0 + $0x168] sm:$0xf]
    %v106 = vld [vmem:[%s0 + $0x16c] sm:$0xf]
    %v107 = vld [vmem:[%s0 + $0x170] sm:$0xf]
    %v108 = vld [vmem:[%s0 + $0x174] sm:$0xf]
    %v109 = vld [vmem:[%s0 + $0x178] sm:$0xf]
    %v110 = vld [vmem:[%s0 + $0x17c] sm:$0xf]
    %v111 = vld [vmem:[%s0 + $0x180] sm:$0xf]
    %v112 = vld [vmem:[%s0 + $0x184] sm:$0xf]
    %v113 = vld [vmem:[%s0 + $0x188] sm:$0xf]
    %v114 = vld [vmem:[%s0 + $0x18c] sm:$0xf]
    %v115 = vld [vmem:[%s0 + $0x190] sm:$0xf]
    %v116 = vld [vmem:[%s0 + $0x194] sm:$0xf]
    %v117 = vld [vmem:[%s0 + $0x198] sm:$0xf]
    %v118 = vld [vmem:[%s0 + $0x19c] sm:$0xf]
    %v119 = vld [vmem:[%s0 + $0x1a0] sm:$0xf]
    %v120 = vld [vmem:[%s0 + $0x1a4] sm:$0xf]
    %v121 = vld [vmem:[%s0 + $0x1a8] sm:$0xf]
    %v122 = vld [vmem:[%s0 + $0x1ac] sm:$0xf]
    %v123 = vld [vmem:[%s0 + $0x1b0] sm:$0xf]
    %v124 = vld [vmem:[%s0 + $0x1b4] sm:$0xf]
    %v125 = vld [vmem:[%s0 + $0x1b8] sm:$0xf]
    %v126 = vld [vmem:[%s0 + $0x1bc] sm:$0xf]
    %v127 = vld [vmem:[%s0 + $0x1c0] sm:$0xf]
    %v128 = vld [vmem:[%s0 + $0x1c4] sm:$0xf]
    %v129 = vld [vmem:[%s0 + $0x1c8] sm:$0xf]
    %v130 = vld [vmem:[%s0 + $0x1cc] sm:$0xf]
    %v131 = vld [vmem:[%s0 + $0x1d0] sm:$0xf]
    %v132 = vld [vmem:[%s0 + $0x1d4] sm:$0xf]
    %v133 = vld [vmem:[%s0 + $0x1d8] sm:$0xf]
    %v134 = vld [vmem:[%s0 + $0x1dc] sm:$0xf]
    %v135 = vld [vmem:[%s0 + $0x1e0] sm:$0xf]
    %v136 = vld [vmem:[%s0 + $0x1e4] sm:$0xf]
    %v137 = vld [vmem:[%s0 + $0x1e8] sm:$0xf]
    %v138 = vld [vmem:[%s0 + $0x1ec] sm:$0xf]
    %v139 = vld [vmem:[%s0 + $0x1f0] sm:$0xf]
    %v140 = vld [vmem:[%s0 + $0x1f4] sm:$0xf]
    %v141 = vld [vmem:[%s0 + $0x1f8] sm:$0xf]
    %v142 = vld [vmem:[%s0 + $0x1fc] sm:$0xf]
    %v143 = vunpack.c.l.bf16 %v15
    %v144 = vunpack.c.l.bf16 %v16
    %v145 = vunpack.c.l.bf16 %v17
    %v146 = vunpack.c.l.bf16 %v18
    %v147 = vunpack.c.l.bf16 %v19
    %v148 = vunpack.c.l.bf16 %v20
    %v149 = vunpack.c.l.bf16 %v21
    %v150 = vunpack.c.l.bf16 %v22
    %v151 = vunpack.c.l.bf16 %v23
    %v152 = vunpack.c.l.bf16 %v24
    %v153 = vunpack.c.l.bf16 %v25
    %v154 = vunpack.c.l.bf16 %v26
    %v155 = vunpack.c.l.bf16 %v27
    %v156 = vunpack.c.l.bf16 %v28
    %v157 = vunpack.c.l.bf16 %v29
    %v158 = vunpack.c.l.bf16 %v30
    %v159 = vunpack.c.l.bf16 %v31
    %v160 = vunpack.c.l.bf16 %v32
    %v161 = vunpack.c.l.bf16 %v33
    %v162 = vunpack.c.l.bf16 %v34
    %v163 = vunpack.c.l.bf16 %v35
    %v164 = vunpack.c.l.bf16 %v36
    %v165 = vunpack.c.l.bf16 %v37
    %v166 = vunpack.c.l.bf16 %v38
    %v167 = vunpack.c.l.bf16 %v39
    %v168 = vunpack.c.l.bf16 %v40
    %v169 = vunpack.c.l.bf16 %v41
    %v170 = vunpack.c.l.bf16 %v42
    %v171 = vunpack.c.l.bf16 %v43
    %v172 = vunpack.c.l.bf16 %v44
    %v173 = vunpack.c.l.bf16 %v45
    %v174 = vunpack.c.l.bf16 %v46
    %v175 = vunpack.c.l.bf16 %v47
    %v176 = vunpack.c.l.bf16 %v48
    %v177 = vunpack.c.l.bf16 %v49
    %v178 = vunpack.c.l.bf16 %v50
    %v179 = vunpack.c.l.bf16 %v51
    %v180 = vunpack.c.l.bf16 %v52
    %v181 = vunpack.c.l.bf16 %v53
    %v182 = vunpack.c.l.bf16 %v54
    %v183 = vunpack.c.l.bf16 %v55
    %v184 = vunpack.c.l.bf16 %v56
    %v185 = vunpack.c.l.bf16 %v57
    %v186 = vunpack.c.l.bf16 %v58
    %v187 = vunpack.c.l.bf16 %v59
    %v188 = vunpack.c.l.bf16 %v60
    %v189 = vunpack.c.l.bf16 %v61
    %v190 = vunpack.c.l.bf16 %v62
    %v191 = vunpack.c.l.bf16 %v63
    %v192 = vunpack.c.l.bf16 %v64
    %v193 = vunpack.c.l.bf16 %v65
    %v194 = vunpack.c.l.bf16 %v66
    %v195 = vunpack.c.l.bf16 %v67
    %v196 = vunpack.c.l.bf16 %v68
    %v197 = vunpack.c.l.bf16 %v69
    %v198 = vunpack.c.l.bf16 %v70
    %v199 = vunpack.c.l.bf16 %v71
    %v200 = vunpack.c.l.bf16 %v72
    %v201 = vunpack.c.l.bf16 %v73
    %v202 = vunpack.c.l.bf16 %v74
    %v203 = vunpack.c.l.bf16 %v75
    %v204 = vunpack.c.l.bf16 %v76
    %v205 = vunpack.c.l.bf16 %v77
    %v206 = vunpack.c.l.bf16 %v78
    %v207 = vunpack.c.l.bf16 %v79
    %v208 = vunpack.c.l.bf16 %v80
    %v209 = vunpack.c.l.bf16 %v81
    %v210 = vunpack.c.l.bf16 %v82
    %v211 = vunpack.c.l.bf16 %v83
    %v212 = vunpack.c.l.bf16 %v84
    %v213 = vunpack.c.l.bf16 %v85
    %v214 = vunpack.c.l.bf16 %v86
    %v215 = vunpack.c.l.bf16 %v87
    %v216 = vunpack.c.l.bf16 %v88
    %v217 = vunpack.c.l.bf16 %v89
    %v218 = vunpack.c.l.bf16 %v90
    %v219 = vunpack.c.l.bf16 %v91
    %v220 = vunpack.c.l.bf16 %v92
    %v221 = vunpack.c.l.bf16 %v93
    %v222 = vunpack.c.l.bf16 %v94
    %v223 = vunpack.c.l.bf16 %v95
    %v224 = vunpack.c.l.bf16 %v96
    %v225 = vunpack.c.l.bf16 %v97
    %v226 = vunpack.c.l.bf16 %v98
    %v227 = vunpack.c.l.bf16 %v99
    %v228 = vunpack.c.l.bf16 %v100
    %v229 = vunpack.c.l.bf16 %v101
    %v230 = vunpack.c.l.bf16 %v102
    %v231 = vunpack.c.l.bf16 %v103
    %v232 = vunpack.c.l.bf16 %v104
    %v233 = vunpack.c.l.bf16 %v105
    %v234 = vunpack.c.l.bf16 %v106
    %v235 = vunpack.c.l.bf16 %v107
    %v236 = vunpack.c.l.bf16 %v108
    %v237 = vunpack.c.l.bf16 %v109
    %v238 = vunpack.c.l.bf16 %v110
    %v239 = vunpack.c.l.bf16 %v111
    %v240 = vunpack.c.l.bf16 %v112
    %v241 = vunpack.c.l.bf16 %v113
    %v242 = vunpack.c.l.bf16 %v114
    %v243 = vunpack.c.l.bf16 %v115
    %v244 = vunpack.c.l.bf16 %v116
    %v245 = vunpack.c.l.bf16 %v117
    %v246 = vunpack.c.l.bf16 %v118
    %v247 = vunpack.c.l.bf16 %v119
    %v248 = vunpack.c.l.bf16 %v120
    %v249 = vunpack.c.l.bf16 %v121
    %v250 = vunpack.c.l.bf16 %v122
    %v251 = vunpack.c.l.bf16 %v123
    %v252 = vunpack.c.l.bf16 %v124
    %v253 = vunpack.c.l.bf16 %v125
    %v254 = vunpack.c.l.bf16 %v126
    %v255 = vunpack.c.l.bf16 %v127
    %v256 = vunpack.c.l.bf16 %v128
    %v257 = vunpack.c.l.bf16 %v129
    %v258 = vunpack.c.l.bf16 %v130
    %v259 = vunpack.c.l.bf16 %v131
    %v260 = vunpack.c.l.bf16 %v132
    %v261 = vunpack.c.l.bf16 %v133
    %v262 = vunpack.c.l.bf16 %v134
    %v263 = vunpack.c.l.bf16 %v135
    %v264 = vunpack.c.l.bf16 %v136
    %v265 = vunpack.c.l.bf16 %v137
    %v266 = vunpack.c.l.bf16 %v138
    %v267 = vunpack.c.l.bf16 %v139
    %v268 = vunpack.c.l.bf16 %v140
    %v269 = vunpack.c.l.bf16 %v141
    %v270 = vunpack.c.l.bf16 %v142
    %v271 = vld [vmem:[%s1] sm:$0x1]
    %v272 = vld [vmem:[%s2] sm:$0x1]
    %v274 = vlaneseq
    %v275 = vshrl.u32 %v274, 7
    %v276 = vsub.s32 0, %v275
    %v277 = vrot.slane %v271, %v276
    %v279 = vmul.f32 %v143, %v277
    %v280 = vmul.f32 %v144, %v277
    %v281 = vmul.f32 %v145, %v277
    %v282 = vmul.f32 %v146, %v277
    %v283 = vmul.f32 %v147, %v277
    %v284 = vmul.f32 %v148, %v277
    %v285 = vmul.f32 %v149, %v277
    %v286 = vmul.f32 %v150, %v277
    %v287 = vmul.f32 %v151, %v277
    %v288 = vmul.f32 %v152, %v277
    %v289 = vmul.f32 %v153, %v277
    %v290 = vmul.f32 %v154, %v277
    %v291 = vmul.f32 %v155, %v277
    %v292 = vmul.f32 %v156, %v277
    %v293 = vmul.f32 %v157, %v277
    %v294 = vmul.f32 %v158, %v277
    %v295 = vmul.f32 %v159, %v277
    %v296 = vmul.f32 %v160, %v277
    %v297 = vmul.f32 %v161, %v277
    %v298 = vmul.f32 %v162, %v277
    %v299 = vmul.f32 %v163, %v277
    %v300 = vmul.f32 %v164, %v277
    %v301 = vmul.f32 %v165, %v277
    %v302 = vmul.f32 %v166, %v277
    %v303 = vmul.f32 %v167, %v277
    %v304 = vmul.f32 %v168, %v277
    %v305 = vmul.f32 %v169, %v277
    %v306 = vmul.f32 %v170, %v277
    %v307 = vmul.f32 %v171, %v277
    %v308 = vmul.f32 %v172, %v277
    %v309 = vmul.f32 %v173, %v277
    %v310 = vmul.f32 %v174, %v277
    %v311 = vmul.f32 %v175, %v277
    %v312 = vmul.f32 %v176, %v277
    %v313 = vmul.f32 %v177, %v277
    %v314 = vmul.f32 %v178, %v277
    %v315 = vmul.f32 %v179, %v277
    %v316 = vmul.f32 %v180, %v277
    %v317 = vmul.f32 %v181, %v277
    %v318 = vmul.f32 %v182, %v277
    %v319 = vmul.f32 %v183, %v277
    %v320 = vmul.f32 %v184, %v277
    %v321 = vmul.f32 %v185, %v277
    %v322 = vmul.f32 %v186, %v277
    %v323 = vmul.f32 %v187, %v277
    %v324 = vmul.f32 %v188, %v277
    %v325 = vmul.f32 %v189, %v277
    %v326 = vmul.f32 %v190, %v277
    %v327 = vmul.f32 %v191, %v277
    %v328 = vmul.f32 %v192, %v277
    %v329 = vmul.f32 %v193, %v277
    %v330 = vmul.f32 %v194, %v277
    %v331 = vmul.f32 %v195, %v277
    %v332 = vmul.f32 %v196, %v277
    %v333 = vmul.f32 %v197, %v277
    %v334 = vmul.f32 %v198, %v277
    %v335 = vmul.f32 %v199, %v277
    %v336 = vmul.f32 %v200, %v277
    %v337 = vmul.f32 %v201, %v277
    %v338 = vmul.f32 %v202, %v277
    %v339 = vmul.f32 %v203, %v277
    %v340 = vmul.f32 %v204, %v277
    %v341 = vmul.f32 %v205, %v277
    %v342 = vmul.f32 %v206, %v277
    %v343 = vmul.f32 %v207, %v277
    %v344 = vmul.f32 %v208, %v277
    %v345 = vmul.f32 %v209, %v277
    %v346 = vmul.f32 %v210, %v277
    %v347 = vmul.f32 %v211, %v277
    %v348 = vmul.f32 %v212, %v277
    %v349 = vmul.f32 %v213, %v277
    %v350 = vmul.f32 %v214, %v277
    %v351 = vmul.f32 %v215, %v277
    %v352 = vmul.f32 %v216, %v277
    %v353 = vmul.f32 %v217, %v277
    %v354 = vmul.f32 %v218, %v277
    %v355 = vmul.f32 %v219, %v277
    %v356 = vmul.f32 %v220, %v277
    %v357 = vmul.f32 %v221, %v277
    %v358 = vmul.f32 %v222, %v277
    %v359 = vmul.f32 %v223, %v277
    %v360 = vmul.f32 %v224, %v277
    %v361 = vmul.f32 %v225, %v277
    %v362 = vmul.f32 %v226, %v277
    %v363 = vmul.f32 %v227, %v277
    %v364 = vmul.f32 %v228, %v277
    %v365 = vmul.f32 %v229, %v277
    %v366 = vmul.f32 %v230, %v277
    %v367 = vmul.f32 %v231, %v277
    %v368 = vmul.f32 %v232, %v277
    %v369 = vmul.f32 %v233, %v277
    %v370 = vmul.f32 %v234, %v277
    %v371 = vmul.f32 %v235, %v277
    %v372 = vmul.f32 %v236, %v277
    %v373 = vmul.f32 %v237, %v277
    %v374 = vmul.f32 %v238, %v277
    %v375 = vmul.f32 %v239, %v277
    %v376 = vmul.f32 %v240, %v277
    %v377 = vmul.f32 %v241, %v277
    %v378 = vmul.f32 %v242, %v277
    %v379 = vmul.f32 %v243, %v277
    %v380 = vmul.f32 %v244, %v277
    %v381 = vmul.f32 %v245, %v277
    %v382 = vmul.f32 %v246, %v277
    %v383 = vmul.f32 %v247, %v277
    %v384 = vmul.f32 %v248, %v277
    %v385 = vmul.f32 %v249, %v277
    %v386 = vmul.f32 %v250, %v277
    %v387 = vmul.f32 %v251, %v277
    %v388 = vmul.f32 %v252, %v277
    %v389 = vmul.f32 %v253, %v277
    %v390 = vmul.f32 %v254, %v277
    %v391 = vmul.f32 %v255, %v277
    %v392 = vmul.f32 %v256, %v277
    %v393 = vmul.f32 %v257, %v277
    %v394 = vmul.f32 %v258, %v277
    %v395 = vmul.f32 %v259, %v277
    %v396 = vmul.f32 %v260, %v277
    %v397 = vmul.f32 %v261, %v277
    %v398 = vmul.f32 %v262, %v277
    %v399 = vmul.f32 %v263, %v277
    %v400 = vmul.f32 %v264, %v277
    %v401 = vmul.f32 %v265, %v277
    %v402 = vmul.f32 %v266, %v277
    %v403 = vmul.f32 %v267, %v277
    %v404 = vmul.f32 %v268, %v277
    %v405 = vmul.f32 %v269, %v277
    %v406 = vmul.f32 %v270, %v277
    %v408 = vlaneseq
    %v409 = vshrl.u32 %v408, 7
    %v410 = vsub.s32 0, %v409
    %v411 = vrot.slane %v272, %v410
    %v413 = vadd.f32 %v279, %v411
    %v414 = vadd.f32 %v280, %v411
    %v415 = vadd.f32 %v281, %v411
    %v416 = vadd.f32 %v282, %v411
    %v417 = vadd.f32 %v283, %v411
    %v418 = vadd.f32 %v284, %v411
    %v419 = vadd.f32 %v285, %v411
    %v420 = vadd.f32 %v286, %v411
    %v421 = vadd.f32 %v287, %v411
    %v422 = vadd.f32 %v288, %v411
    %v423 = vadd.f32 %v289, %v411
    %v424 = vadd.f32 %v290, %v411
    %v425 = vadd.f32 %v291, %v411
    %v426 = vadd.f32 %v292, %v411
    %v427 = vadd.f32 %v293, %v411
    %v428 = vadd.f32 %v294, %v411
    %v429 = vadd.f32 %v295, %v411
    %v430 = vadd.f32 %v296, %v411
    %v431 = vadd.f32 %v297, %v411
    %v432 = vadd.f32 %v298, %v411
    %v433 = vadd.f32 %v299, %v411
    %v434 = vadd.f32 %v300, %v411
    %v435 = vadd.f32 %v301, %v411
    %v436 = vadd.f32 %v302, %v411
    %v437 = vadd.f32 %v303, %v411
    %v438 = vadd.f32 %v304, %v411
    %v439 = vadd.f32 %v305, %v411
    %v440 = vadd.f32 %v306, %v411
    %v441 = vadd.f32 %v307, %v411
    %v442 = vadd.f32 %v308, %v411
    %v443 = vadd.f32 %v309, %v411
    %v444 = vadd.f32 %v310, %v411
    %v445 = vadd.f32 %v311, %v411
    %v446 = vadd.f32 %v312, %v411
    %v447 = vadd.f32 %v313, %v411
    %v448 = vadd.f32 %v314, %v411
    %v449 = vadd.f32 %v315, %v411
    %v450 = vadd.f32 %v316, %v411
    %v451 = vadd.f32 %v317, %v411
    %v452 = vadd.f32 %v318, %v411
    %v453 = vadd.f32 %v319, %v411
    %v454 = vadd.f32 %v320, %v411
    %v455 = vadd.f32 %v321, %v411
    %v456 = vadd.f32 %v322, %v411
    %v457 = vadd.f32 %v323, %v411
    %v458 = vadd.f32 %v324, %v411
    %v459 = vadd.f32 %v325, %v411
    %v460 = vadd.f32 %v326, %v411
    %v461 = vadd.f32 %v327, %v411
    %v462 = vadd.f32 %v328, %v411
    %v463 = vadd.f32 %v329, %v411
    %v464 = vadd.f32 %v330, %v411
    %v465 = vadd.f32 %v331, %v411
    %v466 = vadd.f32 %v332, %v411
    %v467 = vadd.f32 %v333, %v411
    %v468 = vadd.f32 %v334, %v411
    %v469 = vadd.f32 %v335, %v411
    %v470 = vadd.f32 %v336, %v411
    %v471 = vadd.f32 %v337, %v411
    %v472 = vadd.f32 %v338, %v411
    %v473 = vadd.f32 %v339, %v411
    %v474 = vadd.f32 %v340, %v411
    %v475 = vadd.f32 %v341, %v411
    %v476 = vadd.f32 %v342, %v411
    %v477 = vadd.f32 %v343, %v411
    %v478 = vadd.f32 %v344, %v411
    %v479 = vadd.f32 %v345, %v411
    %v480 = vadd.f32 %v346, %v411
    %v481 = vadd.f32 %v347, %v411
    %v482 = vadd.f32 %v348, %v411
    %v483 = vadd.f32 %v349, %v411
    %v484 = vadd.f32 %v350, %v411
    %v485 = vadd.f32 %v351, %v411
    %v486 = vadd.f32 %v352, %v411
    %v487 = vadd.f32 %v353, %v411
    %v488 = vadd.f32 %v354, %v411
    %v489 = vadd.f32 %v355, %v411
    %v490 = vadd.f32 %v356, %v411
    %v491 = vadd.f32 %v357, %v411
    %v492 = vadd.f32 %v358, %v411
    %v493 = vadd.f32 %v359, %v411
    %v494 = vadd.f32 %v360, %v411
    %v495 = vadd.f32 %v361, %v411
    %v496 = vadd.f32 %v362, %v411
    %v497 = vadd.f32 %v363, %v411
    %v498 = vadd.f32 %v364, %v411
    %v499 = vadd.f32 %v365, %v411
    %v500 = vadd.f32 %v366, %v411
    %v501 = vadd.f32 %v367, %v411
    %v502 = vadd.f32 %v368, %v411
    %v503 = vadd.f32 %v369, %v411
    %v504 = vadd.f32 %v370, %v411
    %v505 = vadd.f32 %v371, %v411
    %v506 = vadd.f32 %v372, %v411
    %v507 = vadd.f32 %v373, %v411
    %v508 = vadd.f32 %v374, %v411
    %v509 = vadd.f32 %v375, %v411
    %v510 = vadd.f32 %v376, %v411
    %v511 = vadd.f32 %v377, %v411
    %v512 = vadd.f32 %v378, %v411
    %v513 = vadd.f32 %v379, %v411
    %v514 = vadd.f32 %v380, %v411
    %v515 = vadd.f32 %v381, %v411
    %v516 = vadd.f32 %v382, %v411
    %v517 = vadd.f32 %v383, %v411
    %v518 = vadd.f32 %v384, %v411
    %v519 = vadd.f32 %v385, %v411
    %v520 = vadd.f32 %v386, %v411
    %v521 = vadd.f32 %v387, %v411
    %v522 = vadd.f32 %v388, %v411
    %v523 = vadd.f32 %v389, %v411
    %v524 = vadd.f32 %v390, %v411
    %v525 = vadd.f32 %v391, %v411
    %v526 = vadd.f32 %v392, %v411
    %v527 = vadd.f32 %v393, %v411
    %v528 = vadd.f32 %v394, %v411
    %v529 = vadd.f32 %v395, %v411
    %v530 = vadd.f32 %v396, %v411
    %v531 = vadd.f32 %v397, %v411
    %v532 = vadd.f32 %v398, %v411
    %v533 = vadd.f32 %v399, %v411
    %v534 = vadd.f32 %v400, %v411
    %v535 = vadd.f32 %v401, %v411
    %v536 = vadd.f32 %v402, %v411
    %v537 = vadd.f32 %v403, %v411
    %v538 = vadd.f32 %v404, %v411
    %v539 = vadd.f32 %v405, %v411
    %v540 = vadd.f32 %v406, %v411
    %v541 = vmax.f32 %v413, 0.0
    %v542 = vmax.f32 %v414, 0.0
    %v543 = vmax.f32 %v415, 0.0
    %v544 = vmax.f32 %v416, 0.0
    %v545 = vmax.f32 %v417, 0.0
    %v546 = vmax.f32 %v418, 0.0
    %v547 = vmax.f32 %v419, 0.0
    %v548 = vmax.f32 %v420, 0.0
    %v549 = vmax.f32 %v421, 0.0
    %v550 = vmax.f32 %v422, 0.0
    %v551 = vmax.f32 %v423, 0.0
    %v552 = vmax.f32 %v424, 0.0
    %v553 = vmax.f32 %v425, 0.0
    %v554 = vmax.f32 %v426, 0.0
    %v555 = vmax.f32 %v427, 0.0
    %v556 = vmax.f32 %v428, 0.0
    %v557 = vmax.f32 %v429, 0.0
    %v558 = vmax.f32 %v430, 0.0
    %v559 = vmax.f32 %v431, 0.0
    %v560 = vmax.f32 %v432, 0.0
    %v561 = vmax.f32 %v433, 0.0
    %v562 = vmax.f32 %v434, 0.0
    %v563 = vmax.f32 %v435, 0.0
    %v564 = vmax.f32 %v436, 0.0
    %v565 = vmax.f32 %v437, 0.0
    %v566 = vmax.f32 %v438, 0.0
    %v567 = vmax.f32 %v439, 0.0
    %v568 = vmax.f32 %v440, 0.0
    %v569 = vmax.f32 %v441, 0.0
    %v570 = vmax.f32 %v442, 0.0
    %v571 = vmax.f32 %v443, 0.0
    %v572 = vmax.f32 %v444, 0.0
    %v573 = vmax.f32 %v445, 0.0
    %v574 = vmax.f32 %v446, 0.0
    %v575 = vmax.f32 %v447, 0.0
    %v576 = vmax.f32 %v448, 0.0
    %v577 = vmax.f32 %v449, 0.0
    %v578 = vmax.f32 %v450, 0.0
    %v579 = vmax.f32 %v451, 0.0
    %v580 = vmax.f32 %v452, 0.0
    %v581 = vmax.f32 %v453, 0.0
    %v582 = vmax.f32 %v454, 0.0
    %v583 = vmax.f32 %v455, 0.0
    %v584 = vmax.f32 %v456, 0.0
    %v585 = vmax.f32 %v457, 0.0
    %v586 = vmax.f32 %v458, 0.0
    %v587 = vmax.f32 %v459, 0.0
    %v588 = vmax.f32 %v460, 0.0
    %v589 = vmax.f32 %v461, 0.0
    %v590 = vmax.f32 %v462, 0.0
    %v591 = vmax.f32 %v463, 0.0
    %v592 = vmax.f32 %v464, 0.0
    %v593 = vmax.f32 %v465, 0.0
    %v594 = vmax.f32 %v466, 0.0
    %v595 = vmax.f32 %v467, 0.0
    %v596 = vmax.f32 %v468, 0.0
    %v597 = vmax.f32 %v469, 0.0
    %v598 = vmax.f32 %v470, 0.0
    %v599 = vmax.f32 %v471, 0.0
    %v600 = vmax.f32 %v472, 0.0
    %v601 = vmax.f32 %v473, 0.0
    %v602 = vmax.f32 %v474, 0.0
    %v603 = vmax.f32 %v475, 0.0
    %v604 = vmax.f32 %v476, 0.0
    %v605 = vmax.f32 %v477, 0.0
    %v606 = vmax.f32 %v478, 0.0
    %v607 = vmax.f32 %v479, 0.0
    %v608 = vmax.f32 %v480, 0.0
    %v609 = vmax.f32 %v481, 0.0
    %v610 = vmax.f32 %v482, 0.0
    %v611 = vmax.f32 %v483, 0.0
    %v612 = vmax.f32 %v484, 0.0
    %v613 = vmax.f32 %v485, 0.0
    %v614 = vmax.f32 %v486, 0.0
    %v615 = vmax.f32 %v487, 0.0
    %v616 = vmax.f32 %v488, 0.0
    %v617 = vmax.f32 %v489, 0.0
    %v618 = vmax.f32 %v490, 0.0
    %v619 = vmax.f32 %v491, 0.0
    %v620 = vmax.f32 %v492, 0.0
    %v621 = vmax.f32 %v493, 0.0
    %v622 = vmax.f32 %v494, 0.0
    %v623 = vmax.f32 %v495, 0.0
    %v624 = vmax.f32 %v496, 0.0
    %v625 = vmax.f32 %v497, 0.0
    %v626 = vmax.f32 %v498, 0.0
    %v627 = vmax.f32 %v499, 0.0
    %v628 = vmax.f32 %v500, 0.0
    %v629 = vmax.f32 %v501, 0.0
    %v630 = vmax.f32 %v502, 0.0
    %v631 = vmax.f32 %v503, 0.0
    %v632 = vmax.f32 %v504, 0.0
    %v633 = vmax.f32 %v505, 0.0
    %v634 = vmax.f32 %v506, 0.0
    %v635 = vmax.f32 %v507, 0.0
    %v636 = vmax.f32 %v508, 0.0
    %v637 = vmax.f32 %v509, 0.0
    %v638 = vmax.f32 %v510, 0.0
    %v639 = vmax.f32 %v511, 0.0
    %v640 = vmax.f32 %v512, 0.0
    %v641 = vmax.f32 %v513, 0.0
    %v642 = vmax.f32 %v514, 0.0
    %v643 = vmax.f32 %v515, 0.0
    %v644 = vmax.f32 %v516, 0.0
    %v645 = vmax.f32 %v517, 0.0
    %v646 = vmax.f32 %v518, 0.0
    %v647 = vmax.f32 %v519, 0.0
    %v648 = vmax.f32 %v520, 0.0
    %v649 = vmax.f32 %v521, 0.0
    %v650 = vmax.f32 %v522, 0.0
    %v651 = vmax.f32 %v523, 0.0
    %v652 = vmax.f32 %v524, 0.0
    %v653 = vmax.f32 %v525, 0.0
    %v654 = vmax.f32 %v526, 0.0
    %v655 = vmax.f32 %v527, 0.0
    %v656 = vmax.f32 %v528, 0.0
    %v657 = vmax.f32 %v529, 0.0
    %v658 = vmax.f32 %v530, 0.0
    %v659 = vmax.f32 %v531, 0.0
    %v660 = vmax.f32 %v532, 0.0
    %v661 = vmax.f32 %v533, 0.0
    %v662 = vmax.f32 %v534, 0.0
    %v663 = vmax.f32 %v535, 0.0
    %v664 = vmax.f32 %v536, 0.0
    %v665 = vmax.f32 %v537, 0.0
    %v666 = vmax.f32 %v538, 0.0
    %v667 = vmax.f32 %v539, 0.0
    %v668 = vmax.f32 %v540, 0.0
    %vm797 = vcmask 1040384
    %v798 = vrot.slane %v541, 7
    %v799 = vrot.slane %v542, 7
    %v800 = vsel %vm797, %v798, %v799
    %v801 = vrot.slane %v543, 7
    %v802 = vrot.slane %v544, 7
    %v803 = vsel %vm797, %v801, %v802
    %v804 = vrot.slane %v545, 7
    %v805 = vrot.slane %v546, 7
    %v806 = vsel %vm797, %v804, %v805
    %v807 = vrot.slane %v547, 7
    %v808 = vrot.slane %v548, 7
    %v809 = vsel %vm797, %v807, %v808
    %v810 = vrot.slane %v549, 7
    %v811 = vrot.slane %v550, 7
    %v812 = vsel %vm797, %v810, %v811
    %v813 = vrot.slane %v551, 7
    %v814 = vrot.slane %v552, 7
    %v815 = vsel %vm797, %v813, %v814
    %v816 = vrot.slane %v553, 7
    %v817 = vrot.slane %v554, 7
    %v818 = vsel %vm797, %v816, %v817
    %v819 = vrot.slane %v555, 7
    %v820 = vrot.slane %v556, 7
    %v821 = vsel %vm797, %v819, %v820
    %v822 = vrot.slane %v557, 7
    %v823 = vrot.slane %v558, 7
    %v824 = vsel %vm797, %v822, %v823
    %v825 = vrot.slane %v559, 7
    %v826 = vrot.slane %v560, 7
    %v827 = vsel %vm797, %v825, %v826
    %v828 = vrot.slane %v561, 7
    %v829 = vrot.slane %v562, 7
    %v830 = vsel %vm797, %v828, %v829
    %v831 = vrot.slane %v563, 7
    %v832 = vrot.slane %v564, 7
    %v833 = vsel %vm797, %v831, %v832
    %v834 = vrot.slane %v565, 7
    %v835 = vrot.slane %v566, 7
    %v836 = vsel %vm797, %v834, %v835
    %v837 = vrot.slane %v567, 7
    %v838 = vrot.slane %v568, 7
    %v839 = vsel %vm797, %v837, %v838
    %v840 = vrot.slane %v569, 7
    %v841 = vrot.slane %v570, 7
    %v842 = vsel %vm797, %v840, %v841
    %v843 = vrot.slane %v571, 7
    %v844 = vrot.slane %v572, 7
    %v845 = vsel %vm797, %v843, %v844
    %v846 = vrot.slane %v573, 7
    %v847 = vrot.slane %v574, 7
    %v848 = vsel %vm797, %v846, %v847
    %v849 = vrot.slane %v575, 7
    %v850 = vrot.slane %v576, 7
    %v851 = vsel %vm797, %v849, %v850
    %v852 = vrot.slane %v577, 7
    %v853 = vrot.slane %v578, 7
    %v854 = vsel %vm797, %v852, %v853
    %v855 = vrot.slane %v579, 7
    %v856 = vrot.slane %v580, 7
    %v857 = vsel %vm797, %v855, %v856
    %v858 = vrot.slane %v581, 7
    %v859 = vrot.slane %v582, 7
    %v860 = vsel %vm797, %v858, %v859
    %v861 = vrot.slane %v583, 7
    %v862 = vrot.slane %v584, 7
    %v863 = vsel %vm797, %v861, %v862
    %v864 = vrot.slane %v585, 7
    %v865 = vrot.slane %v586, 7
    %v866 = vsel %vm797, %v864, %v865
    %v867 = vrot.slane %v587, 7
    %v868 = vrot.slane %v588, 7
    %v869 = vsel %vm797, %v867, %v868
    %v870 = vrot.slane %v589, 7
    %v871 = vrot.slane %v590, 7
    %v872 = vsel %vm797, %v870, %v871
    %v873 = vrot.slane %v591, 7
    %v874 = vrot.slane %v592, 7
    %v875 = vsel %vm797, %v873, %v874
    %v876 = vrot.slane %v593, 7
    %v877 = vrot.slane %v594, 7
    %v878 = vsel %vm797, %v876, %v877
    %v879 = vrot.slane %v595, 7
    %v880 = vrot.slane %v596, 7
    %v881 = vsel %vm797, %v879, %v880
    %v882 = vrot.slane %v597, 7
    %v883 = vrot.slane %v598, 7
    %v884 = vsel %vm797, %v882, %v883
    %v885 = vrot.slane %v599, 7
    %v886 = vrot.slane %v600, 7
    %v887 = vsel %vm797, %v885, %v886
    %v888 = vrot.slane %v601, 7
    %v889 = vrot.slane %v602, 7
    %v890 = vsel %vm797, %v888, %v889
    %v891 = vrot.slane %v603, 7
    %v892 = vrot.slane %v604, 7
    %v893 = vsel %vm797, %v891, %v892
    %v894 = vrot.slane %v605, 7
    %v895 = vrot.slane %v606, 7
    %v896 = vsel %vm797, %v894, %v895
    %v897 = vrot.slane %v607, 7
    %v898 = vrot.slane %v608, 7
    %v899 = vsel %vm797, %v897, %v898
    %v900 = vrot.slane %v609, 7
    %v901 = vrot.slane %v610, 7
    %v902 = vsel %vm797, %v900, %v901
    %v903 = vrot.slane %v611, 7
    %v904 = vrot.slane %v612, 7
    %v905 = vsel %vm797, %v903, %v904
    %v906 = vrot.slane %v613, 7
    %v907 = vrot.slane %v614, 7
    %v908 = vsel %vm797, %v906, %v907
    %v909 = vrot.slane %v615, 7
    %v910 = vrot.slane %v616, 7
    %v911 = vsel %vm797, %v909, %v910
    %v912 = vrot.slane %v617, 7
    %v913 = vrot.slane %v618, 7
    %v914 = vsel %vm797, %v912, %v913
    %v915 = vrot.slane %v619, 7
    %v916 = vrot.slane %v620, 7
    %v917 = vsel %vm797, %v915, %v916
    %v918 = vrot.slane %v621, 7
    %v919 = vrot.slane %v622, 7
    %v920 = vsel %vm797, %v918, %v919
    %v921 = vrot.slane %v623, 7
    %v922 = vrot.slane %v624, 7
    %v923 = vsel %vm797, %v921, %v922
    %v924 = vrot.slane %v625, 7
    %v925 = vrot.slane %v626, 7
    %v926 = vsel %vm797, %v924, %v925
    %v927 = vrot.slane %v627, 7
    %v928 = vrot.slane %v628, 7
    %v929 = vsel %vm797, %v927, %v928
    %v930 = vrot.slane %v629, 7
    %v931 = vrot.slane %v630, 7
    %v932 = vsel %vm797, %v930, %v931
    %v933 = vrot.slane %v631, 7
    %v934 = vrot.slane %v632, 7
    %v935 = vsel %vm797, %v933, %v934
    %v936 = vrot.slane %v633, 7
    %v937 = vrot.slane %v634, 7
    %v938 = vsel %vm797, %v936, %v937
    %v939 = vrot.slane %v635, 7
    %v940 = vrot.slane %v636, 7
    %v941 = vsel %vm797, %v939, %v940
    %v942 = vrot.slane %v637, 7
    %v943 = vrot.slane %v638, 7
    %v944 = vsel %vm797, %v942, %v943
    %v945 = vrot.slane %v639, 7
    %v946 = vrot.slane %v640, 7
    %v947 = vsel %vm797, %v945, %v946
    %v948 = vrot.slane %v641, 7
    %v949 = vrot.slane %v642, 7
    %v950 = vsel %vm797, %v948, %v949
    %v951 = vrot.slane %v643, 7
    %v952 = vrot.slane %v644, 7
    %v953 = vsel %vm797, %v951, %v952
    %v954 = vrot.slane %v645, 7
    %v955 = vrot.slane %v646, 7
    %v956 = vsel %vm797, %v954, %v955
    %v957 = vrot.slane %v647, 7
    %v958 = vrot.slane %v648, 7
    %v959 = vsel %vm797, %v957, %v958
    %v960 = vrot.slane %v649, 7
    %v961 = vrot.slane %v650, 7
    %v962 = vsel %vm797, %v960, %v961
    %v963 = vrot.slane %v651, 7
    %v964 = vrot.slane %v652, 7
    %v965 = vsel %vm797, %v963, %v964
    %v966 = vrot.slane %v653, 7
    %v967 = vrot.slane %v654, 7
    %v968 = vsel %vm797, %v966, %v967
    %v969 = vrot.slane %v655, 7
    %v970 = vrot.slane %v656, 7
    %v971 = vsel %vm797, %v969, %v970
    %v972 = vrot.slane %v657, 7
    %v973 = vrot.slane %v658, 7
    %v974 = vsel %vm797, %v972, %v973
    %v975 = vrot.slane %v659, 7
    %v976 = vrot.slane %v660, 7
    %v977 = vsel %vm797, %v975, %v976
    %v978 = vrot.slane %v661, 7
    %v979 = vrot.slane %v662, 7
    %v980 = vsel %vm797, %v978, %v979
    %v981 = vrot.slane %v663, 7
    %v982 = vrot.slane %v664, 7
    %v983 = vsel %vm797, %v981, %v982
    %v984 = vrot.slane %v665, 7
    %v985 = vrot.slane %v666, 7
    %v986 = vsel %vm797, %v984, %v985
    %v987 = vrot.slane %v667, 7
    %v988 = vrot.slane %v668, 7
    %v989 = vsel %vm797, %v987, %v988
    %990 = vrot.lane.b32.xlu0 %v798, 64
    %v991 = vpop.permute.xlu0 %990
    %992 = vrot.lane.b32.xlu0 %v800, 64
    %v993 = vpop.permute.xlu0 %992
    %994 = vrot.lane.b32.xlu0 %v801, 64
    %v995 = vpop.permute.xlu0 %994
    %996 = vrot.lane.b32.xlu0 %v803, 64
    %v997 = vpop.permute.xlu0 %996
    %998 = vrot.lane.b32.xlu0 %v804, 64
    %v999 = vpop.permute.xlu0 %998
    %1000 = vrot.lane.b32.xlu0 %v806, 64
    %v1001 = vpop.permute.xlu0 %1000
    %1002 = vrot.lane.b32.xlu0 %v807, 64
    %v1003 = vpop.permute.xlu0 %1002
    %1004 = vrot.lane.b32.xlu0 %v809, 64
    %v1005 = vpop.permute.xlu0 %1004
    %1006 = vrot.lane.b32.xlu0 %v810, 64
    %v1007 = vpop.permute.xlu0 %1006
    %1008 = vrot.lane.b32.xlu0 %v812, 64
    %v1009 = vpop.permute.xlu0 %1008
    %1010 = vrot.lane.b32.xlu0 %v813, 64
    %v1011 = vpop.permute.xlu0 %1010
    %1012 = vrot.lane.b32.xlu0 %v815, 64
    %v1013 = vpop.permute.xlu0 %1012
    %1014 = vrot.lane.b32.xlu0 %v816, 64
    %v1015 = vpop.permute.xlu0 %1014
    %1016 = vrot.lane.b32.xlu0 %v818, 64
    %v1017 = vpop.permute.xlu0 %1016
    %1018 = vrot.lane.b32.xlu0 %v819, 64
    %v1019 = vpop.permute.xlu0 %1018
    %1020 = vrot.lane.b32.xlu0 %v821, 64
    %v1021 = vpop.permute.xlu0 %1020
    %1022 = vrot.lane.b32.xlu0 %v822, 64
    %v1023 = vpop.permute.xlu0 %1022
    %1024 = vrot.lane.b32.xlu0 %v824, 64
    %v1025 = vpop.permute.xlu0 %1024
    %1026 = vrot.lane.b32.xlu0 %v825, 64
    %v1027 = vpop.permute.xlu0 %1026
    %1028 = vrot.lane.b32.xlu0 %v827, 64
    %v1029 = vpop.permute.xlu0 %1028
    %1030 = vrot.lane.b32.xlu0 %v828, 64
    %v1031 = vpop.permute.xlu0 %1030
    %1032 = vrot.lane.b32.xlu0 %v830, 64
    %v1033 = vpop.permute.xlu0 %1032
    %1034 = vrot.lane.b32.xlu0 %v831, 64
    %v1035 = vpop.permute.xlu0 %1034
    %1036 = vrot.lane.b32.xlu0 %v833, 64
    %v1037 = vpop.permute.xlu0 %1036
    %1038 = vrot.lane.b32.xlu0 %v834, 64
    %v1039 = vpop.permute.xlu0 %1038
    %1040 = vrot.lane.b32.xlu0 %v836, 64
    %v1041 = vpop.permute.xlu0 %1040
    %1042 = vrot.lane.b32.xlu0 %v837, 64
    %v1043 = vpop.permute.xlu0 %1042
    %1044 = vrot.lane.b32.xlu0 %v839, 64
    %v1045 = vpop.permute.xlu0 %1044
    %1046 = vrot.lane.b32.xlu0 %v840, 64
    %v1047 = vpop.permute.xlu0 %1046
    %1048 = vrot.lane.b32.xlu0 %v842, 64
    %v1049 = vpop.permute.xlu0 %1048
    %1050 = vrot.lane.b32.xlu0 %v843, 64
    %v1051 = vpop.permute.xlu0 %1050
    %1052 = vrot.lane.b32.xlu0 %v845, 64
    %v1053 = vpop.permute.xlu0 %1052
    %1054 = vrot.lane.b32.xlu0 %v846, 64
    %v1055 = vpop.permute.xlu0 %1054
    %1056 = vrot.lane.b32.xlu0 %v848, 64
    %v1057 = vpop.permute.xlu0 %1056
    %1058 = vrot.lane.b32.xlu0 %v849, 64
    %v1059 = vpop.permute.xlu0 %1058
    %1060 = vrot.lane.b32.xlu0 %v851, 64
    %v1061 = vpop.permute.xlu0 %1060
    %1062 = vrot.lane.b32.xlu0 %v852, 64
    %v1063 = vpop.permute.xlu0 %1062
    %1064 = vrot.lane.b32.xlu0 %v854, 64
    %v1065 = vpop.permute.xlu0 %1064
    %1066 = vrot.lane.b32.xlu0 %v855, 64
    %v1067 = vpop.permute.xlu0 %1066
    %1068 = vrot.lane.b32.xlu0 %v857, 64
    %v1069 = vpop.permute.xlu0 %1068
    %1070 = vrot.lane.b32.xlu0 %v858, 64
    %v1071 = vpop.permute.xlu0 %1070
    %1072 = vrot.lane.b32.xlu0 %v860, 64
    %v1073 = vpop.permute.xlu0 %1072
    %1074 = vrot.lane.b32.xlu0 %v861, 64
    %v1075 = vpop.permute.xlu0 %1074
    %1076 = vrot.lane.b32.xlu0 %v863, 64
    %v1077 = vpop.permute.xlu0 %1076
    %1078 = vrot.lane.b32.xlu0 %v864, 64
    %v1079 = vpop.permute.xlu0 %1078
    %1080 = vrot.lane.b32.xlu0 %v866, 64
    %v1081 = vpop.permute.xlu0 %1080
    %1082 = vrot.lane.b32.xlu0 %v867, 64
    %v1083 = vpop.permute.xlu0 %1082
    %1084 = vrot.lane.b32.xlu0 %v869, 64
    %v1085 = vpop.permute.xlu0 %1084
    %1086 = vrot.lane.b32.xlu0 %v870, 64
    %v1087 = vpop.permute.xlu0 %1086
    %1088 = vrot.lane.b32.xlu0 %v872, 64
    %v1089 = vpop.permute.xlu0 %1088
    %1090 = vrot.lane.b32.xlu0 %v873, 64
    %v1091 = vpop.permute.xlu0 %1090
    %1092 = vrot.lane.b32.xlu0 %v875, 64
    %v1093 = vpop.permute.xlu0 %1092
    %1094 = vrot.lane.b32.xlu0 %v876, 64
    %v1095 = vpop.permute.xlu0 %1094
    %1096 = vrot.lane.b32.xlu0 %v878, 64
    %v1097 = vpop.permute.xlu0 %1096
    %1098 = vrot.lane.b32.xlu0 %v879, 64
    %v1099 = vpop.permute.xlu0 %1098
    %1100 = vrot.lane.b32.xlu0 %v881, 64
    %v1101 = vpop.permute.xlu0 %1100
    %1102 = vrot.lane.b32.xlu0 %v882, 64
    %v1103 = vpop.permute.xlu0 %1102
    %1104 = vrot.lane.b32.xlu0 %v884, 64
    %v1105 = vpop.permute.xlu0 %1104
    %1106 = vrot.lane.b32.xlu0 %v885, 64
    %v1107 = vpop.permute.xlu0 %1106
    %1108 = vrot.lane.b32.xlu0 %v887, 64
    %v1109 = vpop.permute.xlu0 %1108
    %1110 = vrot.lane.b32.xlu0 %v888, 64
    %v1111 = vpop.permute.xlu0 %1110
    %1112 = vrot.lane.b32.xlu0 %v890, 64
    %v1113 = vpop.permute.xlu0 %1112
    %1114 = vrot.lane.b32.xlu0 %v891, 64
    %v1115 = vpop.permute.xlu0 %1114
    %1116 = vrot.lane.b32.xlu0 %v893, 64
    %v1117 = vpop.permute.xlu0 %1116
    %1118 = vrot.lane.b32.xlu0 %v894, 64
    %v1119 = vpop.permute.xlu0 %1118
    %1120 = vrot.lane.b32.xlu0 %v896, 64
    %v1121 = vpop.permute.xlu0 %1120
    %1122 = vrot.lane.b32.xlu0 %v897, 64
    %v1123 = vpop.permute.xlu0 %1122
    %1124 = vrot.lane.b32.xlu0 %v899, 64
    %v1125 = vpop.permute.xlu0 %1124
    %1126 = vrot.lane.b32.xlu0 %v900, 64
    %v1127 = vpop.permute.xlu0 %1126
    %1128 = vrot.lane.b32.xlu0 %v902, 64
    %v1129 = vpop.permute.xlu0 %1128
    %1130 = vrot.lane.b32.xlu0 %v903, 64
    %v1131 = vpop.permute.xlu0 %1130
    %1132 = vrot.lane.b32.xlu0 %v905, 64
    %v1133 = vpop.permute.xlu0 %1132
    %1134 = vrot.lane.b32.xlu0 %v906, 64
    %v1135 = vpop.permute.xlu0 %1134
    %1136 = vrot.lane.b32.xlu0 %v908, 64
    %v1137 = vpop.permute.xlu0 %1136
    %1138 = vrot.lane.b32.xlu0 %v909, 64
    %v1139 = vpop.permute.xlu0 %1138
    %1140 = vrot.lane.b32.xlu0 %v911, 64
    %v1141 = vpop.permute.xlu0 %1140
    %1142 = vrot.lane.b32.xlu0 %v912, 64
    %v1143 = vpop.permute.xlu0 %1142
    %1144 = vrot.lane.b32.xlu0 %v914, 64
    %v1145 = vpop.permute.xlu0 %1144
    %1146 = vrot.lane.b32.xlu0 %v915, 64
    %v1147 = vpop.permute.xlu0 %1146
    %1148 = vrot.lane.b32.xlu0 %v917, 64
    %v1149 = vpop.permute.xlu0 %1148
    %1150 = vrot.lane.b32.xlu0 %v918, 64
    %v1151 = vpop.permute.xlu0 %1150
    %1152 = vrot.lane.b32.xlu0 %v920, 64
    %v1153 = vpop.permute.xlu0 %1152
    %1154 = vrot.lane.b32.xlu0 %v921, 64
    %v1155 = vpop.permute.xlu0 %1154
    %1156 = vrot.lane.b32.xlu0 %v923, 64
    %v1157 = vpop.permute.xlu0 %1156
    %1158 = vrot.lane.b32.xlu0 %v924, 64
    %v1159 = vpop.permute.xlu0 %1158
    %1160 = vrot.lane.b32.xlu0 %v926, 64
    %v1161 = vpop.permute.xlu0 %1160
    %1162 = vrot.lane.b32.xlu0 %v927, 64
    %v1163 = vpop.permute.xlu0 %1162
    %1164 = vrot.lane.b32.xlu0 %v929, 64
    %v1165 = vpop.permute.xlu0 %1164
    %1166 = vrot.lane.b32.xlu0 %v930, 64
    %v1167 = vpop.permute.xlu0 %1166
    %1168 = vrot.lane.b32.xlu0 %v932, 64
    %v1169 = vpop.permute.xlu0 %1168
    %1170 = vrot.lane.b32.xlu0 %v933, 64
    %v1171 = vpop.permute.xlu0 %1170
    %1172 = vrot.lane.b32.xlu0 %v935, 64
    %v1173 = vpop.permute.xlu0 %1172
    %1174 = vrot.lane.b32.xlu0 %v936, 64
    %v1175 = vpop.permute.xlu0 %1174
    %1176 = vrot.lane.b32.xlu0 %v938, 64
    %v1177 = vpop.permute.xlu0 %1176
    %1178 = vrot.lane.b32.xlu0 %v939, 64
    %v1179 = vpop.permute.xlu0 %1178
    %1180 = vrot.lane.b32.xlu0 %v941, 64
    %v1181 = vpop.permute.xlu0 %1180
    %1182 = vrot.lane.b32.xlu0 %v942, 64
    %v1183 = vpop.permute.xlu0 %1182
    %1184 = vrot.lane.b32.xlu0 %v944, 64
    %v1185 = vpop.permute.xlu0 %1184
    %1186 = vrot.lane.b32.xlu0 %v945, 64
    %v1187 = vpop.permute.xlu0 %1186
    %1188 = vrot.lane.b32.xlu0 %v947, 64
    %v1189 = vpop.permute.xlu0 %1188
    %1190 = vrot.lane.b32.xlu0 %v948, 64
    %v1191 = vpop.permute.xlu0 %1190
    %1192 = vrot.lane.b32.xlu0 %v950, 64
    %v1193 = vpop.permute.xlu0 %1192
    %1194 = vrot.lane.b32.xlu0 %v951, 64
    %v1195 = vpop.permute.xlu0 %1194
    %1196 = vrot.lane.b32.xlu0 %v953, 64
    %v1197 = vpop.permute.xlu0 %1196
    %1198 = vrot.lane.b32.xlu0 %v954, 64
    %v1199 = vpop.permute.xlu0 %1198
    %1200 = vrot.lane.b32.xlu0 %v956, 64
    %v1201 = vpop.permute.xlu0 %1200
    %1202 = vrot.lane.b32.xlu0 %v957, 64
    %v1203 = vpop.permute.xlu0 %1202
    %1204 = vrot.lane.b32.xlu0 %v959, 64
    %v1205 = vpop.permute.xlu0 %1204
    %1206 = vrot.lane.b32.xlu0 %v960, 64
    %v1207 = vpop.permute.xlu0 %1206
    %1208 = vrot.lane.b32.xlu0 %v962, 64
    %v1209 = vpop.permute.xlu0 %1208
    %1210 = vrot.lane.b32.xlu0 %v963, 64
    %v1211 = vpop.permute.xlu0 %1210
    %1212 = vrot.lane.b32.xlu0 %v965, 64
    %v1213 = vpop.permute.xlu0 %1212
    %1214 = vrot.lane.b32.xlu0 %v966, 64
    %v1215 = vpop.permute.xlu0 %1214
    %1216 = vrot.lane.b32.xlu0 %v968, 64
    %v1217 = vpop.permute.xlu0 %1216
    %1218 = vrot.lane.b32.xlu0 %v969, 64
    %v1219 = vpop.permute.xlu0 %1218
    %1220 = vrot.lane.b32.xlu0 %v971, 64
    %v1221 = vpop.permute.xlu0 %1220
    %1222 = vrot.lane.b32.xlu0 %v972, 64
    %v1223 = vpop.permute.xlu0 %1222
    %1224 = vrot.lane.b32.xlu0 %v974, 64
    %v1225 = vpop.permute.xlu0 %1224
    %1226 = vrot.lane.b32.xlu0 %v975, 64
    %v1227 = vpop.permute.xlu0 %1226
    %1228 = vrot.lane.b32.xlu0 %v977, 64
    %v1229 = vpop.permute.xlu0 %1228
    %1230 = vrot.lane.b32.xlu0 %v978, 64
    %v1231 = vpop.permute.xlu0 %1230
    %1232 = vrot.lane.b32.xlu0 %v980, 64
    %v1233 = vpop.permute.xlu0 %1232
    %1234 = vrot.lane.b32.xlu0 %v981, 64
    %v1235 = vpop.permute.xlu0 %1234
    %1236 = vrot.lane.b32.xlu0 %v983, 64
    %v1237 = vpop.permute.xlu0 %1236
    %1238 = vrot.lane.b32.xlu0 %v984, 64
    %v1239 = vpop.permute.xlu0 %1238
    %1240 = vrot.lane.b32.xlu0 %v986, 64
    %v1241 = vpop.permute.xlu0 %1240
    %1242 = vrot.lane.b32.xlu0 %v987, 64
    %v1243 = vpop.permute.xlu0 %1242
    %1244 = vrot.lane.b32.xlu0 %v989, 64
    %v1245 = vpop.permute.xlu0 %1244
    %v1374 = vsel %vm797, %v541, %v991
    %v1375 = vsel %vm797, %v543, %v995
    %v1376 = vsel %vm797, %v545, %v999
    %v1377 = vsel %vm797, %v547, %v1003
    %v1378 = vsel %vm797, %v549, %v1007
    %v1379 = vsel %vm797, %v551, %v1011
    %v1380 = vsel %vm797, %v553, %v1015
    %v1381 = vsel %vm797, %v555, %v1019
    %v1382 = vsel %vm797, %v557, %v1023
    %v1383 = vsel %vm797, %v559, %v1027
    %v1384 = vsel %vm797, %v561, %v1031
    %v1385 = vsel %vm797, %v563, %v1035
    %v1386 = vsel %vm797, %v565, %v1039
    %v1387 = vsel %vm797, %v567, %v1043
    %v1388 = vsel %vm797, %v569, %v1047
    %v1389 = vsel %vm797, %v571, %v1051
    %v1390 = vsel %vm797, %v573, %v1055
    %v1391 = vsel %vm797, %v575, %v1059
    %v1392 = vsel %vm797, %v577, %v1063
    %v1393 = vsel %vm797, %v579, %v1067
    %v1394 = vsel %vm797, %v581, %v1071
    %v1395 = vsel %vm797, %v583, %v1075
    %v1396 = vsel %vm797, %v585, %v1079
    %v1397 = vsel %vm797, %v587, %v1083
    %v1398 = vsel %vm797, %v589, %v1087
    %v1399 = vsel %vm797, %v591, %v1091
    %v1400 = vsel %vm797, %v593, %v1095
    %v1401 = vsel %vm797, %v595, %v1099
    %v1402 = vsel %vm797, %v597, %v1103
    %v1403 = vsel %vm797, %v599, %v1107
    %v1404 = vsel %vm797, %v601, %v1111
    %v1405 = vsel %vm797, %v603, %v1115
    %v1406 = vsel %vm797, %v605, %v1119
    %v1407 = vsel %vm797, %v607, %v1123
    %v1408 = vsel %vm797, %v609, %v1127
    %v1409 = vsel %vm797, %v611, %v1131
    %v1410 = vsel %vm797, %v613, %v1135
    %v1411 = vsel %vm797, %v615, %v1139
    %v1412 = vsel %vm797, %v617, %v1143
    %v1413 = vsel %vm797, %v619, %v1147
    %v1414 = vsel %vm797, %v621, %v1151
    %v1415 = vsel %vm797, %v623, %v1155
    %v1416 = vsel %vm797, %v625, %v1159
    %v1417 = vsel %vm797, %v627, %v1163
    %v1418 = vsel %vm797, %v629, %v1167
    %v1419 = vsel %vm797, %v631, %v1171
    %v1420 = vsel %vm797, %v633, %v1175
    %v1421 = vsel %vm797, %v635, %v1179
    %v1422 = vsel %vm797, %v637, %v1183
    %v1423 = vsel %vm797, %v639, %v1187
    %v1424 = vsel %vm797, %v641, %v1191
    %v1425 = vsel %vm797, %v643, %v1195
    %v1426 = vsel %vm797, %v645, %v1199
    %v1427 = vsel %vm797, %v647, %v1203
    %v1428 = vsel %vm797, %v649, %v1207
    %v1429 = vsel %vm797, %v651, %v1211
    %v1430 = vsel %vm797, %v653, %v1215
    %v1431 = vsel %vm797, %v655, %v1219
    %v1432 = vsel %vm797, %v657, %v1223
    %v1433 = vsel %vm797, %v659, %v1227
    %v1434 = vsel %vm797, %v661, %v1231
    %v1435 = vsel %vm797, %v663, %v1235
    %v1436 = vsel %vm797, %v665, %v1239
    %v1437 = vsel %vm797, %v667, %v1243
    %1438 = vrot.lane.b32.xlu0 %v541, 64
    %v1439 = vpop.permute.xlu0 %1438
    %1440 = vrot.lane.b32.xlu0 %v542, 64
    %v1441 = vpop.permute.xlu0 %1440
    %1442 = vrot.lane.b32.xlu0 %v543, 64
    %v1443 = vpop.permute.xlu0 %1442
    %1444 = vrot.lane.b32.xlu0 %v544, 64
    %v1445 = vpop.permute.xlu0 %1444
    %1446 = vrot.lane.b32.xlu0 %v545, 64
    %v1447 = vpop.permute.xlu0 %1446
    %1448 = vrot.lane.b32.xlu0 %v546, 64
    %v1449 = vpop.permute.xlu0 %1448
    %1450 = vrot.lane.b32.xlu0 %v547, 64
    %v1451 = vpop.permute.xlu0 %1450
    %1452 = vrot.lane.b32.xlu0 %v548, 64
    %v1453 = vpop.permute.xlu0 %1452
    %1454 = vrot.lane.b32.xlu0 %v549, 64
    %v1455 = vpop.permute.xlu0 %1454
    %1456 = vrot.lane.b32.xlu0 %v550, 64
    %v1457 = vpop.permute.xlu0 %1456
    %1458 = vrot.lane.b32.xlu0 %v551, 64
    %v1459 = vpop.permute.xlu0 %1458
    %1460 = vrot.lane.b32.xlu0 %v552, 64
    %v1461 = vpop.permute.xlu0 %1460
    %1462 = vrot.lane.b32.xlu0 %v553, 64
    %v1463 = vpop.permute.xlu0 %1462
    %1464 = vrot.lane.b32.xlu0 %v554, 64
    %v1465 = vpop.permute.xlu0 %1464
    %1466 = vrot.lane.b32.xlu0 %v555, 64
    %v1467 = vpop.permute.xlu0 %1466
    %1468 = vrot.lane.b32.xlu0 %v556, 64
    %v1469 = vpop.permute.xlu0 %1468
    %1470 = vrot.lane.b32.xlu0 %v557, 64
    %v1471 = vpop.permute.xlu0 %1470
    %1472 = vrot.lane.b32.xlu0 %v558, 64
    %v1473 = vpop.permute.xlu0 %1472
    %1474 = vrot.lane.b32.xlu0 %v559, 64
    %v1475 = vpop.permute.xlu0 %1474
    %1476 = vrot.lane.b32.xlu0 %v560, 64
    %v1477 = vpop.permute.xlu0 %1476
    %1478 = vrot.lane.b32.xlu0 %v561, 64
    %v1479 = vpop.permute.xlu0 %1478
    %1480 = vrot.lane.b32.xlu0 %v562, 64
    %v1481 = vpop.permute.xlu0 %1480
    %1482 = vrot.lane.b32.xlu0 %v563, 64
    %v1483 = vpop.permute.xlu0 %1482
    %1484 = vrot.lane.b32.xlu0 %v564, 64
    %v1485 = vpop.permute.xlu0 %1484
    %1486 = vrot.lane.b32.xlu0 %v565, 64
    %v1487 = vpop.permute.xlu0 %1486
    %1488 = vrot.lane.b32.xlu0 %v566, 64
    %v1489 = vpop.permute.xlu0 %1488
    %1490 = vrot.lane.b32.xlu0 %v567, 64
    %v1491 = vpop.permute.xlu0 %1490
    %1492 = vrot.lane.b32.xlu0 %v568, 64
    %v1493 = vpop.permute.xlu0 %1492
    %1494 = vrot.lane.b32.xlu0 %v569, 64
    %v1495 = vpop.permute.xlu0 %1494
    %1496 = vrot.lane.b32.xlu0 %v570, 64
    %v1497 = vpop.permute.xlu0 %1496
    %1498 = vrot.lane.b32.xlu0 %v571, 64
    %v1499 = vpop.permute.xlu0 %1498
    %1500 = vrot.lane.b32.xlu0 %v572, 64
    %v1501 = vpop.permute.xlu0 %1500
    %1502 = vrot.lane.b32.xlu0 %v573, 64
    %v1503 = vpop.permute.xlu0 %1502
    %1504 = vrot.lane.b32.xlu0 %v574, 64
    %v1505 = vpop.permute.xlu0 %1504
    %1506 = vrot.lane.b32.xlu0 %v575, 64
    %v1507 = vpop.permute.xlu0 %1506
    %1508 = vrot.lane.b32.xlu0 %v576, 64
    %v1509 = vpop.permute.xlu0 %1508
    %1510 = vrot.lane.b32.xlu0 %v577, 64
    %v1511 = vpop.permute.xlu0 %1510
    %1512 = vrot.lane.b32.xlu0 %v578, 64
    %v1513 = vpop.permute.xlu0 %1512
    %1514 = vrot.lane.b32.xlu0 %v579, 64
    %v1515 = vpop.permute.xlu0 %1514
    %1516 = vrot.lane.b32.xlu0 %v580, 64
    %v1517 = vpop.permute.xlu0 %1516
    %1518 = vrot.lane.b32.xlu0 %v581, 64
    %v1519 = vpop.permute.xlu0 %1518
    %1520 = vrot.lane.b32.xlu0 %v582, 64
    %v1521 = vpop.permute.xlu0 %1520
    %1522 = vrot.lane.b32.xlu0 %v583, 64
    %v1523 = vpop.permute.xlu0 %1522
    %1524 = vrot.lane.b32.xlu0 %v584, 64
    %v1525 = vpop.permute.xlu0 %1524
    %1526 = vrot.lane.b32.xlu0 %v585, 64
    %v1527 = vpop.permute.xlu0 %1526
    %1528 = vrot.lane.b32.xlu0 %v586, 64
    %v1529 = vpop.permute.xlu0 %1528
    %1530 = vrot.lane.b32.xlu0 %v587, 64
    %v1531 = vpop.permute.xlu0 %1530
    %1532 = vrot.lane.b32.xlu0 %v588, 64
    %v1533 = vpop.permute.xlu0 %1532
    %1534 = vrot.lane.b32.xlu0 %v589, 64
    %v1535 = vpop.permute.xlu0 %1534
    %1536 = vrot.lane.b32.xlu0 %v590, 64
    %v1537 = vpop.permute.xlu0 %1536
    %1538 = vrot.lane.b32.xlu0 %v591, 64
    %v1539 = vpop.permute.xlu0 %1538
    %1540 = vrot.lane.b32.xlu0 %v592, 64
    %v1541 = vpop.permute.xlu0 %1540
    %1542 = vrot.lane.b32.xlu0 %v593, 64
    %v1543 = vpop.permute.xlu0 %1542
    %1544 = vrot.lane.b32.xlu0 %v594, 64
    %v1545 = vpop.permute.xlu0 %1544
    %1546 = vrot.lane.b32.xlu0 %v595, 64
    %v1547 = vpop.permute.xlu0 %1546
    %1548 = vrot.lane.b32.xlu0 %v596, 64
    %v1549 = vpop.permute.xlu0 %1548
    %1550 = vrot.lane.b32.xlu0 %v597, 64
    %v1551 = vpop.permute.xlu0 %1550
    %1552 = vrot.lane.b32.xlu0 %v598, 64
    %v1553 = vpop.permute.xlu0 %1552
    %1554 = vrot.lane.b32.xlu0 %v599, 64
    %v1555 = vpop.permute.xlu0 %1554
    %1556 = vrot.lane.b32.xlu0 %v600, 64
    %v1557 = vpop.permute.xlu0 %1556
    %1558 = vrot.lane.b32.xlu0 %v601, 64
    %v1559 = vpop.permute.xlu0 %1558
    %1560 = vrot.lane.b32.xlu0 %v602, 64
    %v1561 = vpop.permute.xlu0 %1560
    %1562 = vrot.lane.b32.xlu0 %v603, 64
    %v1563 = vpop.permute.xlu0 %1562
    %1564 = vrot.lane.b32.xlu0 %v604, 64
    %v1565 = vpop.permute.xlu0 %1564
    %1566 = vrot.lane.b32.xlu0 %v605, 64
    %v1567 = vpop.permute.xlu0 %1566
    %1568 = vrot.lane.b32.xlu0 %v606, 64
    %v1569 = vpop.permute.xlu0 %1568
    %1570 = vrot.lane.b32.xlu0 %v607, 64
    %v1571 = vpop.permute.xlu0 %1570
    %1572 = vrot.lane.b32.xlu0 %v608, 64
    %v1573 = vpop.permute.xlu0 %1572
    %1574 = vrot.lane.b32.xlu0 %v609, 64
    %v1575 = vpop.permute.xlu0 %1574
    %1576 = vrot.lane.b32.xlu0 %v610, 64
    %v1577 = vpop.permute.xlu0 %1576
    %1578 = vrot.lane.b32.xlu0 %v611, 64
    %v1579 = vpop.permute.xlu0 %1578
    %1580 = vrot.lane.b32.xlu0 %v612, 64
    %v1581 = vpop.permute.xlu0 %1580
    %1582 = vrot.lane.b32.xlu0 %v613, 64
    %v1583 = vpop.permute.xlu0 %1582
    %1584 = vrot.lane.b32.xlu0 %v614, 64
    %v1585 = vpop.permute.xlu0 %1584
    %1586 = vrot.lane.b32.xlu0 %v615, 64
    %v1587 = vpop.permute.xlu0 %1586
    %1588 = vrot.lane.b32.xlu0 %v616, 64
    %v1589 = vpop.permute.xlu0 %1588
    %1590 = vrot.lane.b32.xlu0 %v617, 64
    %v1591 = vpop.permute.xlu0 %1590
    %1592 = vrot.lane.b32.xlu0 %v618, 64
    %v1593 = vpop.permute.xlu0 %1592
    %1594 = vrot.lane.b32.xlu0 %v619, 64
    %v1595 = vpop.permute.xlu0 %1594
    %1596 = vrot.lane.b32.xlu0 %v620, 64
    %v1597 = vpop.permute.xlu0 %1596
    %1598 = vrot.lane.b32.xlu0 %v621, 64
    %v1599 = vpop.permute.xlu0 %1598
    %1600 = vrot.lane.b32.xlu0 %v622, 64
    %v1601 = vpop.permute.xlu0 %1600
    %1602 = vrot.lane.b32.xlu0 %v623, 64
    %v1603 = vpop.permute.xlu0 %1602
    %1604 = vrot.lane.b32.xlu0 %v624, 64
    %v1605 = vpop.permute.xlu0 %1604
    %1606 = vrot.lane.b32.xlu0 %v625, 64
    %v1607 = vpop.permute.xlu0 %1606
    %1608 = vrot.lane.b32.xlu0 %v626, 64
    %v1609 = vpop.permute.xlu0 %1608
    %1610 = vrot.lane.b32.xlu0 %v627, 64
    %v1611 = vpop.permute.xlu0 %1610
    %1612 = vrot.lane.b32.xlu0 %v628, 64
    %v1613 = vpop.permute.xlu0 %1612
    %1614 = vrot.lane.b32.xlu0 %v629, 64
    %v1615 = vpop.permute.xlu0 %1614
    %1616 = vrot.lane.b32.xlu0 %v630, 64
    %v1617 = vpop.permute.xlu0 %1616
    %1618 = vrot.lane.b32.xlu0 %v631, 64
    %v1619 = vpop.permute.xlu0 %1618
    %1620 = vrot.lane.b32.xlu0 %v632, 64
    %v1621 = vpop.permute.xlu0 %1620
    %1622 = vrot.lane.b32.xlu0 %v633, 64
    %v1623 = vpop.permute.xlu0 %1622
    %1624 = vrot.lane.b32.xlu0 %v634, 64
    %v1625 = vpop.permute.xlu0 %1624
    %1626 = vrot.lane.b32.xlu0 %v635, 64
    %v1627 = vpop.permute.xlu0 %1626
    %1628 = vrot.lane.b32.xlu0 %v636, 64
    %v1629 = vpop.permute.xlu0 %1628
    %1630 = vrot.lane.b32.xlu0 %v637, 64
    %v1631 = vpop.permute.xlu0 %1630
    %1632 = vrot.lane.b32.xlu0 %v638, 64
    %v1633 = vpop.permute.xlu0 %1632
    %1634 = vrot.lane.b32.xlu0 %v639, 64
    %v1635 = vpop.permute.xlu0 %1634
    %1636 = vrot.lane.b32.xlu0 %v640, 64
    %v1637 = vpop.permute.xlu0 %1636
    %1638 = vrot.lane.b32.xlu0 %v641, 64
    %v1639 = vpop.permute.xlu0 %1638
    %1640 = vrot.lane.b32.xlu0 %v642, 64
    %v1641 = vpop.permute.xlu0 %1640
    %1642 = vrot.lane.b32.xlu0 %v643, 64
    %v1643 = vpop.permute.xlu0 %1642
    %1644 = vrot.lane.b32.xlu0 %v644, 64
    %v1645 = vpop.permute.xlu0 %1644
    %1646 = vrot.lane.b32.xlu0 %v645, 64
    %v1647 = vpop.permute.xlu0 %1646
    %1648 = vrot.lane.b32.xlu0 %v646, 64
    %v1649 = vpop.permute.xlu0 %1648
    %1650 = vrot.lane.b32.xlu0 %v647, 64
    %v1651 = vpop.permute.xlu0 %1650
    %1652 = vrot.lane.b32.xlu0 %v648, 64
    %v1653 = vpop.permute.xlu0 %1652
    %1654 = vrot.lane.b32.xlu0 %v649, 64
    %v1655 = vpop.permute.xlu0 %1654
    %1656 = vrot.lane.b32.xlu0 %v650, 64
    %v1657 = vpop.permute.xlu0 %1656
    %1658 = vrot.lane.b32.xlu0 %v651, 64
    %v1659 = vpop.permute.xlu0 %1658
    %1660 = vrot.lane.b32.xlu0 %v652, 64
    %v1661 = vpop.permute.xlu0 %1660
    %1662 = vrot.lane.b32.xlu0 %v653, 64
    %v1663 = vpop.permute.xlu0 %1662
    %1664 = vrot.lane.b32.xlu0 %v654, 64
    %v1665 = vpop.permute.xlu0 %1664
    %1666 = vrot.lane.b32.xlu0 %v655, 64
    %v1667 = vpop.permute.xlu0 %1666
    %1668 = vrot.lane.b32.xlu0 %v656, 64
    %v1669 = vpop.permute.xlu0 %1668
    %1670 = vrot.lane.b32.xlu0 %v657, 64
    %v1671 = vpop.permute.xlu0 %1670
    %1672 = vrot.lane.b32.xlu0 %v658, 64
    %v1673 = vpop.permute.xlu0 %1672
    %1674 = vrot.lane.b32.xlu0 %v659, 64
    %v1675 = vpop.permute.xlu0 %1674
    %1676 = vrot.lane.b32.xlu0 %v660, 64
    %v1677 = vpop.permute.xlu0 %1676
    %1678 = vrot.lane.b32.xlu0 %v661, 64
    %v1679 = vpop.permute.xlu0 %1678
    %1680 = vrot.lane.b32.xlu0 %v662, 64
    %v1681 = vpop.permute.xlu0 %1680
    %1682 = vrot.lane.b32.xlu0 %v663, 64
    %v1683 = vpop.permute.xlu0 %1682
    %1684 = vrot.lane.b32.xlu0 %v664, 64
    %v1685 = vpop.permute.xlu0 %1684
    %1686 = vrot.lane.b32.xlu0 %v665, 64
    %v1687 = vpop.permute.xlu0 %1686
    %1688 = vrot.lane.b32.xlu0 %v666, 64
    %v1689 = vpop.permute.xlu0 %1688
    %1690 = vrot.lane.b32.xlu0 %v667, 64
    %v1691 = vpop.permute.xlu0 %1690
    %1692 = vrot.lane.b32.xlu0 %v668, 64
    %v1693 = vpop.permute.xlu0 %1692
    %v1822 = vmax.f32 %v541, %v1439
    %v1823 = vmax.f32 %v542, %v1441
    %v1824 = vmax.f32 %v543, %v1443
    %v1825 = vmax.f32 %v544, %v1445
    %v1826 = vmax.f32 %v545, %v1447
    %v1827 = vmax.f32 %v546, %v1449
    %v1828 = vmax.f32 %v547, %v1451
    %v1829 = vmax.f32 %v548, %v1453
    %v1830 = vmax.f32 %v549, %v1455
    %v1831 = vmax.f32 %v550, %v1457
    %v1832 = vmax.f32 %v551, %v1459
    %v1833 = vmax.f32 %v552, %v1461
    %v1834 = vmax.f32 %v553, %v1463
    %v1835 = vmax.f32 %v554, %v1465
    %v1836 = vmax.f32 %v555, %v1467
    %v1837 = vmax.f32 %v556, %v1469
    %v1838 = vmax.f32 %v557, %v1471
    %v1839 = vmax.f32 %v558, %v1473
    %v1840 = vmax.f32 %v559, %v1475
    %v1841 = vmax.f32 %v560, %v1477
    %v1842 = vmax.f32 %v561, %v1479
    %v1843 = vmax.f32 %v562, %v1481
    %v1844 = vmax.f32 %v563, %v1483
    %v1845 = vmax.f32 %v564, %v1485
    %v1846 = vmax.f32 %v565, %v1487
    %v1847 = vmax.f32 %v566, %v1489
    %v1848 = vmax.f32 %v567, %v1491
    %v1849 = vmax.f32 %v568, %v1493
    %v1850 = vmax.f32 %v569, %v1495
    %v1851 = vmax.f32 %v570, %v1497
    %v1852 = vmax.f32 %v571, %v1499
    %v1853 = vmax.f32 %v572, %v1501
    %v1854 = vmax.f32 %v573, %v1503
    %v1855 = vmax.f32 %v574, %v1505
    %v1856 = vmax.f32 %v575, %v1507
    %v1857 = vmax.f32 %v576, %v1509
    %v1858 = vmax.f32 %v577, %v1511
    %v1859 = vmax.f32 %v578, %v1513
    %v1860 = vmax.f32 %v579, %v1515
    %v1861 = vmax.f32 %v580, %v1517
    %v1862 = vmax.f32 %v581, %v1519
    %v1863 = vmax.f32 %v582, %v1521
    %v1864 = vmax.f32 %v583, %v1523
    %v1865 = vmax.f32 %v584, %v1525
    %v1866 = vmax.f32 %v585, %v1527
    %v1867 = vmax.f32 %v586, %v1529
    %v1868 = vmax.f32 %v587, %v1531
    %v1869 = vmax.f32 %v588, %v1533
    %v1870 = vmax.f32 %v589, %v1535
    %v1871 = vmax.f32 %v590, %v1537
    %v1872 = vmax.f32 %v591, %v1539
    %v1873 = vmax.f32 %v592, %v1541
    %v1874 = vmax.f32 %v593, %v1543
    %v1875 = vmax.f32 %v594, %v1545
    %v1876 = vmax.f32 %v595, %v1547
    %v1877 = vmax.f32 %v596, %v1549
    %v1878 = vmax.f32 %v597, %v1551
    %v1879 = vmax.f32 %v598, %v1553
    %v1880 = vmax.f32 %v599, %v1555
    %v1881 = vmax.f32 %v600, %v1557
    %v1882 = vmax.f32 %v601, %v1559
    %v1883 = vmax.f32 %v602, %v1561
    %v1884 = vmax.f32 %v603, %v1563
    %v1885 = vmax.f32 %v604, %v1565
    %v1886 = vmax.f32 %v605, %v1567
    %v1887 = vmax.f32 %v606, %v1569
    %v1888 = vmax.f32 %v607, %v1571
    %v1889 = vmax.f32 %v608, %v1573
    %v1890 = vmax.f32 %v609, %v1575
    %v1891 = vmax.f32 %v610, %v1577
    %v1892 = vmax.f32 %v611, %v1579
    %v1893 = vmax.f32 %v612, %v1581
    %v1894 = vmax.f32 %v613, %v1583
    %v1895 = vmax.f32 %v614, %v1585
    %v1896 = vmax.f32 %v615, %v1587
    %v1897 = vmax.f32 %v616, %v1589
    %v1898 = vmax.f32 %v617, %v1591
    %v1899 = vmax.f32 %v618, %v1593
    %v1900 = vmax.f32 %v619, %v1595
    %v1901 = vmax.f32 %v620, %v1597
    %v1902 = vmax.f32 %v621, %v1599
    %v1903 = vmax.f32 %v622, %v1601
    %v1904 = vmax.f32 %v623, %v1603
    %v1905 = vmax.f32 %v624, %v1605
    %v1906 = vmax.f32 %v625, %v1607
    %v1907 = vmax.f32 %v626, %v1609
    %v1908 = vmax.f32 %v627, %v1611
    %v1909 = vmax.f32 %v628, %v1613
    %v1910 = vmax.f32 %v629, %v1615
    %v1911 = vmax.f32 %v630, %v1617
    %v1912 = vmax.f32 %v631, %v1619
    %v1913 = vmax.f32 %v632, %v1621
    %v1914 = vmax.f32 %v633, %v1623
    %v1915 = vmax.f32 %v634, %v1625
    %v1916 = vmax.f32 %v635, %v1627
    %v1917 = vmax.f32 %v636, %v1629
    %v1918 = vmax.f32 %v637, %v1631
    %v1919 = vmax.f32 %v638, %v1633
    %v1920 = vmax.f32 %v639, %v1635
    %v1921 = vmax.f32 %v640, %v1637
    %v1922 = vmax.f32 %v641, %v1639
    %v1923 = vmax.f32 %v642, %v1641
    %v1924 = vmax.f32 %v643, %v1643
    %v1925 = vmax.f32 %v644, %v1645
    %v1926 = vmax.f32 %v645, %v1647
    %v1927 = vmax.f32 %v646, %v1649
    %v1928 = vmax.f32 %v647, %v1651
    %v1929 = vmax.f32 %v648, %v1653
    %v1930 = vmax.f32 %v649, %v1655
    %v1931 = vmax.f32 %v650, %v1657
    %v1932 = vmax.f32 %v651, %v1659
    %v1933 = vmax.f32 %v652, %v1661
    %v1934 = vmax.f32 %v653, %v1663
    %v1935 = vmax.f32 %v654, %v1665
    %v1936 = vmax.f32 %v655, %v1667
    %v1937 = vmax.f32 %v656, %v1669
    %v1938 = vmax.f32 %v657, %v1671
    %v1939 = vmax.f32 %v658, %v1673
    %v1940 = vmax.f32 %v659, %v1675
    %v1941 = vmax.f32 %v660, %v1677
    %v1942 = vmax.f32 %v661, %v1679
    %v1943 = vmax.f32 %v662, %v1681
    %v1944 = vmax.f32 %v663, %v1683
    %v1945 = vmax.f32 %v664, %v1685
    %v1946 = vmax.f32 %v665, %v1687
    %v1947 = vmax.f32 %v666, %v1689
    %v1948 = vmax.f32 %v667, %v1691
    %v1949 = vmax.f32 %v668, %v1693
    %v1950 = vmax.f32 %v1822, %v1374
    %v1951 = vmax.f32 %v1823, %v993
    %v1952 = vmax.f32 %v1824, %v1375
    %v1953 = vmax.f32 %v1825, %v997
    %v1954 = vmax.f32 %v1826, %v1376
    %v1955 = vmax.f32 %v1827, %v1001
    %v1956 = vmax.f32 %v1828, %v1377
    %v1957 = vmax.f32 %v1829, %v1005
    %v1958 = vmax.f32 %v1830, %v1378
    %v1959 = vmax.f32 %v1831, %v1009
    %v1960 = vmax.f32 %v1832, %v1379
    %v1961 = vmax.f32 %v1833, %v1013
    %v1962 = vmax.f32 %v1834, %v1380
    %v1963 = vmax.f32 %v1835, %v1017
    %v1964 = vmax.f32 %v1836, %v1381
    %v1965 = vmax.f32 %v1837, %v1021
    %v1966 = vmax.f32 %v1838, %v1382
    %v1967 = vmax.f32 %v1839, %v1025
    %v1968 = vmax.f32 %v1840, %v1383
    %v1969 = vmax.f32 %v1841, %v1029
    %v1970 = vmax.f32 %v1842, %v1384
    %v1971 = vmax.f32 %v1843, %v1033
    %v1972 = vmax.f32 %v1844, %v1385
    %v1973 = vmax.f32 %v1845, %v1037
    %v1974 = vmax.f32 %v1846, %v1386
    %v1975 = vmax.f32 %v1847, %v1041
    %v1976 = vmax.f32 %v1848, %v1387
    %v1977 = vmax.f32 %v1849, %v1045
    %v1978 = vmax.f32 %v1850, %v1388
    %v1979 = vmax.f32 %v1851, %v1049
    %v1980 = vmax.f32 %v1852, %v1389
    %v1981 = vmax.f32 %v1853, %v1053
    %v1982 = vmax.f32 %v1854, %v1390
    %v1983 = vmax.f32 %v1855, %v1057
    %v1984 = vmax.f32 %v1856, %v1391
    %v1985 = vmax.f32 %v1857, %v1061
    %v1986 = vmax.f32 %v1858, %v1392
    %v1987 = vmax.f32 %v1859, %v1065
    %v1988 = vmax.f32 %v1860, %v1393
    %v1989 = vmax.f32 %v1861, %v1069
    %v1990 = vmax.f32 %v1862, %v1394
    %v1991 = vmax.f32 %v1863, %v1073
    %v1992 = vmax.f32 %v1864, %v1395
    %v1993 = vmax.f32 %v1865, %v1077
    %v1994 = vmax.f32 %v1866, %v1396
    %v1995 = vmax.f32 %v1867, %v1081
    %v1996 = vmax.f32 %v1868, %v1397
    %v1997 = vmax.f32 %v1869, %v1085
    %v1998 = vmax.f32 %v1870, %v1398
    %v1999 = vmax.f32 %v1871, %v1089
    %v2000 = vmax.f32 %v1872, %v1399
    %v2001 = vmax.f32 %v1873, %v1093
    %v2002 = vmax.f32 %v1874, %v1400
    %v2003 = vmax.f32 %v1875, %v1097
    %v2004 = vmax.f32 %v1876, %v1401
    %v2005 = vmax.f32 %v1877, %v1101
    %v2006 = vmax.f32 %v1878, %v1402
    %v2007 = vmax.f32 %v1879, %v1105
    %v2008 = vmax.f32 %v1880, %v1403
    %v2009 = vmax.f32 %v1881, %v1109
    %v2010 = vmax.f32 %v1882, %v1404
    %v2011 = vmax.f32 %v1883, %v1113
    %v2012 = vmax.f32 %v1884, %v1405
    %v2013 = vmax.f32 %v1885, %v1117
    %v2014 = vmax.f32 %v1886, %v1406
    %v2015 = vmax.f32 %v1887, %v1121
    %v2016 = vmax.f32 %v1888, %v1407
    %v2017 = vmax.f32 %v1889, %v1125
    %v2018 = vmax.f32 %v1890, %v1408
    %v2019 = vmax.f32 %v1891, %v1129
    %v2020 = vmax.f32 %v1892, %v1409
    %v2021 = vmax.f32 %v1893, %v1133
    %v2022 = vmax.f32 %v1894, %v1410
    %v2023 = vmax.f32 %v1895, %v1137
    %v2024 = vmax.f32 %v1896, %v1411
    %v2025 = vmax.f32 %v1897, %v1141
    %v2026 = vmax.f32 %v1898, %v1412
    %v2027 = vmax.f32 %v1899, %v1145
    %v2028 = vmax.f32 %v1900, %v1413
    %v2029 = vmax.f32 %v1901, %v1149
    %v2030 = vmax.f32 %v1902, %v1414
    %v2031 = vmax.f32 %v1903, %v1153
    %v2032 = vmax.f32 %v1904, %v1415
    %v2033 = vmax.f32 %v1905, %v1157
    %v2034 = vmax.f32 %v1906, %v1416
    %v2035 = vmax.f32 %v1907, %v1161
    %v2036 = vmax.f32 %v1908, %v1417
    %v2037 = vmax.f32 %v1909, %v1165
    %v2038 = vmax.f32 %v1910, %v1418
    %v2039 = vmax.f32 %v1911, %v1169
    %v2040 = vmax.f32 %v1912, %v1419
    %v2041 = vmax.f32 %v1913, %v1173
    %v2042 = vmax.f32 %v1914, %v1420
    %v2043 = vmax.f32 %v1915, %v1177
    %v2044 = vmax.f32 %v1916, %v1421
    %v2045 = vmax.f32 %v1917, %v1181
    %v2046 = vmax.f32 %v1918, %v1422
    %v2047 = vmax.f32 %v1919, %v1185
    %v2048 = vmax.f32 %v1920, %v1423
    %v2049 = vmax.f32 %v1921, %v1189
    %v2050 = vmax.f32 %v1922, %v1424
    %v2051 = vmax.f32 %v1923, %v1193
    %v2052 = vmax.f32 %v1924, %v1425
    %v2053 = vmax.f32 %v1925, %v1197
    %v2054 = vmax.f32 %v1926, %v1426
    %v2055 = vmax.f32 %v1927, %v1201
    %v2056 = vmax.f32 %v1928, %v1427
    %v2057 = vmax.f32 %v1929, %v1205
    %v2058 = vmax.f32 %v1930, %v1428
    %v2059 = vmax.f32 %v1931, %v1209
    %v2060 = vmax.f32 %v1932, %v1429
    %v2061 = vmax.f32 %v1933, %v1213
    %v2062 = vmax.f32 %v1934, %v1430
    %v2063 = vmax.f32 %v1935, %v1217
    %v2064 = vmax.f32 %v1936, %v1431
    %v2065 = vmax.f32 %v1937, %v1221
    %v2066 = vmax.f32 %v1938, %v1432
    %v2067 = vmax.f32 %v1939, %v1225
    %v2068 = vmax.f32 %v1940, %v1433
    %v2069 = vmax.f32 %v1941, %v1229
    %v2070 = vmax.f32 %v1942, %v1434
    %v2071 = vmax.f32 %v1943, %v1233
    %v2072 = vmax.f32 %v1944, %v1435
    %v2073 = vmax.f32 %v1945, %v1237
    %v2074 = vmax.f32 %v1946, %v1436
    %v2075 = vmax.f32 %v1947, %v1241
    %v2076 = vmax.f32 %v1948, %v1437
    %v2077 = vmax.f32 %v1949, %v1245
    %v2078 = vmax.f32 %v1950, %v1952
    %v2079 = vmax.f32 %v1951, %v1953
    %v2080 = vmax.f32 %v1954, %v1956
    %v2081 = vmax.f32 %v1955, %v1957
    %v2082 = vmax.f32 %v1958, %v1960
    %v2083 = vmax.f32 %v1959, %v1961
    %v2084 = vmax.f32 %v1962, %v1964
    %v2085 = vmax.f32 %v1963, %v1965
    %v2086 = vmax.f32 %v1966, %v1968
    %v2087 = vmax.f32 %v1967, %v1969
    %v2088 = vmax.f32 %v1970, %v1972
    %v2089 = vmax.f32 %v1971, %v1973
    %v2090 = vmax.f32 %v1974, %v1976
    %v2091 = vmax.f32 %v1975, %v1977
    %v2092 = vmax.f32 %v1978, %v1980
    %v2093 = vmax.f32 %v1979, %v1981
    %v2094 = vmax.f32 %v1982, %v1984
    %v2095 = vmax.f32 %v1983, %v1985
    %v2096 = vmax.f32 %v1986, %v1988
    %v2097 = vmax.f32 %v1987, %v1989
    %v2098 = vmax.f32 %v1990, %v1992
    %v2099 = vmax.f32 %v1991, %v1993
    %v2100 = vmax.f32 %v1994, %v1996
    %v2101 = vmax.f32 %v1995, %v1997
    %v2102 = vmax.f32 %v1998, %v2000
    %v2103 = vmax.f32 %v1999, %v2001
    %v2104 = vmax.f32 %v2002, %v2004
    %v2105 = vmax.f32 %v2003, %v2005
    %v2106 = vmax.f32 %v2006, %v2008
    %v2107 = vmax.f32 %v2007, %v2009
    %v2108 = vmax.f32 %v2010, %v2012
    %v2109 = vmax.f32 %v2011, %v2013
    %v2110 = vmax.f32 %v2014, %v2016
    %v2111 = vmax.f32 %v2015, %v2017
    %v2112 = vmax.f32 %v2018, %v2020
    %v2113 = vmax.f32 %v2019, %v2021
    %v2114 = vmax.f32 %v2022, %v2024
    %v2115 = vmax.f32 %v2023, %v2025
    %v2116 = vmax.f32 %v2026, %v2028
    %v2117 = vmax.f32 %v2027, %v2029
    %v2118 = vmax.f32 %v2030, %v2032
    %v2119 = vmax.f32 %v2031, %v2033
    %v2120 = vmax.f32 %v2034, %v2036
    %v2121 = vmax.f32 %v2035, %v2037
    %v2122 = vmax.f32 %v2038, %v2040
    %v2123 = vmax.f32 %v2039, %v2041
    %v2124 = vmax.f32 %v2042, %v2044
    %v2125 = vmax.f32 %v2043, %v2045
    %v2126 = vmax.f32 %v2046, %v2048
    %v2127 = vmax.f32 %v2047, %v2049
    %v2128 = vmax.f32 %v2050, %v2052
    %v2129 = vmax.f32 %v2051, %v2053
    %v2130 = vmax.f32 %v2054, %v2056
    %v2131 = vmax.f32 %v2055, %v2057
    %v2132 = vmax.f32 %v2058, %v2060
    %v2133 = vmax.f32 %v2059, %v2061
    %v2134 = vmax.f32 %v2062, %v2064
    %v2135 = vmax.f32 %v2063, %v2065
    %v2136 = vmax.f32 %v2066, %v2068
    %v2137 = vmax.f32 %v2067, %v2069
    %v2138 = vmax.f32 %v2070, %v2072
    %v2139 = vmax.f32 %v2071, %v2073
    %v2140 = vmax.f32 %v2074, %v2076
    %v2141 = vmax.f32 %v2075, %v2077
    %v2142 = vmax.f32 %v2078, %v1950
    %v2143 = vmax.f32 %v2079, %v1951
    %v2144 = vmax.f32 %v2080, %v1952
    %v2145 = vmax.f32 %v2081, %v1953
    %v2146 = vmax.f32 %v2082, %v1956
    %v2147 = vmax.f32 %v2083, %v1957
    %v2148 = vmax.f32 %v2084, %v1960
    %v2149 = vmax.f32 %v2085, %v1961
    %v2150 = vmax.f32 %v2086, %v1964
    %v2151 = vmax.f32 %v2087, %v1965
    %v2152 = vmax.f32 %v2088, %v1968
    %v2153 = vmax.f32 %v2089, %v1969
    %v2154 = vmax.f32 %v2090, %v1972
    %v2155 = vmax.f32 %v2091, %v1973
    %v2156 = vmax.f32 %v2092, %v1976
    %v2157 = vmax.f32 %v2093, %v1977
    %v2158 = vmax.f32 %v2094, %v1980
    %v2159 = vmax.f32 %v2095, %v1981
    %v2160 = vmax.f32 %v2096, %v1984
    %v2161 = vmax.f32 %v2097, %v1985
    %v2162 = vmax.f32 %v2098, %v1988
    %v2163 = vmax.f32 %v2099, %v1989
    %v2164 = vmax.f32 %v2100, %v1992
    %v2165 = vmax.f32 %v2101, %v1993
    %v2166 = vmax.f32 %v2102, %v1996
    %v2167 = vmax.f32 %v2103, %v1997
    %v2168 = vmax.f32 %v2104, %v2000
    %v2169 = vmax.f32 %v2105, %v2001
    %v2170 = vmax.f32 %v2106, %v2004
    %v2171 = vmax.f32 %v2107, %v2005
    %v2172 = vmax.f32 %v2108, %v2008
    %v2173 = vmax.f32 %v2109, %v2009
    %v2174 = vmax.f32 %v2110, %v2014
    %v2175 = vmax.f32 %v2111, %v2015
    %v2176 = vmax.f32 %v2112, %v2016
    %v2177 = vmax.f32 %v2113, %v2017
    %v2178 = vmax.f32 %v2114, %v2020
    %v2179 = vmax.f32 %v2115, %v2021
    %v2180 = vmax.f32 %v2116, %v2024
    %v2181 = vmax.f32 %v2117, %v2025
    %v2182 = vmax.f32 %v2118, %v2028
    %v2183 = vmax.f32 %v2119, %v2029
    %v2184 = vmax.f32 %v2120, %v2032
    %v2185 = vmax.f32 %v2121, %v2033
    %v2186 = vmax.f32 %v2122, %v2036
    %v2187 = vmax.f32 %v2123, %v2037
    %v2188 = vmax.f32 %v2124, %v2040
    %v2189 = vmax.f32 %v2125, %v2041
    %v2190 = vmax.f32 %v2126, %v2044
    %v2191 = vmax.f32 %v2127, %v2045
    %v2192 = vmax.f32 %v2128, %v2048
    %v2193 = vmax.f32 %v2129, %v2049
    %v2194 = vmax.f32 %v2130, %v2052
    %v2195 = vmax.f32 %v2131, %v2053
    %v2196 = vmax.f32 %v2132, %v2056
    %v2197 = vmax.f32 %v2133, %v2057
    %v2198 = vmax.f32 %v2134, %v2060
    %v2199 = vmax.f32 %v2135, %v2061
    %v2200 = vmax.f32 %v2136, %v2064
    %v2201 = vmax.f32 %v2137, %v2065
    %v2202 = vmax.f32 %v2138, %v2068
    %v2203 = vmax.f32 %v2139, %v2069
    %v2204 = vmax.f32 %v2140, %v2072
    %v2205 = vmax.f32 %v2141, %v2073
    %vm2206 = vcmask 523264
    %2207 = vst.msk [vmem:[#allocation2] sm:$0xff] %vm2206, %v2142
    %2208 = vst.msk [vmem:[#allocation2 + $0x8] sm:$0xff] %vm2206, %v2143
    %2209 = vst.msk [vmem:[#allocation2 + $0x10] sm:$0xff] %vm2206, %v2144
    %2210 = vst.msk [vmem:[#allocation2 + $0x18] sm:$0xff] %vm2206, %v2145
    %2211 = vst.msk [vmem:[#allocation2 + $0x20] sm:$0xff] %vm2206, %v2146
    %2212 = vst.msk [vmem:[#allocation2 + $0x28] sm:$0xff] %vm2206, %v2147
    %2213 = vst.msk [vmem:[#allocation2 + $0x30] sm:$0xff] %vm2206, %v2148
    %2214 = vst.msk [vmem:[#allocation2 + $0x38] sm:$0xff] %vm2206, %v2149
    %2215 = vst.msk [vmem:[#allocation2 + $0x40] sm:$0xff] %vm2206, %v2150
    %2216 = vst.msk [vmem:[#allocation2 + $0x48] sm:$0xff] %vm2206, %v2151
    %2217 = vst.msk [vmem:[#allocation2 + $0x50] sm:$0xff] %vm2206, %v2152
    %2218 = vst.msk [vmem:[#allocation2 + $0x58] sm:$0xff] %vm2206, %v2153
    %2219 = vst.msk [vmem:[#allocation2 + $0x60] sm:$0xff] %vm2206, %v2154
    %2220 = vst.msk [vmem:[#allocation2 + $0x68] sm:$0xff] %vm2206, %v2155
    %2221 = vst.msk [vmem:[#allocation2 + $0x70] sm:$0xff] %vm2206, %v2156
    %2222 = vst.msk [vmem:[#allocation2 + $0x78] sm:$0xff] %vm2206, %v2157
    %2223 = vst.msk [vmem:[#allocation2 + $0x80] sm:$0xff] %vm2206, %v2158
    %2224 = vst.msk [vmem:[#allocation2 + $0x88] sm:$0xff] %vm2206, %v2159
    %2225 = vst.msk [vmem:[#allocation2 + $0x90] sm:$0xff] %vm2206, %v2160
    %2226 = vst.msk [vmem:[#allocation2 + $0x98] sm:$0xff] %vm2206, %v2161
    %2227 = vst.msk [vmem:[#allocation2 + $0xa0] sm:$0xff] %vm2206, %v2162
    %2228 = vst.msk [vmem:[#allocation2 + $0xa8] sm:$0xff] %vm2206, %v2163
    %2229 = vst.msk [vmem:[#allocation2 + $0xb0] sm:$0xff] %vm2206, %v2164
    %2230 = vst.msk [vmem:[#allocation2 + $0xb8] sm:$0xff] %vm2206, %v2165
    %2231 = vst.msk [vmem:[#allocation2 + $0xc0] sm:$0xff] %vm2206, %v2166
    %2232 = vst.msk [vmem:[#allocation2 + $0xc8] sm:$0xff] %vm2206, %v2167
    %2233 = vst.msk [vmem:[#allocation2 + $0xd0] sm:$0xff] %vm2206, %v2168
    %2234 = vst.msk [vmem:[#allocation2 + $0xd8] sm:$0xff] %vm2206, %v2169
    %2235 = vst.msk [vmem:[#allocation2 + $0xe0] sm:$0xff] %vm2206, %v2170
    %2236 = vst.msk [vmem:[#allocation2 + $0xe8] sm:$0xff] %vm2206, %v2171
    %2237 = vst.msk [vmem:[#allocation2 + $0xf0] sm:$0xff] %vm2206, %v2172
    %2238 = vst.msk [vmem:[#allocation2 + $0xf8] sm:$0xff] %vm2206, %v2173
    %2239 = vst.msk [vmem:[#allocation2 + $0x100] sm:$0xff] %vm2206, %v2174
    %2240 = vst.msk [vmem:[#allocation2 + $0x108] sm:$0xff] %vm2206, %v2175
    %2241 = vst.msk [vmem:[#allocation2 + $0x110] sm:$0xff] %vm2206, %v2176
    %2242 = vst.msk [vmem:[#allocation2 + $0x118] sm:$0xff] %vm2206, %v2177
    %2243 = vst.msk [vmem:[#allocation2 + $0x120] sm:$0xff] %vm2206, %v2178
    %2244 = vst.msk [vmem:[#allocation2 + $0x128] sm:$0xff] %vm2206, %v2179
    %2245 = vst.msk [vmem:[#allocation2 + $0x130] sm:$0xff] %vm2206, %v2180
    %2246 = vst.msk [vmem:[#allocation2 + $0x138] sm:$0xff] %vm2206, %v2181
    %2247 = vst.msk [vmem:[#allocation2 + $0x140] sm:$0xff] %vm2206, %v2182
    %2248 = vst.msk [vmem:[#allocation2 + $0x148] sm:$0xff] %vm2206, %v2183
    %2249 = vst.msk [vmem:[#allocation2 + $0x150] sm:$0xff] %vm2206, %v2184
    %2250 = vst.msk [vmem:[#allocation2 + $0x158] sm:$0xff] %vm2206, %v2185
    %2251 = vst.msk [vmem:[#allocation2 + $0x160] sm:$0xff] %vm2206, %v2186
    %2252 = vst.msk [vmem:[#allocation2 + $0x168] sm:$0xff] %vm2206, %v2187
    %2253 = vst.msk [vmem:[#allocation2 + $0x170] sm:$0xff] %vm2206, %v2188
    %2254 = vst.msk [vmem:[#allocation2 + $0x178] sm:$0xff] %vm2206, %v2189
    %2255 = vst.msk [vmem:[#allocation2 + $0x180] sm:$0xff] %vm2206, %v2190
    %2256 = vst.msk [vmem:[#allocation2 + $0x188] sm:$0xff] %vm2206, %v2191
    %2257 = vst.msk [vmem:[#allocation2 + $0x190] sm:$0xff] %vm2206, %v2192
    %2258 = vst.msk [vmem:[#allocation2 + $0x198] sm:$0xff] %vm2206, %v2193
    %2259 = vst.msk [vmem:[#allocation2 + $0x1a0] sm:$0xff] %vm2206, %v2194
    %2260 = vst.msk [vmem:[#allocation2 + $0x1a8] sm:$0xff] %vm2206, %v2195
    %2261 = vst.msk [vmem:[#allocation2 + $0x1b0] sm:$0xff] %vm2206, %v2196
    %2262 = vst.msk [vmem:[#allocation2 + $0x1b8] sm:$0xff] %vm2206, %v2197
    %2263 = vst.msk [vmem:[#allocation2 + $0x1c0] sm:$0xff] %vm2206, %v2198
    %2264 = vst.msk [vmem:[#allocation2 + $0x1c8] sm:$0xff] %vm2206, %v2199
    %2265 = vst.msk [vmem:[#allocation2 + $0x1d0] sm:$0xff] %vm2206, %v2200
    %2266 = vst.msk [vmem:[#allocation2 + $0x1d8] sm:$0xff] %vm2206, %v2201
    %2267 = vst.msk [vmem:[#allocation2 + $0x1e0] sm:$0xff] %vm2206, %v2202
    %2268 = vst.msk [vmem:[#allocation2 + $0x1e8] sm:$0xff] %vm2206, %v2203
    %2269 = vst.msk [vmem:[#allocation2 + $0x1f0] sm:$0xff] %vm2206, %v2204
    %2270 = vst.msk [vmem:[#allocation2 + $0x1f8] sm:$0xff] %vm2206, %v2205
    // Predicated region
    $region14: #{resnet_client_forward.3} parent=1 // pred_check
      _
    $region15: #{resnet_client_forward.3} parent=1 // pred_check_branch
      %2272 = sbr.rel (0) target = $region17
    $region16: #{resnet_client_forward.3} parent=1 // pred_region
      %s2274 = ssub.s32 8192, 8192
      %2275 = vsyncadd [#allocation3], %s2274
      %s2276 = sshll.u32 [#allocation2], 4
      %s2277 = int_to_ptr.vmem [resolvable:$true] %s2276
      %2282 = dma.vmem_to_hbm [thread:$0]  %s2277, 8192, %s3, [#allocation3], 128, 128, 8
    $region17: #{resnet_client_forward.3} parent=1 // pred_fallthru
      _
    // Predicated region
    $region18: #{resnet_client_forward.3} parent=1 // pred_check
      _
    $region19: #{resnet_client_forward.3} parent=1 // pred_check_branch
      %2284 = sbr.rel (0) target = $region21
    $region20: #{resnet_client_forward.3} parent=1 // pred_region
      %2285 = dma.done [#allocation3], 8192
    $region21: #{resnet_client_forward.3} parent=1 // pred_fallthru
      _
    %2286 = vsyncpa [#allocation3], 1

// kernel: resnet_client_forward.2
$region0: #{resnet_client_forward.2}
  #allocation0 [shape = 'u32[]', space=smem, size = 0x4, offset = 0x4, fixed_abs, tag = 'smem constant byte address 0x4 - core index']
  #allocation1 [shape = 'u32[144,128]{1,0:T(1,128)}', space=vmem, size = 0x12000, scoped, tag = 'internal scratch']
  %s0 = inlined_call_operand.vmem [shape: bf16[2048,147], index: 0, kind: input, shape index: {}]
  %s1 = inlined_call_operand.vmem [shape: bf16[147,64], index: 1, kind: input, shape index: {}]
  %s2 = inlined_call_operand.vmem [shape: bf16[2048,64], index: 2, kind: output, shape index: {0}]
  %s3 = inlined_call_operand.vmem [shape: f32[2,1,64], index: 3, kind: output, shape index: {1}]
  %s4 = inlined_call_operand.vmem [shape: f32[2,1,64], index: 4, kind: output, shape index: {2}]
  %5 = xla_tuple %s2, %s3, %s4
  %s6 = sld [smem:[#allocation0]]
  $region57: #{resnet_client_forward.2} parent=0
    _
  %s8 = ssub.s32 1, %s6
  %s9 = scalar_select 0, %s8, %s6
  loop: start=0, step=1, limit=4
  $region2: #{resnet_client_forward.2} parent=0 // loop_pre_header
    _
  $region3: #{resnet_client_forward.2} parent=0 // loop_header
    %s11 = sphi 0, %s15
    %p12 = scmp.ge.s32.totalorder %s11, 4
    %s21 = sphi 0, %s23
    %s24 = sphi 0, %s21
    %s25 = sphi 0, %s24
    %s41 = sphi 0, %s25
    %s45 = sphi 0, %s45
    %s47 = sphi 0, %s45
    %s48 = sphi 0, %s47
    %s62 = sphi 0, %s48
    %s68 = sphi 0, %s70
    %s71 = sphi 0, %s68
    %s72 = sphi 0, %s71
    %s88 = sphi 0, %s72
    %s94 = sphi 0, %s96
    %s97 = sphi 0, %s94
    %s98 = sphi 0, %s97
    %s114 = sphi 0, %s98
    %s120 = sphi 0, %s122
    %s123 = sphi 0, %s120
    %s124 = sphi 0, %s123
    %s140 = sphi 0, %s124
  $region4: #{resnet_client_forward.2} parent=0 // loop_header_branch
    %14 = sbr.rel (%p12) target = $region8
  $region5: #{resnet_client_forward.2} parent=0 // loop_body
    %s16 = ssub.s32 %s11, 1
    %s17 = ssub.s32 %s11, 2
    %s18 = sadd.s32 %s11, 1
    %s19 = ssub.s32 %s11, %s18
    %p20 = scmp.eq.s32.totalorder %s19, 0
    %s22 = sadd.s32 %s21, 1
    %s23 = scalar_select %p20, %s21, %s22
    %p26 = pneg %p20
    %p27 = scmp.eq.s32.totalorder %s11, 1
    %p28 = por %p26, %p27
    %p29 = scmp.ne.s32.totalorder %s21, %s24
    %p30 = scmp.eq.s32.totalorder %s11, 0
    %p31 = por %p29, %p30
    %p32 = scmp.ne.s32.totalorder %s21, %s24
    %p33 = scmp.eq.s32.totalorder %s16, 1
    %p34 = por %p32, %p33
    %p35 = scmp.ne.s32.totalorder %s24, %s25
    %p36 = scmp.eq.s32.totalorder %s16, 0
    %p37 = por %p35, %p36
    %p38 = scmp.ne.s32.totalorder %s24, %s25
    %p39 = scmp.eq.s32.totalorder %s17, 1
    %p40 = por %p38, %p39
    %p42 = scmp.ne.s32.totalorder %s25, %s41
    %p43 = scmp.eq.s32.totalorder %s17, 0
    %p44 = por %p42, %p43
    %s46 = sadd.s32 %s45, 1
    %p49 = scmp.eq.s32.totalorder %s11, 1
    %p50 = scmp.ne.s32.totalorder %s45, %s47
    %p51 = scmp.eq.s32.totalorder %s11, 0
    %p52 = por %p50, %p51
    %p53 = scmp.ne.s32.totalorder %s45, %s47
    %p54 = scmp.eq.s32.totalorder %s16, 1
    %p55 = por %p53, %p54
    %p56 = scmp.ne.s32.totalorder %s47, %s48
    %p57 = scmp.eq.s32.totalorder %s16, 0
    %p58 = por %p56, %p57
    %p59 = scmp.ne.s32.totalorder %s47, %s48
    %p60 = scmp.eq.s32.totalorder %s17, 1
    %p61 = por %p59, %p60
    %p63 = scmp.ne.s32.totalorder %s48, %s62
    %p64 = scmp.eq.s32.totalorder %s17, 0
    %p65 = por %p63, %p64
    %s66 = ssub.s32 %s11, %s18
    %p67 = scmp.eq.s32.totalorder %s66, 0
    %s69 = sadd.s32 %s68, 1
    %s70 = scalar_select %p67, %s68, %s69
    %p73 = pneg %p67
    %p74 = scmp.eq.s32.totalorder %s11, 1
    %p75 = por %p73, %p74
    %p76 = scmp.ne.s32.totalorder %s68, %s71
    %p77 = scmp.eq.s32.totalorder %s11, 0
    %p78 = por %p76, %p77
    %p79 = scmp.ne.s32.totalorder %s68, %s71
    %p80 = scmp.eq.s32.totalorder %s16, 1
    %p81 = por %p79, %p80
    %p82 = scmp.ne.s32.totalorder %s71, %s72
    %p83 = scmp.eq.s32.totalorder %s16, 0
    %p84 = por %p82, %p83
    %p85 = scmp.ne.s32.totalorder %s71, %s72
    %p86 = scmp.eq.s32.totalorder %s17, 1
    %p87 = por %p85, %p86
    %p89 = scmp.ne.s32.totalorder %s72, %s88
    %p90 = scmp.eq.s32.totalorder %s17, 0
    %p91 = por %p89, %p90
    %s92 = ssub.s32 %s11, %s18
    %p93 = scmp.eq.s32.totalorder %s92, 0
    %s95 = sadd.s32 %s94, 1
    %s96 = scalar_select %p93, %s94, %s95
    %p99 = pneg %p93
    %p100 = scmp.eq.s32.totalorder %s11, 1
    %p101 = por %p99, %p100
    %p102 = scmp.ne.s32.totalorder %s94, %s97
    %p103 = scmp.eq.s32.totalorder %s11, 0
    %p104 = por %p102, %p103
    %p105 = scmp.ne.s32.totalorder %s94, %s97
    %p106 = scmp.eq.s32.totalorder %s16, 1
    %p107 = por %p105, %p106
    %p108 = scmp.ne.s32.totalorder %s97, %s98
    %p109 = scmp.eq.s32.totalorder %s16, 0
    %p110 = por %p108, %p109
    %p111 = scmp.ne.s32.totalorder %s97, %s98
    %p112 = scmp.eq.s32.totalorder %s17, 1
    %p113 = por %p111, %p112
    %p115 = scmp.ne.s32.totalorder %s98, %s114
    %p116 = scmp.eq.s32.totalorder %s17, 0
    %p117 = por %p115, %p116
    %s118 = ssub.s32 %s11, %s18
    %p119 = scmp.eq.s32.totalorder %s118, 0
    %s121 = sadd.s32 %s120, 1
    %s122 = scalar_select %p119, %s120, %s121
    %p125 = pneg %p119
    %p126 = scmp.eq.s32.totalorder %s11, 1
    %p127 = por %p125, %p126
    %p128 = scmp.ne.s32.totalorder %s120, %s123
    %p129 = scmp.eq.s32.totalorder %s11, 0
    %p130 = por %p128, %p129
    %p131 = scmp.ne.s32.totalorder %s120, %s123
    %p132 = scmp.eq.s32.totalorder %s16, 1
    %p133 = por %p131, %p132
    %p134 = scmp.ne.s32.totalorder %s123, %s124
    %p135 = scmp.eq.s32.totalorder %s16, 0
    %p136 = por %p134, %p135
    %p137 = scmp.ne.s32.totalorder %s123, %s124
    %p138 = scmp.eq.s32.totalorder %s17, 1
    %p139 = por %p137, %p138
    %p141 = scmp.ne.s32.totalorder %s124, %s140
    %p142 = scmp.eq.s32.totalorder %s17, 0
    %p143 = por %p141, %p142
    %p144 = scmp.le.s32.totalorder 1, %s11
    %p145 = scmp.lt.s32.totalorder %s11, 3
    %p146 = pnand %p144, %p145
    %p147 = pneg %p146
    // Predicated region
    $region9: #{resnet_client_forward.2} parent=5 // pred_check
      _
    $region10: #{resnet_client_forward.2} parent=5 // pred_check_branch
      %149 = sbr.rel (%p146) target = $region12
    $region11: #{resnet_client_forward.2} parent=5 // pred_region
      %s150 = ssub.s32 %s11, 1
      // Predicated region
      $region13: #{resnet_client_forward.2} parent=11 // pred_check
        %p151 = pneg %p58
      $region14: #{resnet_client_forward.2} parent=11 // pred_check_branch
        %153 = sbr.rel (%p151) target = $region16
      $region15: #{resnet_client_forward.2} parent=11 // pred_region
        _
      $region16: #{resnet_client_forward.2} parent=11 // pred_fallthru
        _
    $region12: #{resnet_client_forward.2} parent=5 // pred_fallthru
      _
    %p154 = scmp.lt.s32.totalorder %s11, 2
    // Predicated region
    $region17: #{resnet_client_forward.2} parent=5 // pred_check
      %p155 = pneg %p154
    $region18: #{resnet_client_forward.2} parent=5 // pred_check_branch
      %157 = sbr.rel (%p155) target = $region20
    $region19: #{resnet_client_forward.2} parent=5 // pred_region
      // Predicated region
      $region21: #{resnet_client_forward.2} parent=19 // pred_check
        %p158 = pneg %p31
      $region22: #{resnet_client_forward.2} parent=19 // pred_check_branch
        %160 = sbr.rel (%p158) target = $region24
      $region23: #{resnet_client_forward.2} parent=19 // pred_region
        %s161 = smul.u32 128, %s11
        %p162 = scmp.lt.s32.totalorder %s161, 255
        %s163 = scalar_select %p162, %s161, 255
        %s164 = smul.addr %s163, 2
        %s165 = smul.addr %s164, 4
        %s166 = scalar_lea.vmem %s0, %s165
        %s167 = smul.u32 128, %s11
      $region24: #{resnet_client_forward.2} parent=19 // pred_fallthru
        _
    $region20: #{resnet_client_forward.2} parent=5 // pred_fallthru
      _
    %p168 = scmp.le.s32.totalorder 1, %s11
    %p169 = scmp.lt.s32.totalorder %s11, 3
    %p170 = pnand %p168, %p169
    %p171 = pneg %p170
    // Predicated region
    $region25: #{resnet_client_forward.2} parent=5 // pred_check
      _
    $region26: #{resnet_client_forward.2} parent=5 // pred_check_branch
      %173 = sbr.rel (%p170) target = $region28
    $region27: #{resnet_client_forward.2} parent=5 // pred_region
      %s174 = ssub.s32 %s11, 1
      %s175 = smul.u32 128, %s16
      %p176 = scmp.lt.s32.totalorder %s175, 255
      %s177 = scalar_select %p176, %s175, 255
      %s178 = smul.addr %s177, 2
      %s179 = smul.addr %s178, 4
      %s180 = scalar_lea.vmem %s0, %s179
      %p181 = pneg %p37
      %p182 = pneg %p34
      %p183 = pneg %p58
      %p184 = pneg %p55
      %p185 = pneg %p84
      %p186 = pneg %p81
      %s187 = smul.u32 128, %s16
      %p188 = scmp.lt.s32.totalorder %s187, 255
      %s189 = scalar_select %p188, %s187, 255
      %s190 = smul.addr %s189, 4
      %s191 = scalar_lea.vmem %s2, %s190
      %p192 = pneg %p110
      %p193 = pneg %p107
      %p194 = scmp.lt.s32.totalorder %s16, 1
      %s195 = scalar_select %p194, %s16, 1
      %s196 = scalar_lea.vmem %s3, %s195
      %p197 = pneg %p136
      %p198 = pneg %p133
      %p199 = scmp.lt.s32.totalorder %s16, 1
      %s200 = scalar_select %p199, %s16, 1
      %s201 = scalar_lea.vmem %s4, %s200
      %s202 = smul.u32 128, %s16
      %p203 = scmp.lt.s32.totalorder %s202, 255
      %s204 = scalar_select %p203, %s202, 255
      %s205 = smul.addr %s204, 2
      %s206 = smul.addr %s205, 4
      %s207 = scalar_lea.vmem %s0, %s206
      %s208 = smul.u32 128, %s16
      %s209 = smul.u32 128, %s16
      %p210 = scmp.lt.s32.totalorder %s209, 255
      %s211 = scalar_select %p210, %s209, 255
      %s212 = smul.addr %s211, 4
      %s213 = scalar_lea.vmem %s2, %s212
      %s214 = smul.u32 128, %s16
      %p215 = scmp.lt.s32.totalorder %s16, 1
      %s216 = scalar_select %p215, %s16, 1
      %s217 = scalar_lea.vmem %s3, %s216
      %p218 = scmp.lt.s32.totalorder %s16, 1
      %s219 = scalar_select %p218, %s16, 1
      %s220 = scalar_lea.vmem %s4, %s219
      %v222 = vld [vmem:[%s207] sm:$0xff]
      %v223 = vld [vmem:[%s207 + $0x8] sm:$0xff]
      %v224 = vld [vmem:[%s207 + $0x10] sm:$0xff]
      %v225 = vld [vmem:[%s207 + $0x18] sm:$0xff]
      %v226 = vld [vmem:[%s207 + $0x20] sm:$0xff]
      %v227 = vld [vmem:[%s207 + $0x28] sm:$0xff]
      %v228 = vld [vmem:[%s207 + $0x30] sm:$0xff]
      %v229 = vld [vmem:[%s207 + $0x38] sm:$0xff]
      %v230 = vld [vmem:[%s207 + $0x40] sm:$0xff]
      %v231 = vld [vmem:[%s207 + $0x48] sm:$0xff]
      %v232 = vld [vmem:[%s207 + $0x50] sm:$0xff]
      %v233 = vld [vmem:[%s207 + $0x58] sm:$0xff]
      %v234 = vld [vmem:[%s207 + $0x60] sm:$0xff]
      %v235 = vld [vmem:[%s207 + $0x68] sm:$0xff]
      %v236 = vld [vmem:[%s207 + $0x70] sm:$0xff]
      %v237 = vld [vmem:[%s207 + $0x78] sm:$0xff]
      %v238 = vld [vmem:[%s207 + $0x80] sm:$0xff]
      %v239 = vld [vmem:[%s207 + $0x88] sm:$0xff]
      %v240 = vld [vmem:[%s207 + $0x90] sm:$0xff]
      %v241 = vld [vmem:[%s207 + $0x98] sm:$0xff]
      %v242 = vld [vmem:[%s207 + $0xa0] sm:$0xff]
      %v243 = vld [vmem:[%s207 + $0xa8] sm:$0xff]
      %v244 = vld [vmem:[%s207 + $0xb0] sm:$0xff]
      %v245 = vld [vmem:[%s207 + $0xb8] sm:$0xff]
      %v246 = vld [vmem:[%s207 + $0xc0] sm:$0xff]
      %v247 = vld [vmem:[%s207 + $0xc8] sm:$0xff]
      %v248 = vld [vmem:[%s207 + $0xd0] sm:$0xff]
      %v249 = vld [vmem:[%s207 + $0xd8] sm:$0xff]
      %v250 = vld [vmem:[%s207 + $0xe0] sm:$0xff]
      %v251 = vld [vmem:[%s207 + $0xe8] sm:$0xff]
      %v252 = vld [vmem:[%s207 + $0xf0] sm:$0xff]
      %v253 = vld [vmem:[%s207 + $0xf8] sm:$0xff]
      %v254 = vld [vmem:[%s207 + $0x100] sm:$0xff]
      %v255 = vld [vmem:[%s207 + $0x108] sm:$0xff]
      %v256 = vld [vmem:[%s207 + $0x110] sm:$0xff]
      %v257 = vld [vmem:[%s207 + $0x118] sm:$0xff]
      %v258 = vld [vmem:[%s207 + $0x120] sm:$0xff]
      %v259 = vld [vmem:[%s207 + $0x128] sm:$0xff]
      %v260 = vld [vmem:[%s207 + $0x130] sm:$0xff]
      %v261 = vld [vmem:[%s207 + $0x138] sm:$0xff]
      %v262 = vld [vmem:[%s207 + $0x140] sm:$0xff]
      %v263 = vld [vmem:[%s207 + $0x148] sm:$0xff]
      %v264 = vld [vmem:[%s207 + $0x150] sm:$0xff]
      %v265 = vld [vmem:[%s207 + $0x158] sm:$0xff]
      %v266 = vld [vmem:[%s207 + $0x160] sm:$0xff]
      %v267 = vld [vmem:[%s207 + $0x168] sm:$0xff]
      %v268 = vld [vmem:[%s207 + $0x170] sm:$0xff]
      %v269 = vld [vmem:[%s207 + $0x178] sm:$0xff]
      %v270 = vld [vmem:[%s207 + $0x180] sm:$0xff]
      %v271 = vld [vmem:[%s207 + $0x188] sm:$0xff]
      %v272 = vld [vmem:[%s207 + $0x190] sm:$0xff]
      %v273 = vld [vmem:[%s207 + $0x198] sm:$0xff]
      %v274 = vld [vmem:[%s207 + $0x1a0] sm:$0xff]
      %v275 = vld [vmem:[%s207 + $0x1a8] sm:$0xff]
      %v276 = vld [vmem:[%s207 + $0x1b0] sm:$0xff]
      %v277 = vld [vmem:[%s207 + $0x1b8] sm:$0xff]
      %v278 = vld [vmem:[%s207 + $0x1c0] sm:$0xff]
      %v279 = vld [vmem:[%s207 + $0x1c8] sm:$0xff]
      %v280 = vld [vmem:[%s207 + $0x1d0] sm:$0xff]
      %v281 = vld [vmem:[%s207 + $0x1d8] sm:$0xff]
      %v282 = vld [vmem:[%s207 + $0x1e0] sm:$0xff]
      %v283 = vld [vmem:[%s207 + $0x1e8] sm:$0xff]
      %v284 = vld [vmem:[%s207 + $0x1f0] sm:$0xff]
      %v285 = vld [vmem:[%s207 + $0x1f8] sm:$0xff]
      %v286 = vld [vmem:[%s207 + $0x200] sm:$0xff]
      %v287 = vld [vmem:[%s207 + $0x208] sm:$0xff]
      %v288 = vld [vmem:[%s207 + $0x210] sm:$0xff]
      %v289 = vld [vmem:[%s207 + $0x218] sm:$0xff]
      %v290 = vld [vmem:[%s207 + $0x220] sm:$0xff]
      %v291 = vld [vmem:[%s207 + $0x228] sm:$0xff]
      %v292 = vld [vmem:[%s207 + $0x230] sm:$0xff]
      %v293 = vld [vmem:[%s207 + $0x238] sm:$0xff]
      %v294 = vld [vmem:[%s207 + $0x240] sm:$0xff]
      %v295 = vld [vmem:[%s207 + $0x248] sm:$0xff]
      %v296 = vld [vmem:[%s207 + $0x250] sm:$0xff]
      %v297 = vld [vmem:[%s207 + $0x258] sm:$0xff]
      %v298 = vld [vmem:[%s207 + $0x260] sm:$0xff]
      %v299 = vld [vmem:[%s207 + $0x268] sm:$0xff]
      %v300 = vld [vmem:[%s207 + $0x270] sm:$0xff]
      %v301 = vld [vmem:[%s207 + $0x278] sm:$0xff]
      %v302 = vld [vmem:[%s207 + $0x280] sm:$0xff]
      %v303 = vld [vmem:[%s207 + $0x288] sm:$0xff]
      %v304 = vld [vmem:[%s207 + $0x290] sm:$0xff]
      %v305 = vld [vmem:[%s207 + $0x298] sm:$0xff]
      %v306 = vld [vmem:[%s207 + $0x2a0] sm:$0xff]
      %v307 = vld [vmem:[%s207 + $0x2a8] sm:$0xff]
      %v308 = vld [vmem:[%s207 + $0x2b0] sm:$0xff]
      %v309 = vld [vmem:[%s207 + $0x2b8] sm:$0xff]
      %v310 = vld [vmem:[%s207 + $0x2c0] sm:$0xff]
      %v311 = vld [vmem:[%s207 + $0x2c8] sm:$0xff]
      %v312 = vld [vmem:[%s207 + $0x2d0] sm:$0xff]
      %v313 = vld [vmem:[%s207 + $0x2d8] sm:$0xff]
      %v314 = vld [vmem:[%s207 + $0x2e0] sm:$0xff]
      %v315 = vld [vmem:[%s207 + $0x2e8] sm:$0xff]
      %v316 = vld [vmem:[%s207 + $0x2f0] sm:$0xff]
      %v317 = vld [vmem:[%s207 + $0x2f8] sm:$0xff]
      %v318 = vld [vmem:[%s207 + $0x300] sm:$0xff]
      %v319 = vld [vmem:[%s207 + $0x308] sm:$0xff]
      %v320 = vld [vmem:[%s207 + $0x310] sm:$0xff]
      %v321 = vld [vmem:[%s207 + $0x318] sm:$0xff]
      %v322 = vld [vmem:[%s207 + $0x320] sm:$0xff]
      %v323 = vld [vmem:[%s207 + $0x328] sm:$0xff]
      %v324 = vld [vmem:[%s207 + $0x330] sm:$0xff]
      %v325 = vld [vmem:[%s207 + $0x338] sm:$0xff]
      %v326 = vld [vmem:[%s207 + $0x340] sm:$0xff]
      %v327 = vld [vmem:[%s207 + $0x348] sm:$0xff]
      %v328 = vld [vmem:[%s207 + $0x350] sm:$0xff]
      %v329 = vld [vmem:[%s207 + $0x358] sm:$0xff]
      %v330 = vld [vmem:[%s207 + $0x360] sm:$0xff]
      %v331 = vld [vmem:[%s207 + $0x368] sm:$0xff]
      %v332 = vld [vmem:[%s207 + $0x370] sm:$0xff]
      %v333 = vld [vmem:[%s207 + $0x378] sm:$0xff]
      %v334 = vld [vmem:[%s207 + $0x380] sm:$0xff]
      %v335 = vld [vmem:[%s207 + $0x388] sm:$0xff]
      %v336 = vld [vmem:[%s207 + $0x390] sm:$0xff]
      %v337 = vld [vmem:[%s207 + $0x398] sm:$0xff]
      %v338 = vld [vmem:[%s207 + $0x3a0] sm:$0xff]
      %v339 = vld [vmem:[%s207 + $0x3a8] sm:$0xff]
      %v340 = vld [vmem:[%s207 + $0x3b0] sm:$0xff]
      %v341 = vld [vmem:[%s207 + $0x3b8] sm:$0xff]
      %v342 = vld [vmem:[%s207 + $0x3c0] sm:$0xff]
      %v343 = vld [vmem:[%s207 + $0x3c8] sm:$0xff]
      %v344 = vld [vmem:[%s207 + $0x3d0] sm:$0xff]
      %v345 = vld [vmem:[%s207 + $0x3d8] sm:$0xff]
      %v346 = vld [vmem:[%s207 + $0x3e0] sm:$0xff]
      %v347 = vld [vmem:[%s207 + $0x3e8] sm:$0xff]
      %v348 = vld [vmem:[%s207 + $0x3f0] sm:$0xff]
      %v349 = vld [vmem:[%s207 + $0x3f8] sm:$0xff]
      %v350 = vld [vmem:[%s1] sm:$0xf]
      %v351 = vld [vmem:[%s1 + $0x4] sm:$0xf]
      %v352 = vld [vmem:[%s1 + $0x8] sm:$0xf]
      %v353 = vld [vmem:[%s1 + $0xc] sm:$0xf]
      %v354 = vld [vmem:[%s1 + $0x10] sm:$0xf]
      %v355 = vld [vmem:[%s1 + $0x14] sm:$0xf]
      %v356 = vld [vmem:[%s1 + $0x18] sm:$0xf]
      %v357 = vld [vmem:[%s1 + $0x1c] sm:$0xf]
      %v358 = vld [vmem:[%s1 + $0x20] sm:$0xf]
      %v359 = vld [vmem:[%s1 + $0x24] sm:$0xf]
      %v360 = vld [vmem:[%s1 + $0x28] sm:$0xf]
      %v361 = vld [vmem:[%s1 + $0x2c] sm:$0xf]
      %v362 = vld [vmem:[%s1 + $0x30] sm:$0xf]
      %v363 = vld [vmem:[%s1 + $0x34] sm:$0xf]
      %v364 = vld [vmem:[%s1 + $0x38] sm:$0xf]
      %v365 = vld [vmem:[%s1 + $0x3c] sm:$0xf]
      %v366 = vld [vmem:[%s1 + $0x40] sm:$0xf]
      %v367 = vld [vmem:[%s1 + $0x44] sm:$0xf]
      %v368 = vld [vmem:[%s1 + $0x48] sm:$0x3]
      %v497 = vunpack.c.l.b16 %v222
      %v498 = vunpack.c.h.b16 %v222
      %v499 = vunpack.c.l.b16 %v223
      %v500 = vunpack.c.h.b16 %v223
      %v501 = vunpack.c.l.b16 %v224
      %v502 = vunpack.c.h.b16 %v224
      %v503 = vunpack.c.l.b16 %v225
      %v504 = vunpack.c.h.b16 %v225
      %v505 = vunpack.c.l.b16 %v226
      %v506 = vunpack.c.h.b16 %v226
      %v507 = vunpack.c.l.b16 %v227
      %v508 = vunpack.c.h.b16 %v227
      %v509 = vunpack.c.l.b16 %v228
      %v510 = vunpack.c.h.b16 %v228
      %v511 = vunpack.c.l.b16 %v229
      %v512 = vunpack.c.h.b16 %v229
      %v513 = vunpack.c.l.b16 %v230
      %v514 = vunpack.c.h.b16 %v230
      %v515 = vunpack.c.l.b16 %v231
      %v516 = vunpack.c.h.b16 %v231
      %v517 = vunpack.c.l.b16 %v232
      %v518 = vunpack.c.h.b16 %v232
      %v519 = vunpack.c.l.b16 %v233
      %v520 = vunpack.c.h.b16 %v233
      %v521 = vunpack.c.l.b16 %v234
      %v522 = vunpack.c.h.b16 %v234
      %v523 = vunpack.c.l.b16 %v235
      %v524 = vunpack.c.h.b16 %v235
      %v525 = vunpack.c.l.b16 %v236
      %v526 = vunpack.c.h.b16 %v236
      %v527 = vunpack.c.l.b16 %v237
      %v528 = vunpack.c.h.b16 %v237
      %v529 = vunpack.c.l.b16 %v238
      %v530 = vunpack.c.h.b16 %v238
      %v531 = vunpack.c.l.b16 %v239
      %v532 = vunpack.c.h.b16 %v239
      %v533 = vunpack.c.l.b16 %v240
      %v534 = vunpack.c.h.b16 %v240
      %v535 = vunpack.c.l.b16 %v241
      %v536 = vunpack.c.h.b16 %v241
      %v537 = vunpack.c.l.b16 %v242
      %v538 = vunpack.c.h.b16 %v242
      %v539 = vunpack.c.l.b16 %v243
      %v540 = vunpack.c.h.b16 %v243
      %v541 = vunpack.c.l.b16 %v244
      %v542 = vunpack.c.h.b16 %v244
      %v543 = vunpack.c.l.b16 %v245
      %v544 = vunpack.c.h.b16 %v245
      %v545 = vunpack.c.l.b16 %v246
      %v546 = vunpack.c.h.b16 %v246
      %v547 = vunpack.c.l.b16 %v247
      %v548 = vunpack.c.h.b16 %v247
      %v549 = vunpack.c.l.b16 %v248
      %v550 = vunpack.c.h.b16 %v248
      %v551 = vunpack.c.l.b16 %v249
      %v552 = vunpack.c.h.b16 %v249
      %v553 = vunpack.c.l.b16 %v250
      %v554 = vunpack.c.h.b16 %v250
      %v555 = vunpack.c.l.b16 %v251
      %v556 = vunpack.c.h.b16 %v251
      %v557 = vunpack.c.l.b16 %v252
      %v558 = vunpack.c.h.b16 %v252
      %v559 = vunpack.c.l.b16 %v253
      %v560 = vunpack.c.h.b16 %v253
      %v561 = vunpack.c.l.b16 %v254
      %v562 = vunpack.c.h.b16 %v254
      %v563 = vunpack.c.l.b16 %v255
      %v564 = vunpack.c.h.b16 %v255
      %v565 = vunpack.c.l.b16 %v256
      %v566 = vunpack.c.h.b16 %v256
      %v567 = vunpack.c.l.b16 %v257
      %v568 = vunpack.c.h.b16 %v257
      %v569 = vunpack.c.l.b16 %v258
      %v570 = vunpack.c.h.b16 %v258
      %v571 = vunpack.c.l.b16 %v259
      %v572 = vunpack.c.h.b16 %v259
      %v573 = vunpack.c.l.b16 %v260
      %v574 = vunpack.c.h.b16 %v260
      %v575 = vunpack.c.l.b16 %v261
      %v576 = vunpack.c.h.b16 %v261
      %v577 = vunpack.c.l.b16 %v262
      %v578 = vunpack.c.h.b16 %v262
      %v579 = vunpack.c.l.b16 %v263
      %v580 = vunpack.c.h.b16 %v263
      %v581 = vunpack.c.l.b16 %v264
      %v582 = vunpack.c.h.b16 %v264
      %v583 = vunpack.c.l.b16 %v265
      %v584 = vunpack.c.h.b16 %v265
      %v585 = vunpack.c.l.b16 %v266
      %v586 = vunpack.c.h.b16 %v266
      %v587 = vunpack.c.l.b16 %v267
      %v588 = vunpack.c.h.b16 %v267
      %v589 = vunpack.c.l.b16 %v268
      %v590 = vunpack.c.h.b16 %v268
      %v591 = vunpack.c.l.b16 %v269
      %v592 = vunpack.c.h.b16 %v269
      %v593 = vunpack.c.l.b16 %v270
      %v594 = vunpack.c.h.b16 %v270
      %v595 = vunpack.c.l.b16 %v271
      %v596 = vunpack.c.h.b16 %v271
      %v597 = vunpack.c.l.b16 %v272
      %v598 = vunpack.c.h.b16 %v272
      %v599 = vunpack.c.l.b16 %v273
      %v600 = vunpack.c.h.b16 %v273
      %v601 = vunpack.c.l.b16 %v274
      %v602 = vunpack.c.h.b16 %v274
      %v603 = vunpack.c.l.b16 %v275
      %v604 = vunpack.c.h.b16 %v275
      %v605 = vunpack.c.l.b16 %v276
      %v606 = vunpack.c.h.b16 %v276
      %v607 = vunpack.c.l.b16 %v277
      %v608 = vunpack.c.h.b16 %v277
      %v609 = vunpack.c.l.b16 %v278
      %v610 = vunpack.c.h.b16 %v278
      %v611 = vunpack.c.l.b16 %v279
      %v612 = vunpack.c.h.b16 %v279
      %v613 = vunpack.c.l.b16 %v280
      %v614 = vunpack.c.h.b16 %v280
      %v615 = vunpack.c.l.b16 %v281
      %v616 = vunpack.c.h.b16 %v281
      %v617 = vunpack.c.l.b16 %v282
      %v618 = vunpack.c.h.b16 %v282
      %v619 = vunpack.c.l.b16 %v283
      %v620 = vunpack.c.h.b16 %v283
      %v621 = vunpack.c.l.b16 %v284
      %v622 = vunpack.c.h.b16 %v284
      %v623 = vunpack.c.l.b16 %v285
      %v624 = vunpack.c.h.b16 %v285
      %v625 = vunpack.c.l.b16 %v286
      %v626 = vunpack.c.h.b16 %v286
      %v627 = vunpack.c.l.b16 %v287
      %v628 = vunpack.c.h.b16 %v287
      %v629 = vunpack.c.l.b16 %v288
      %v630 = vunpack.c.h.b16 %v288
      %v631 = vunpack.c.l.b16 %v289
      %v632 = vunpack.c.h.b16 %v289
      %v633 = vunpack.c.l.b16 %v290
      %v634 = vunpack.c.h.b16 %v290
      %v635 = vunpack.c.l.b16 %v291
      %v636 = vunpack.c.h.b16 %v291
      %v637 = vunpack.c.l.b16 %v292
      %v638 = vunpack.c.h.b16 %v292
      %v639 = vunpack.c.l.b16 %v293
      %v640 = vunpack.c.h.b16 %v293
      %v641 = vunpack.c.l.b16 %v294
      %v642 = vunpack.c.h.b16 %v294
      %v643 = vunpack.c.l.b16 %v295
      %v644 = vunpack.c.h.b16 %v295
      %v645 = vunpack.c.l.b16 %v296
      %v646 = vunpack.c.h.b16 %v296
      %v647 = vunpack.c.l.b16 %v297
      %v648 = vunpack.c.h.b16 %v297
      %v649 = vunpack.c.l.b16 %v298
      %v650 = vunpack.c.h.b16 %v298
      %v651 = vunpack.c.l.b16 %v299
      %v652 = vunpack.c.h.b16 %v299
      %v653 = vunpack.c.l.b16 %v300
      %v654 = vunpack.c.h.b16 %v300
      %v655 = vunpack.c.l.b16 %v301
      %v656 = vunpack.c.h.b16 %v301
      %v657 = vunpack.c.l.b16 %v302
      %v658 = vunpack.c.h.b16 %v302
      %v659 = vunpack.c.l.b16 %v303
      %v660 = vunpack.c.h.b16 %v303
      %v661 = vunpack.c.l.b16 %v304
      %v662 = vunpack.c.h.b16 %v304
      %v663 = vunpack.c.l.b16 %v305
      %v664 = vunpack.c.h.b16 %v305
      %v665 = vunpack.c.l.b16 %v306
      %v666 = vunpack.c.h.b16 %v306
      %v667 = vunpack.c.l.b16 %v307
      %v668 = vunpack.c.h.b16 %v307
      %v669 = vunpack.c.l.b16 %v308
      %v670 = vunpack.c.h.b16 %v308
      %v671 = vunpack.c.l.b16 %v309
      %v672 = vunpack.c.h.b16 %v309
      %v673 = vunpack.c.l.b16 %v310
      %v674 = vunpack.c.h.b16 %v310
      %v675 = vunpack.c.l.b16 %v311
      %v676 = vunpack.c.h.b16 %v311
      %v677 = vunpack.c.l.b16 %v312
      %v678 = vunpack.c.h.b16 %v312
      %v679 = vunpack.c.l.b16 %v313
      %v680 = vunpack.c.h.b16 %v313
      %v681 = vunpack.c.l.b16 %v314
      %v682 = vunpack.c.h.b16 %v314
      %v683 = vunpack.c.l.b16 %v315
      %v684 = vunpack.c.h.b16 %v315
      %v685 = vunpack.c.l.b16 %v316
      %v686 = vunpack.c.h.b16 %v316
      %v687 = vunpack.c.l.b16 %v317
      %v688 = vunpack.c.h.b16 %v317
      %v689 = vunpack.c.l.b16 %v318
      %v690 = vunpack.c.h.b16 %v318
      %v691 = vunpack.c.l.b16 %v319
      %v692 = vunpack.c.h.b16 %v319
      %v693 = vunpack.c.l.b16 %v320
      %v694 = vunpack.c.h.b16 %v320
      %v695 = vunpack.c.l.b16 %v321
      %v696 = vunpack.c.h.b16 %v321
      %v697 = vunpack.c.l.b16 %v322
      %v698 = vunpack.c.h.b16 %v322
      %v699 = vunpack.c.l.b16 %v323
      %v700 = vunpack.c.h.b16 %v323
      %v701 = vunpack.c.l.b16 %v324
      %v702 = vunpack.c.h.b16 %v324
      %v703 = vunpack.c.l.b16 %v325
      %v704 = vunpack.c.h.b16 %v325
      %v705 = vunpack.c.l.b16 %v326
      %v706 = vunpack.c.h.b16 %v326
      %v707 = vunpack.c.l.b16 %v327
      %v708 = vunpack.c.h.b16 %v327
      %v709 = vunpack.c.l.b16 %v328
      %v710 = vunpack.c.h.b16 %v328
      %v711 = vunpack.c.l.b16 %v329
      %v712 = vunpack.c.h.b16 %v329
      %v713 = vunpack.c.l.b16 %v330
      %v714 = vunpack.c.h.b16 %v330
      %v715 = vunpack.c.l.b16 %v331
      %v716 = vunpack.c.h.b16 %v331
      %v717 = vunpack.c.l.b16 %v332
      %v718 = vunpack.c.h.b16 %v332
      %v719 = vunpack.c.l.b16 %v333
      %v720 = vunpack.c.h.b16 %v333
      %v721 = vunpack.c.l.b16 %v334
      %v722 = vunpack.c.h.b16 %v334
      %v723 = vunpack.c.l.b16 %v335
      %v724 = vunpack.c.h.b16 %v335
      %v725 = vunpack.c.l.b16 %v336
      %v726 = vunpack.c.h.b16 %v336
      %v727 = vunpack.c.l.b16 %v337
      %v728 = vunpack.c.h.b16 %v337
      %v729 = vunpack.c.l.b16 %v338
      %v730 = vunpack.c.h.b16 %v338
      %v731 = vunpack.c.l.b16 %v339
      %v732 = vunpack.c.h.b16 %v339
      %v733 = vunpack.c.l.b16 %v340
      %v734 = vunpack.c.h.b16 %v340
      %v735 = vunpack.c.l.b16 %v341
      %v736 = vunpack.c.h.b16 %v341
      %v737 = vunpack.c.l.b16 %v342
      %v738 = vunpack.c.h.b16 %v342
      %v739 = vunpack.c.l.b16 %v343
      %v740 = vunpack.c.h.b16 %v343
      %v741 = vunpack.c.l.b16 %v344
      %v742 = vunpack.c.h.b16 %v344
      %v743 = vunpack.c.l.b16 %v345
      %v744 = vunpack.c.h.b16 %v345
      %v745 = vunpack.c.l.b16 %v346
      %v746 = vunpack.c.h.b16 %v346
      %v747 = vunpack.c.l.b16 %v347
      %v748 = vunpack.c.h.b16 %v347
      %v749 = vunpack.c.l.b16 %v348
      %v750 = vunpack.c.h.b16 %v348
      %v751 = vunpack.c.l.b16 %v349
      %v752 = vunpack.c.h.b16 %v349
      %v753 = vpack.c.b16 %v499, %v497
      %v754 = vpack.c.b16 %v500, %v498
      %v755 = vpack.c.b16 %v503, %v501
      %v756 = vpack.c.b16 %v504, %v502
      %v757 = vpack.c.b16 %v507, %v505
      %v758 = vpack.c.b16 %v508, %v506
      %v759 = vpack.c.b16 %v511, %v509
      %v760 = vpack.c.b16 %v512, %v510
      %v761 = vpack.c.b16 %v515, %v513
      %v762 = vpack.c.b16 %v516, %v514
      %v763 = vpack.c.b16 %v519, %v517
      %v764 = vpack.c.b16 %v520, %v518
      %v765 = vpack.c.b16 %v523, %v521
      %v766 = vpack.c.b16 %v524, %v522
      %v767 = vpack.c.b16 %v527, %v525
      %v768 = vpack.c.b16 %v528, %v526
      %v769 = vpack.c.b16 %v531, %v529
      %v770 = vpack.c.b16 %v532, %v530
      %v771 = vpack.c.b16 %v535, %v533
      %v772 = vpack.c.b16 %v536, %v534
      %v773 = vpack.c.b16 %v539, %v537
      %v774 = vpack.c.b16 %v540, %v538
      %v775 = vpack.c.b16 %v543, %v541
      %v776 = vpack.c.b16 %v544, %v542
      %v777 = vpack.c.b16 %v547, %v545
      %v778 = vpack.c.b16 %v548, %v546
      %v779 = vpack.c.b16 %v551, %v549
      %v780 = vpack.c.b16 %v552, %v550
      %v781 = vpack.c.b16 %v555, %v553
      %v782 = vpack.c.b16 %v556, %v554
      %v783 = vpack.c.b16 %v559, %v557
      %v784 = vpack.c.b16 %v560, %v558
      %v785 = vpack.c.b16 %v563, %v561
      %v786 = vpack.c.b16 %v564, %v562
      %v787 = vpack.c.b16 %v567, %v565
      %v788 = vpack.c.b16 %v568, %v566
      %v789 = vpack.c.b16 %v571, %v569
      %v790 = vpack.c.b16 %v572, %v570
      %v791 = vpack.c.b16 %v575, %v573
      %v792 = vpack.c.b16 %v576, %v574
      %v793 = vpack.c.b16 %v579, %v577
      %v794 = vpack.c.b16 %v580, %v578
      %v795 = vpack.c.b16 %v583, %v581
      %v796 = vpack.c.b16 %v584, %v582
      %v797 = vpack.c.b16 %v587, %v585
      %v798 = vpack.c.b16 %v588, %v586
      %v799 = vpack.c.b16 %v591, %v589
      %v800 = vpack.c.b16 %v592, %v590
      %v801 = vpack.c.b16 %v595, %v593
      %v802 = vpack.c.b16 %v596, %v594
      %v803 = vpack.c.b16 %v599, %v597
      %v804 = vpack.c.b16 %v600, %v598
      %v805 = vpack.c.b16 %v603, %v601
      %v806 = vpack.c.b16 %v604, %v602
      %v807 = vpack.c.b16 %v607, %v605
      %v808 = vpack.c.b16 %v608, %v606
      %v809 = vpack.c.b16 %v611, %v609
      %v810 = vpack.c.b16 %v612, %v610
      %v811 = vpack.c.b16 %v615, %v613
      %v812 = vpack.c.b16 %v616, %v614
      %v813 = vpack.c.b16 %v619, %v617
      %v814 = vpack.c.b16 %v620, %v618
      %v815 = vpack.c.b16 %v623, %v621
      %v816 = vpack.c.b16 %v624, %v622
      %v817 = vpack.c.b16 %v627, %v625
      %v818 = vpack.c.b16 %v628, %v626
      %v819 = vpack.c.b16 %v631, %v629
      %v820 = vpack.c.b16 %v632, %v630
      %v821 = vpack.c.b16 %v635, %v633
      %v822 = vpack.c.b16 %v636, %v634
      %v823 = vpack.c.b16 %v639, %v637
      %v824 = vpack.c.b16 %v640, %v638
      %v825 = vpack.c.b16 %v643, %v641
      %v826 = vpack.c.b16 %v644, %v642
      %v827 = vpack.c.b16 %v647, %v645
      %v828 = vpack.c.b16 %v648, %v646
      %v829 = vpack.c.b16 %v651, %v649
      %v830 = vpack.c.b16 %v652, %v650
      %v831 = vpack.c.b16 %v655, %v653
      %v832 = vpack.c.b16 %v656, %v654
      %v833 = vpack.c.b16 %v659, %v657
      %v834 = vpack.c.b16 %v660, %v658
      %v835 = vpack.c.b16 %v663, %v661
      %v836 = vpack.c.b16 %v664, %v662
      %v837 = vpack.c.b16 %v667, %v665
      %v838 = vpack.c.b16 %v668, %v666
      %v839 = vpack.c.b16 %v671, %v669
      %v840 = vpack.c.b16 %v672, %v670
      %v841 = vpack.c.b16 %v675, %v673
      %v842 = vpack.c.b16 %v676, %v674
      %v843 = vpack.c.b16 %v679, %v677
      %v844 = vpack.c.b16 %v680, %v678
      %v845 = vpack.c.b16 %v683, %v681
      %v846 = vpack.c.b16 %v684, %v682
      %v847 = vpack.c.b16 %v687, %v685
      %v848 = vpack.c.b16 %v688, %v686
      %v849 = vpack.c.b16 %v691, %v689
      %v850 = vpack.c.b16 %v692, %v690
      %v851 = vpack.c.b16 %v695, %v693
      %v852 = vpack.c.b16 %v696, %v694
      %v853 = vpack.c.b16 %v699, %v697
      %v854 = vpack.c.b16 %v700, %v698
      %v855 = vpack.c.b16 %v703, %v701
      %v856 = vpack.c.b16 %v704, %v702
      %v857 = vpack.c.b16 %v707, %v705
      %v858 = vpack.c.b16 %v708, %v706
      %v859 = vpack.c.b16 %v711, %v709
      %v860 = vpack.c.b16 %v712, %v710
      %v861 = vpack.c.b16 %v715, %v713
      %v862 = vpack.c.b16 %v716, %v714
      %v863 = vpack.c.b16 %v719, %v717
      %v864 = vpack.c.b16 %v720, %v718
      %v865 = vpack.c.b16 %v723, %v721
      %v866 = vpack.c.b16 %v724, %v722
      %v867 = vpack.c.b16 %v727, %v725
      %v868 = vpack.c.b16 %v728, %v726
      %v869 = vpack.c.b16 %v731, %v729
      %v870 = vpack.c.b16 %v732, %v730
      %v871 = vpack.c.b16 %v735, %v733
      %v872 = vpack.c.b16 %v736, %v734
      %v873 = vpack.c.b16 %v739, %v737
      %v874 = vpack.c.b16 %v740, %v738
      %v875 = vpack.c.b16 %v743, %v741
      %v876 = vpack.c.b16 %v744, %v742
      %v877 = vpack.c.b16 %v747, %v745
      %v878 = vpack.c.b16 %v748, %v746
      %v879 = vpack.c.b16 %v751, %v749
      %v880 = vpack.c.b16 %v752, %v750
      %v964 = vunpack.c.l.b16 %v350
      %v965 = vunpack.c.l.b16 %v351
      %v966 = vunpack.c.l.b16 %v352
      %v967 = vunpack.c.l.b16 %v353
      %v968 = vunpack.c.l.b16 %v354
      %v969 = vunpack.c.l.b16 %v355
      %v970 = vunpack.c.l.b16 %v356
      %v971 = vunpack.c.l.b16 %v357
      %v972 = vunpack.c.l.b16 %v358
      %v973 = vunpack.c.l.b16 %v359
      %v974 = vunpack.c.l.b16 %v360
      %v975 = vunpack.c.l.b16 %v361
      %v976 = vunpack.c.l.b16 %v362
      %v977 = vunpack.c.l.b16 %v363
      %v978 = vunpack.c.l.b16 %v364
      %v979 = vunpack.c.l.b16 %v365
      %v980 = vunpack.c.l.b16 %v366
      %v981 = vunpack.c.l.b16 %v367
      %v982 = vunpack.c.l.b16 %v368
      %v983 = vpack.c.b16 %v965, %v964
      %v984 = vpack.c.b16 %v967, %v966
      %v985 = vpack.c.b16 %v969, %v968
      %v986 = vpack.c.b16 %v971, %v970
      %v987 = vpack.c.b16 %v973, %v972
      %v988 = vpack.c.b16 %v975, %v974
      %v989 = vpack.c.b16 %v977, %v976
      %v990 = vpack.c.b16 %v979, %v978
      %v991 = vpack.c.b16 %v981, %v980
      %v992 = vpack.c.b16 %v982, %v982
      %vm1002 = vcmask 154624
      %v1004 = vsel %vm1002, %v754, 0
      %v1007 = vsel %vm1002, %v756, 0
      %v1010 = vsel %vm1002, %v758, 0
      %v1013 = vsel %vm1002, %v760, 0
      %v1016 = vsel %vm1002, %v762, 0
      %v1019 = vsel %vm1002, %v764, 0
      %v1022 = vsel %vm1002, %v766, 0
      %v1025 = vsel %vm1002, %v768, 0
      %v1028 = vsel %vm1002, %v770, 0
      %v1031 = vsel %vm1002, %v772, 0
      %v1034 = vsel %vm1002, %v774, 0
      %v1037 = vsel %vm1002, %v776, 0
      %v1040 = vsel %vm1002, %v778, 0
      %v1043 = vsel %vm1002, %v780, 0
      %v1046 = vsel %vm1002, %v782, 0
      %v1049 = vsel %vm1002, %v784, 0
      %v1052 = vsel %vm1002, %v786, 0
      %v1055 = vsel %vm1002, %v788, 0
      %v1058 = vsel %vm1002, %v790, 0
      %v1061 = vsel %vm1002, %v792, 0
      %v1064 = vsel %vm1002, %v794, 0
      %v1067 = vsel %vm1002, %v796, 0
      %v1070 = vsel %vm1002, %v798, 0
      %v1073 = vsel %vm1002, %v800, 0
      %v1076 = vsel %vm1002, %v802, 0
      %v1079 = vsel %vm1002, %v804, 0
      %v1082 = vsel %vm1002, %v806, 0
      %v1085 = vsel %vm1002, %v808, 0
      %v1088 = vsel %vm1002, %v810, 0
      %v1091 = vsel %vm1002, %v812, 0
      %v1094 = vsel %vm1002, %v814, 0
      %v1097 = vsel %vm1002, %v816, 0
      %v1100 = vsel %vm1002, %v818, 0
      %v1103 = vsel %vm1002, %v820, 0
      %v1106 = vsel %vm1002, %v822, 0
      %v1109 = vsel %vm1002, %v824, 0
      %v1112 = vsel %vm1002, %v826, 0
      %v1115 = vsel %vm1002, %v828, 0
      %v1118 = vsel %vm1002, %v830, 0
      %v1121 = vsel %vm1002, %v832, 0
      %v1124 = vsel %vm1002, %v834, 0
      %v1127 = vsel %vm1002, %v836, 0
      %v1130 = vsel %vm1002, %v838, 0
      %v1133 = vsel %vm1002, %v840, 0
      %v1136 = vsel %vm1002, %v842, 0
      %v1139 = vsel %vm1002, %v844, 0
      %v1142 = vsel %vm1002, %v846, 0
      %v1145 = vsel %vm1002, %v848, 0
      %v1148 = vsel %vm1002, %v850, 0
      %v1151 = vsel %vm1002, %v852, 0
      %v1154 = vsel %vm1002, %v854, 0
      %v1157 = vsel %vm1002, %v856, 0
      %v1160 = vsel %vm1002, %v858, 0
      %v1163 = vsel %vm1002, %v860, 0
      %v1166 = vsel %vm1002, %v862, 0
      %v1169 = vsel %vm1002, %v864, 0
      %v1172 = vsel %vm1002, %v866, 0
      %v1175 = vsel %vm1002, %v868, 0
      %v1178 = vsel %vm1002, %v870, 0
      %v1181 = vsel %vm1002, %v872, 0
      %v1184 = vsel %vm1002, %v874, 0
      %v1187 = vsel %vm1002, %v876, 0
      %v1190 = vsel %vm1002, %v878, 0
      %v1193 = vsel %vm1002, %v880, 0
      %vm1195 = vcmask 1040384
      %vm1196 = vcmask 1041408
      %v1197 = vsel %vm1195, 4294967295, 65535
      %v1198 = vsel %vm1196, %v1197, 0
      %v1200 = vand.u32 %v992, %v1198
      %1202 = vmatprep.subr.bf16.mxu0 0
      %1203 = vmatpush1.bf16.msra.mxu0 %v983
      %1204 = vmatprep.subr.bf16.mxu0 0
      %1205 = vmatpush1.bf16.msra.mxu0 %v984
      %1206 = vmatprep.subr.bf16.mxu0 0
      %1207 = vmatpush1.bf16.msra.mxu0 %v985
      %1208 = vmatprep.subr.bf16.mxu0 0
      %1209 = vmatpush1.bf16.msra.mxu0 %v986
      %1210 = vmatprep.subr.bf16.mxu0 0
      %1211 = vmatpush1.bf16.msra.mxu0 %v987
      %1212 = vmatprep.subr.bf16.mxu0 0
      %1213 = vmatpush1.bf16.msra.mxu0 %v988
      %1214 = vmatprep.subr.bf16.mxu0 0
      %1215 = vmatpush1.bf16.msra.mxu0 %v989
      %1216 = vmatprep.subr.bf16.mxu0 0
      %1217 = vmatpush1.bf16.msra.mxu0 %v990
      %1218 = vmatprep.subr.bf16.mxu0 0
      %1219 = vmatpush1.bf16.msra.mxu0 %v991
      %1220 = vmatprep.subr.bf16.mxu0 0
      %1221 = vmatpush1.bf16.msra.mxu0 %v1200
      %1222 = vmatprep.subr.bf16.mxu0 0
      %1223 = vmatpush1.bf16.msra.mxu0 0
      %1224 = vmatprep.subr.bf16.mxu0 0
      %1225 = vmatpush1.bf16.msra.mxu0 0
      %1226 = vmatprep.subr.bf16.mxu0 0
      %1227 = vmatpush1.bf16.msra.mxu0 0
      %1228 = vmatprep.subr.bf16.mxu0 0
      %1229 = vmatpush1.bf16.msra.mxu0 0
      %1230 = vmatprep.subr.bf16.mxu0 0
      %1231 = vmatpush1.bf16.msra.mxu0 0
      %1232 = vmatprep.subr.bf16.mxu0 0
      %1233 = vmatpush1.bf16.msra.mxu0 0
      %1234 = vmatprep.mubr.bf16.mxu0 %v1004
      %1235 = vmatmul.mubr.bf16.gmra.mrb[0].mxu0 %v753
      %v1236 = vpop.f32.mrb[0].mxu0
      %v1237 = vadd.f32 0.0, %v1236
      %v1238 = vpop.f32.mrb[0].mxu0
      %v1239 = vpop.f32.mrb[0].mxu0
      %v1240 = vadd.f32 0.0, %v1239
      %v1241 = vpop.f32.mrb[0].mxu0
      %1242 = vmatprep.mubr.bf16.mxu0 %v1007
      %1243 = vmatmul.mubr.bf16.gmra.mrb[0].mxu0 %v755
      %v1244 = vpop.f32.mrb[0].mxu0
      %v1245 = vadd.f32 0.0, %v1244
      %v1246 = vpop.f32.mrb[0].mxu0
      %v1247 = vpop.f32.mrb[0].mxu0
      %v1248 = vadd.f32 0.0, %v1247
      %v1249 = vpop.f32.mrb[0].mxu0
      %1250 = vmatprep.mubr.bf16.mxu0 %v1010
      %1251 = vmatmul.mubr.bf16.gmra.mrb[0].mxu0 %v757
      %v1252 = vpop.f32.mrb[0].mxu0
      %v1253 = vadd.f32 0.0, %v1252
      %v1254 = vpop.f32.mrb[0].mxu0
      %v1255 = vpop.f32.mrb[0].mxu0
      %v1256 = vadd.f32 0.0, %v1255
      %v1257 = vpop.f32.mrb[0].mxu0
      %1258 = vmatprep.mubr.bf16.mxu0 %v1013
      %1259 = vmatmul.mubr.bf16.gmra.mrb[0].mxu0 %v759
      %v1260 = vpop.f32.mrb[0].mxu0
      %v1261 = vadd.f32 0.0, %v1260
      %v1262 = vpop.f32.mrb[0].mxu0
      %v1263 = vpop.f32.mrb[0].mxu0
      %v1264 = vadd.f32 0.0, %v1263
      %v1265 = vpop.f32.mrb[0].mxu0
      %1266 = vmatprep.mubr.bf16.mxu0 %v1016
      %1267 = vmatmul.mubr.bf16.gmra.mrb[0].mxu0 %v761
      %v1268 = vpop.f32.mrb[0].mxu0
      %v1269 = vadd.f32 0.0, %v1268
      %v1270 = vpop.f32.mrb[0].mxu0
      %v1271 = vpop.f32.mrb[0].mxu0
      %v1272 = vadd.f32 0.0, %v1271
      %v1273 = vpop.f32.mrb[0].mxu0
      %1274 = vmatprep.mubr.bf16.mxu0 %v1019
      %1275 = vmatmul.mubr.bf16.gmra.mrb[0].mxu0 %v763
      %v1276 = vpop.f32.mrb[0].mxu0
      %v1277 = vadd.f32 0.0, %v1276
      %v1278 = vpop.f32.mrb[0].mxu0
      %v1279 = vpop.f32.mrb[0].mxu0
      %v1280 = vadd.f32 0.0, %v1279
      %v1281 = vpop.f32.mrb[0].mxu0
      %1282 = vmatprep.mubr.bf16.mxu0 %v1022
      %1283 = vmatmul.mubr.bf16.gmra.mrb[0].mxu0 %v765
      %v1284 = vpop.f32.mrb[0].mxu0
      %v1285 = vadd.f32 0.0, %v1284
      %v1286 = vpop.f32.mrb[0].mxu0
      %v1287 = vpop.f32.mrb[0].mxu0
      %v1288 = vadd.f32 0.0, %v1287
      %v1289 = vpop.f32.mrb[0].mxu0
      %1290 = vmatprep.mubr.bf16.mxu0 %v1025
      %1291 = vmatmul.mubr.bf16.gmra.mrb[0].mxu0 %v767
      %v1292 = vpop.f32.mrb[0].mxu0
      %v1293 = vadd.f32 0.0, %v1292
      %v1294 = vpop.f32.mrb[0].mxu0
      %v1295 = vpop.f32.mrb[0].mxu0
      %v1296 = vadd.f32 0.0, %v1295
      %v1297 = vpop.f32.mrb[0].mxu0
      %1298 = vmatprep.mubr.bf16.mxu0 %v1028
      %1299 = vmatmul.mubr.bf16.gmra.mrb[0].mxu0 %v769
      %v1300 = vpop.f32.mrb[0].mxu0
      %v1301 = vadd.f32 0.0, %v1300
      %v1302 = vpop.f32.mrb[0].mxu0
      %v1303 = vpop.f32.mrb[0].mxu0
      %v1304 = vadd.f32 0.0, %v1303
      %v1305 = vpop.f32.mrb[0].mxu0
      %1306 = vmatprep.mubr.bf16.mxu0 %v1031
      %1307 = vmatmul.mubr.bf16.gmra.mrb[0].mxu0 %v771
      %v1308 = vpop.f32.mrb[0].mxu0
      %v1309 = vadd.f32 0.0, %v1308
      %v1310 = vpop.f32.mrb[0].mxu0
      %v1311 = vpop.f32.mrb[0].mxu0
      %v1312 = vadd.f32 0.0, %v1311
      %v1313 = vpop.f32.mrb[0].mxu0
      %1314 = vmatprep.mubr.bf16.mxu0 %v1034
      %1315 = vmatmul.mubr.bf16.gmra.mrb[0].mxu0 %v773
      %v1316 = vpop.f32.mrb[0].mxu0
      %v1317 = vadd.f32 0.0, %v1316
      %v1318 = vpop.f32.mrb[0].mxu0
      %v1319 = vpop.f32.mrb[0].mxu0
      %v1320 = vadd.f32 0.0, %v1319
      %v1321 = vpop.f32.mrb[0].mxu0
      %1322 = vmatprep.mubr.bf16.mxu0 %v1037
      %1323 = vmatmul.mubr.bf16.gmra.mrb[0].mxu0 %v775
      %v1324 = vpop.f32.mrb[0].mxu0
      %v1325 = vadd.f32 0.0, %v1324
      %v1326 = vpop.f32.mrb[0].mxu0
      %v1327 = vpop.f32.mrb[0].mxu0
      %v1328 = vadd.f32 0.0, %v1327
      %v1329 = vpop.f32.mrb[0].mxu0
      %1330 = vmatprep.mubr.bf16.mxu0 %v1040
      %1331 = vmatmul.mubr.bf16.gmra.mrb[0].mxu0 %v777
      %v1332 = vpop.f32.mrb[0].mxu0
      %v1333 = vadd.f32 0.0, %v1332
      %v1334 = vpop.f32.mrb[0].mxu0
      %v1335 = vpop.f32.mrb[0].mxu0
      %v1336 = vadd.f32 0.0, %v1335
      %v1337 = vpop.f32.mrb[0].mxu0
      %1338 = vmatprep.mubr.bf16.mxu0 %v1043
      %1339 = vmatmul.mubr.bf16.gmra.mrb[0].mxu0 %v779
      %v1340 = vpop.f32.mrb[0].mxu0
      %v1341 = vadd.f32 0.0, %v1340
      %v1342 = vpop.f32.mrb[0].mxu0
      %v1343 = vpop.f32.mrb[0].mxu0
      %v1344 = vadd.f32 0.0, %v1343
      %v1345 = vpop.f32.mrb[0].mxu0
      %1346 = vmatprep.mubr.bf16.mxu0 %v1046
      %1347 = vmatmul.mubr.bf16.gmra.mrb[0].mxu0 %v781
      %v1348 = vpop.f32.mrb[0].mxu0
      %v1349 = vadd.f32 0.0, %v1348
      %v1350 = vpop.f32.mrb[0].mxu0
      %v1351 = vpop.f32.mrb[0].mxu0
      %v1352 = vadd.f32 0.0, %v1351
      %v1353 = vpop.f32.mrb[0].mxu0
      %1354 = vmatprep.mubr.bf16.mxu0 %v1049
      %1355 = vmatmul.mubr.bf16.gmra.mrb[0].mxu0 %v783
      %v1356 = vpop.f32.mrb[0].mxu0
      %v1357 = vadd.f32 0.0, %v1356
      %v1358 = vpop.f32.mrb[0].mxu0
      %v1359 = vpop.f32.mrb[0].mxu0
      %v1360 = vadd.f32 0.0, %v1359
      %v1361 = vpop.f32.mrb[0].mxu0
      %1362 = vmatprep.mubr.bf16.mxu0 %v1052
      %1363 = vmatmul.mubr.bf16.gmra.mrb[0].mxu0 %v785
      %v1364 = vpop.f32.mrb[0].mxu0
      %v1365 = vadd.f32 0.0, %v1364
      %v1366 = vpop.f32.mrb[0].mxu0
      %v1367 = vpop.f32.mrb[0].mxu0
      %v1368 = vadd.f32 0.0, %v1367
      %v1369 = vpop.f32.mrb[0].mxu0
      %1370 = vmatprep.mubr.bf16.mxu0 %v1055
      %1371 = vmatmul.mubr.bf16.gmra.mrb[0].mxu0 %v787
      %v1372 = vpop.f32.mrb[0].mxu0
      %v1373 = vadd.f32 0.0, %v1372
      %v1374 = vpop.f32.mrb[0].mxu0
      %v1375 = vpop.f32.mrb[0].mxu0
      %v1376 = vadd.f32 0.0, %v1375
      %v1377 = vpop.f32.mrb[0].mxu0
      %1378 = vmatprep.mubr.bf16.mxu0 %v1058
      %1379 = vmatmul.mubr.bf16.gmra.mrb[0].mxu0 %v789
      %v1380 = vpop.f32.mrb[0].mxu0
      %v1381 = vadd.f32 0.0, %v1380
      %v1382 = vpop.f32.mrb[0].mxu0
      %v1383 = vpop.f32.mrb[0].mxu0
      %v1384 = vadd.f32 0.0, %v1383
      %v1385 = vpop.f32.mrb[0].mxu0
      %1386 = vmatprep.mubr.bf16.mxu0 %v1061
      %1387 = vmatmul.mubr.bf16.gmra.mrb[0].mxu0 %v791
      %v1388 = vpop.f32.mrb[0].mxu0
      %v1389 = vadd.f32 0.0, %v1388
      %v1390 = vpop.f32.mrb[0].mxu0
      %v1391 = vpop.f32.mrb[0].mxu0
      %v1392 = vadd.f32 0.0, %v1391
      %v1393 = vpop.f32.mrb[0].mxu0
      %1394 = vmatprep.mubr.bf16.mxu0 %v1064
      %1395 = vmatmul.mubr.bf16.gmra.mrb[0].mxu0 %v793
      %v1396 = vpop.f32.mrb[0].mxu0
      %v1397 = vadd.f32 0.0, %v1396
      %v1398 = vpop.f32.mrb[0].mxu0
      %v1399 = vpop.f32.mrb[0].mxu0
      %v1400 = vadd.f32 0.0, %v1399
      %v1401 = vpop.f32.mrb[0].mxu0
      %1402 = vmatprep.mubr.bf16.mxu0 %v1067
      %1403 = vmatmul.mubr.bf16.gmra.mrb[0].mxu0 %v795
      %v1404 = vpop.f32.mrb[0].mxu0
      %v1405 = vadd.f32 0.0, %v1404
      %v1406 = vpop.f32.mrb[0].mxu0
      %v1407 = vpop.f32.mrb[0].mxu0
      %v1408 = vadd.f32 0.0, %v1407
      %v1409 = vpop.f32.mrb[0].mxu0
      %1410 = vmatprep.mubr.bf16.mxu0 %v1070
      %1411 = vmatmul.mubr.bf16.gmra.mrb[0].mxu0 %v797
      %v1412 = vpop.f32.mrb[0].mxu0
      %v1413 = vadd.f32 0.0, %v1412
      %v1414 = vpop.f32.mrb[0].mxu0
      %v1415 = vpop.f32.mrb[0].mxu0
      %v1416 = vadd.f32 0.0, %v1415
      %v1417 = vpop.f32.mrb[0].mxu0
      %1418 = vmatprep.mubr.bf16.mxu0 %v1073
      %1419 = vmatmul.mubr.bf16.gmra.mrb[0].mxu0 %v799
      %v1420 = vpop.f32.mrb[0].mxu0
      %v1421 = vadd.f32 0.0, %v1420
      %v1422 = vpop.f32.mrb[0].mxu0
      %v1423 = vpop.f32.mrb[0].mxu0
      %v1424 = vadd.f32 0.0, %v1423
      %v1425 = vpop.f32.mrb[0].mxu0
      %1426 = vmatprep.mubr.bf16.mxu0 %v1076
      %1427 = vmatmul.mubr.bf16.gmra.mrb[0].mxu0 %v801
      %v1428 = vpop.f32.mrb[0].mxu0
      %v1429 = vadd.f32 0.0, %v1428
      %v1430 = vpop.f32.mrb[0].mxu0
      %v1431 = vpop.f32.mrb[0].mxu0
      %v1432 = vadd.f32 0.0, %v1431
      %v1433 = vpop.f32.mrb[0].mxu0
      %1434 = vmatprep.mubr.bf16.mxu0 %v1079
      %1435 = vmatmul.mubr.bf16.gmra.mrb[0].mxu0 %v803
      %v1436 = vpop.f32.mrb[0].mxu0
      %v1437 = vadd.f32 0.0, %v1436
      %v1438 = vpop.f32.mrb[0].mxu0
      %v1439 = vpop.f32.mrb[0].mxu0
      %v1440 = vadd.f32 0.0, %v1439
      %v1441 = vpop.f32.mrb[0].mxu0
      %1442 = vmatprep.mubr.bf16.mxu0 %v1082
      %1443 = vmatmul.mubr.bf16.gmra.mrb[0].mxu0 %v805
      %v1444 = vpop.f32.mrb[0].mxu0
      %v1445 = vadd.f32 0.0, %v1444
      %v1446 = vpop.f32.mrb[0].mxu0
      %v1447 = vpop.f32.mrb[0].mxu0
      %v1448 = vadd.f32 0.0, %v1447
      %v1449 = vpop.f32.mrb[0].mxu0
      %1450 = vmatprep.mubr.bf16.mxu0 %v1085
      %1451 = vmatmul.mubr.bf16.gmra.mrb[0].mxu0 %v807
      %v1452 = vpop.f32.mrb[0].mxu0
      %v1453 = vadd.f32 0.0, %v1452
      %v1454 = vpop.f32.mrb[0].mxu0
      %v1455 = vpop.f32.mrb[0].mxu0
      %v1456 = vadd.f32 0.0, %v1455
      %v1457 = vpop.f32.mrb[0].mxu0
      %1458 = vmatprep.mubr.bf16.mxu0 %v1088
      %1459 = vmatmul.mubr.bf16.gmra.mrb[0].mxu0 %v809
      %v1460 = vpop.f32.mrb[0].mxu0
      %v1461 = vadd.f32 0.0, %v1460
      %v1462 = vpop.f32.mrb[0].mxu0
      %v1463 = vpop.f32.mrb[0].mxu0
      %v1464 = vadd.f32 0.0, %v1463
      %v1465 = vpop.f32.mrb[0].mxu0
      %1466 = vmatprep.mubr.bf16.mxu0 %v1091
      %1467 = vmatmul.mubr.bf16.gmra.mrb[0].mxu0 %v811
      %v1468 = vpop.f32.mrb[0].mxu0
      %v1469 = vadd.f32 0.0, %v1468
      %v1470 = vpop.f32.mrb[0].mxu0
      %v1471 = vpop.f32.mrb[0].mxu0
      %v1472 = vadd.f32 0.0, %v1471
      %v1473 = vpop.f32.mrb[0].mxu0
      %1474 = vmatprep.mubr.bf16.mxu0 %v1094
      %1475 = vmatmul.mubr.bf16.gmra.mrb[0].mxu0 %v813
      %v1476 = vpop.f32.mrb[0].mxu0
      %v1477 = vadd.f32 0.0, %v1476
      %v1478 = vpop.f32.mrb[0].mxu0
      %v1479 = vpop.f32.mrb[0].mxu0
      %v1480 = vadd.f32 0.0, %v1479
      %v1481 = vpop.f32.mrb[0].mxu0
      %1482 = vmatprep.mubr.bf16.mxu0 %v1097
      %1483 = vmatmul.mubr.bf16.gmra.mrb[0].mxu0 %v815
      %v1484 = vpop.f32.mrb[0].mxu0
      %v1485 = vadd.f32 0.0, %v1484
      %v1486 = vpop.f32.mrb[0].mxu0
      %v1487 = vpop.f32.mrb[0].mxu0
      %v1488 = vadd.f32 0.0, %v1487
      %v1489 = vpop.f32.mrb[0].mxu0
      %1490 = vmatprep.mubr.bf16.mxu0 %v1100
      %1491 = vmatmul.mubr.bf16.gmra.mrb[0].mxu0 %v817
      %v1492 = vpop.f32.mrb[0].mxu0
      %v1493 = vadd.f32 0.0, %v1492
      %v1494 = vpop.f32.mrb[0].mxu0
      %v1495 = vpop.f32.mrb[0].mxu0
      %v1496 = vadd.f32 0.0, %v1495
      %v1497 = vpop.f32.mrb[0].mxu0
      %1498 = vmatprep.mubr.bf16.mxu0 %v1103
      %1499 = vmatmul.mubr.bf16.gmra.mrb[0].mxu0 %v819
      %v1500 = vpop.f32.mrb[0].mxu0
      %v1501 = vadd.f32 0.0, %v1500
      %v1502 = vpop.f32.mrb[0].mxu0
      %v1503 = vpop.f32.mrb[0].mxu0
      %v1504 = vadd.f32 0.0, %v1503
      %v1505 = vpop.f32.mrb[0].mxu0
      %1506 = vmatprep.mubr.bf16.mxu0 %v1106
      %1507 = vmatmul.mubr.bf16.gmra.mrb[0].mxu0 %v821
      %v1508 = vpop.f32.mrb[0].mxu0
      %v1509 = vadd.f32 0.0, %v1508
      %v1510 = vpop.f32.mrb[0].mxu0
      %v1511 = vpop.f32.mrb[0].mxu0
      %v1512 = vadd.f32 0.0, %v1511
      %v1513 = vpop.f32.mrb[0].mxu0
      %1514 = vmatprep.mubr.bf16.mxu0 %v1109
      %1515 = vmatmul.mubr.bf16.gmra.mrb[0].mxu0 %v823
      %v1516 = vpop.f32.mrb[0].mxu0
      %v1517 = vadd.f32 0.0, %v1516
      %v1518 = vpop.f32.mrb[0].mxu0
      %v1519 = vpop.f32.mrb[0].mxu0
      %v1520 = vadd.f32 0.0, %v1519
      %v1521 = vpop.f32.mrb[0].mxu0
      %1522 = vmatprep.mubr.bf16.mxu0 %v1112
      %1523 = vmatmul.mubr.bf16.gmra.mrb[0].mxu0 %v825
      %v1524 = vpop.f32.mrb[0].mxu0
      %v1525 = vadd.f32 0.0, %v1524
      %v1526 = vpop.f32.mrb[0].mxu0
      %v1527 = vpop.f32.mrb[0].mxu0
      %v1528 = vadd.f32 0.0, %v1527
      %v1529 = vpop.f32.mrb[0].mxu0
      %1530 = vmatprep.mubr.bf16.mxu0 %v1115
      %1531 = vmatmul.mubr.bf16.gmra.mrb[0].mxu0 %v827
      %v1532 = vpop.f32.mrb[0].mxu0
      %v1533 = vadd.f32 0.0, %v1532
      %v1534 = vpop.f32.mrb[0].mxu0
      %v1535 = vpop.f32.mrb[0].mxu0
      %v1536 = vadd.f32 0.0, %v1535
      %v1537 = vpop.f32.mrb[0].mxu0
      %1538 = vmatprep.mubr.bf16.mxu0 %v1118
      %1539 = vmatmul.mubr.bf16.gmra.mrb[0].mxu0 %v829
      %v1540 = vpop.f32.mrb[0].mxu0
      %v1541 = vadd.f32 0.0, %v1540
      %v1542 = vpop.f32.mrb[0].mxu0
      %v1543 = vpop.f32.mrb[0].mxu0
      %v1544 = vadd.f32 0.0, %v1543
      %v1545 = vpop.f32.mrb[0].mxu0
      %1546 = vmatprep.mubr.bf16.mxu0 %v1121
      %1547 = vmatmul.mubr.bf16.gmra.mrb[0].mxu0 %v831
      %v1548 = vpop.f32.mrb[0].mxu0
      %v1549 = vadd.f32 0.0, %v1548
      %v1550 = vpop.f32.mrb[0].mxu0
      %v1551 = vpop.f32.mrb[0].mxu0
      %v1552 = vadd.f32 0.0, %v1551
      %v1553 = vpop.f32.mrb[0].mxu0
      %1554 = vmatprep.mubr.bf16.mxu0 %v1124
      %1555 = vmatmul.mubr.bf16.gmra.mrb[0].mxu0 %v833
      %v1556 = vpop.f32.mrb[0].mxu0
      %v1557 = vadd.f32 0.0, %v1556
      %v1558 = vpop.f32.mrb[0].mxu0
      %v1559 = vpop.f32.mrb[0].mxu0
      %v1560 = vadd.f32 0.0, %v1559
      %v1561 = vpop.f32.mrb[0].mxu0
      %1562 = vmatprep.mubr.bf16.mxu0 %v1127
      %1563 = vmatmul.mubr.bf16.gmra.mrb[0].mxu0 %v835
      %v1564 = vpop.f32.mrb[0].mxu0
      %v1565 = vadd.f32 0.0, %v1564
      %v1566 = vpop.f32.mrb[0].mxu0
      %v1567 = vpop.f32.mrb[0].mxu0
      %v1568 = vadd.f32 0.0, %v1567
      %v1569 = vpop.f32.mrb[0].mxu0
      %1570 = vmatprep.mubr.bf16.mxu0 %v1130
      %1571 = vmatmul.mubr.bf16.gmra.mrb[0].mxu0 %v837
      %v1572 = vpop.f32.mrb[0].mxu0
      %v1573 = vadd.f32 0.0, %v1572
      %v1574 = vpop.f32.mrb[0].mxu0
      %v1575 = vpop.f32.mrb[0].mxu0
      %v1576 = vadd.f32 0.0, %v1575
      %v1577 = vpop.f32.mrb[0].mxu0
      %1578 = vmatprep.mubr.bf16.mxu0 %v1133
      %1579 = vmatmul.mubr.bf16.gmra.mrb[0].mxu0 %v839
      %v1580 = vpop.f32.mrb[0].mxu0
      %v1581 = vadd.f32 0.0, %v1580
      %v1582 = vpop.f32.mrb[0].mxu0
      %v1583 = vpop.f32.mrb[0].mxu0
      %v1584 = vadd.f32 0.0, %v1583
      %v1585 = vpop.f32.mrb[0].mxu0
      %1586 = vmatprep.mubr.bf16.mxu0 %v1136
      %1587 = vmatmul.mubr.bf16.gmra.mrb[0].mxu0 %v841
      %v1588 = vpop.f32.mrb[0].mxu0
      %v1589 = vadd.f32 0.0, %v1588
      %v1590 = vpop.f32.mrb[0].mxu0
      %v1591 = vpop.f32.mrb[0].mxu0
      %v1592 = vadd.f32 0.0, %v1591
      %v1593 = vpop.f32.mrb[0].mxu0
      %1594 = vmatprep.mubr.bf16.mxu0 %v1139
      %1595 = vmatmul.mubr.bf16.gmra.mrb[0].mxu0 %v843
      %v1596 = vpop.f32.mrb[0].mxu0
      %v1597 = vadd.f32 0.0, %v1596
      %v1598 = vpop.f32.mrb[0].mxu0
      %v1599 = vpop.f32.mrb[0].mxu0
      %v1600 = vadd.f32 0.0, %v1599
      %v1601 = vpop.f32.mrb[0].mxu0
      %1602 = vmatprep.mubr.bf16.mxu0 %v1142
      %1603 = vmatmul.mubr.bf16.gmra.mrb[0].mxu0 %v845
      %v1604 = vpop.f32.mrb[0].mxu0
      %v1605 = vadd.f32 0.0, %v1604
      %v1606 = vpop.f32.mrb[0].mxu0
      %v1607 = vpop.f32.mrb[0].mxu0
      %v1608 = vadd.f32 0.0, %v1607
      %v1609 = vpop.f32.mrb[0].mxu0
      %1610 = vmatprep.mubr.bf16.mxu0 %v1145
      %1611 = vmatmul.mubr.bf16.gmra.mrb[0].mxu0 %v847
      %v1612 = vpop.f32.mrb[0].mxu0
      %v1613 = vadd.f32 0.0, %v1612
      %v1614 = vpop.f32.mrb[0].mxu0
      %v1615 = vpop.f32.mrb[0].mxu0
      %v1616 = vadd.f32 0.0, %v1615
      %v1617 = vpop.f32.mrb[0].mxu0
      %1618 = vmatprep.mubr.bf16.mxu0 %v1148
      %1619 = vmatmul.mubr.bf16.gmra.mrb[0].mxu0 %v849
      %v1620 = vpop.f32.mrb[0].mxu0
      %v1621 = vadd.f32 0.0, %v1620
      %v1622 = vpop.f32.mrb[0].mxu0
      %v1623 = vpop.f32.mrb[0].mxu0
      %v1624 = vadd.f32 0.0, %v1623
      %v1625 = vpop.f32.mrb[0].mxu0
      %1626 = vmatprep.mubr.bf16.mxu0 %v1151
      %1627 = vmatmul.mubr.bf16.gmra.mrb[0].mxu0 %v851
      %v1628 = vpop.f32.mrb[0].mxu0
      %v1629 = vadd.f32 0.0, %v1628
      %v1630 = vpop.f32.mrb[0].mxu0
      %v1631 = vpop.f32.mrb[0].mxu0
      %v1632 = vadd.f32 0.0, %v1631
      %v1633 = vpop.f32.mrb[0].mxu0
      %1634 = vmatprep.mubr.bf16.mxu0 %v1154
      %1635 = vmatmul.mubr.bf16.gmra.mrb[0].mxu0 %v853
      %v1636 = vpop.f32.mrb[0].mxu0
      %v1637 = vadd.f32 0.0, %v1636
      %v1638 = vpop.f32.mrb[0].mxu0
      %v1639 = vpop.f32.mrb[0].mxu0
      %v1640 = vadd.f32 0.0, %v1639
      %v1641 = vpop.f32.mrb[0].mxu0
      %1642 = vmatprep.mubr.bf16.mxu0 %v1157
      %1643 = vmatmul.mubr.bf16.gmra.mrb[0].mxu0 %v855
      %v1644 = vpop.f32.mrb[0].mxu0
      %v1645 = vadd.f32 0.0, %v1644
      %v1646 = vpop.f32.mrb[0].mxu0
      %v1647 = vpop.f32.mrb[0].mxu0
      %v1648 = vadd.f32 0.0, %v1647
      %v1649 = vpop.f32.mrb[0].mxu0
      %1650 = vmatprep.mubr.bf16.mxu0 %v1160
      %1651 = vmatmul.mubr.bf16.gmra.mrb[0].mxu0 %v857
      %v1652 = vpop.f32.mrb[0].mxu0
      %v1653 = vadd.f32 0.0, %v1652
      %v1654 = vpop.f32.mrb[0].mxu0
      %v1655 = vpop.f32.mrb[0].mxu0
      %v1656 = vadd.f32 0.0, %v1655
      %v1657 = vpop.f32.mrb[0].mxu0
      %1658 = vmatprep.mubr.bf16.mxu0 %v1163
      %1659 = vmatmul.mubr.bf16.gmra.mrb[0].mxu0 %v859
      %v1660 = vpop.f32.mrb[0].mxu0
      %v1661 = vadd.f32 0.0, %v1660
      %v1662 = vpop.f32.mrb[0].mxu0
      %v1663 = vpop.f32.mrb[0].mxu0
      %v1664 = vadd.f32 0.0, %v1663
      %v1665 = vpop.f32.mrb[0].mxu0
      %1666 = vmatprep.mubr.bf16.mxu0 %v1166
      %1667 = vmatmul.mubr.bf16.gmra.mrb[0].mxu0 %v861
      %v1668 = vpop.f32.mrb[0].mxu0
      %v1669 = vadd.f32 0.0, %v1668
      %v1670 = vpop.f32.mrb[0].mxu0
      %v1671 = vpop.f32.mrb[0].mxu0
      %v1672 = vadd.f32 0.0, %v1671
      %v1673 = vpop.f32.mrb[0].mxu0
      %1674 = vmatprep.mubr.bf16.mxu0 %v1169
      %1675 = vmatmul.mubr.bf16.gmra.mrb[0].mxu0 %v863
      %v1676 = vpop.f32.mrb[0].mxu0
      %v1677 = vadd.f32 0.0, %v1676
      %v1678 = vpop.f32.mrb[0].mxu0
      %v1679 = vpop.f32.mrb[0].mxu0
      %v1680 = vadd.f32 0.0, %v1679
      %v1681 = vpop.f32.mrb[0].mxu0
      %1682 = vmatprep.mubr.bf16.mxu0 %v1172
      %1683 = vmatmul.mubr.bf16.gmra.mrb[0].mxu0 %v865
      %v1684 = vpop.f32.mrb[0].mxu0
      %v1685 = vadd.f32 0.0, %v1684
      %v1686 = vpop.f32.mrb[0].mxu0
      %v1687 = vpop.f32.mrb[0].mxu0
      %v1688 = vadd.f32 0.0, %v1687
      %v1689 = vpop.f32.mrb[0].mxu0
      %1690 = vmatprep.mubr.bf16.mxu0 %v1175
      %1691 = vmatmul.mubr.bf16.gmra.mrb[0].mxu0 %v867
      %v1692 = vpop.f32.mrb[0].mxu0
      %v1693 = vadd.f32 0.0, %v1692
      %v1694 = vpop.f32.mrb[0].mxu0
      %v1695 = vpop.f32.mrb[0].mxu0
      %v1696 = vadd.f32 0.0, %v1695
      %v1697 = vpop.f32.mrb[0].mxu0
      %1698 = vmatprep.mubr.bf16.mxu0 %v1178
      %1699 = vmatmul.mubr.bf16.gmra.mrb[0].mxu0 %v869
      %v1700 = vpop.f32.mrb[0].mxu0
      %v1701 = vadd.f32 0.0, %v1700
      %v1702 = vpop.f32.mrb[0].mxu0
      %v1703 = vpop.f32.mrb[0].mxu0
      %v1704 = vadd.f32 0.0, %v1703
      %v1705 = vpop.f32.mrb[0].mxu0
      %1706 = vmatprep.mubr.bf16.mxu0 %v1181
      %1707 = vmatmul.mubr.bf16.gmra.mrb[0].mxu0 %v871
      %v1708 = vpop.f32.mrb[0].mxu0
      %v1709 = vadd.f32 0.0, %v1708
      %v1710 = vpop.f32.mrb[0].mxu0
      %v1711 = vpop.f32.mrb[0].mxu0
      %v1712 = vadd.f32 0.0, %v1711
      %v1713 = vpop.f32.mrb[0].mxu0
      %1714 = vmatprep.mubr.bf16.mxu0 %v1184
      %1715 = vmatmul.mubr.bf16.gmra.mrb[0].mxu0 %v873
      %v1716 = vpop.f32.mrb[0].mxu0
      %v1717 = vadd.f32 0.0, %v1716
      %v1718 = vpop.f32.mrb[0].mxu0
      %v1719 = vpop.f32.mrb[0].mxu0
      %v1720 = vadd.f32 0.0, %v1719
      %v1721 = vpop.f32.mrb[0].mxu0
      %1722 = vmatprep.mubr.bf16.mxu0 %v1187
      %1723 = vmatmul.mubr.bf16.gmra.mrb[0].mxu0 %v875
      %v1724 = vpop.f32.mrb[0].mxu0
      %v1725 = vadd.f32 0.0, %v1724
      %v1726 = vpop.f32.mrb[0].mxu0
      %v1727 = vpop.f32.mrb[0].mxu0
      %v1728 = vadd.f32 0.0, %v1727
      %v1729 = vpop.f32.mrb[0].mxu0
      %1730 = vmatprep.mubr.bf16.mxu0 %v1190
      %1731 = vmatmul.mubr.bf16.gmra.mrb[0].mxu0 %v877
      %v1732 = vpop.f32.mrb[0].mxu0
      %v1733 = vadd.f32 0.0, %v1732
      %v1734 = vpop.f32.mrb[0].mxu0
      %v1735 = vpop.f32.mrb[0].mxu0
      %v1736 = vadd.f32 0.0, %v1735
      %v1737 = vpop.f32.mrb[0].mxu0
      %1738 = vmatprep.mubr.bf16.mxu0 %v1193
      %1739 = vmatmul.mubr.bf16.gmra.mrb[0].mxu0 %v879
      %v1740 = vpop.f32.mrb[0].mxu0
      %v1741 = vadd.f32 0.0, %v1740
      %v1742 = vpop.f32.mrb[0].mxu0
      %v1743 = vpop.f32.mrb[0].mxu0
      %v1744 = vadd.f32 0.0, %v1743
      %v1745 = vpop.f32.mrb[0].mxu0
      %1746 = vdwg.mxu0
      %v1747 = vpack.c.bf16 %v1240, %v1237
      %v1748 = vpack.c.bf16 %v1248, %v1245
      %v1749 = vpack.c.bf16 %v1256, %v1253
      %v1750 = vpack.c.bf16 %v1264, %v1261
      %v1751 = vpack.c.bf16 %v1272, %v1269
      %v1752 = vpack.c.bf16 %v1280, %v1277
      %v1753 = vpack.c.bf16 %v1288, %v1285
      %v1754 = vpack.c.bf16 %v1296, %v1293
      %v1755 = vpack.c.bf16 %v1304, %v1301
      %v1756 = vpack.c.bf16 %v1312, %v1309
      %v1757 = vpack.c.bf16 %v1320, %v1317
      %v1758 = vpack.c.bf16 %v1328, %v1325
      %v1759 = vpack.c.bf16 %v1336, %v1333
      %v1760 = vpack.c.bf16 %v1344, %v1341
      %v1761 = vpack.c.bf16 %v1352, %v1349
      %v1762 = vpack.c.bf16 %v1360, %v1357
      %v1763 = vpack.c.bf16 %v1368, %v1365
      %v1764 = vpack.c.bf16 %v1376, %v1373
      %v1765 = vpack.c.bf16 %v1384, %v1381
      %v1766 = vpack.c.bf16 %v1392, %v1389
      %v1767 = vpack.c.bf16 %v1400, %v1397
      %v1768 = vpack.c.bf16 %v1408, %v1405
      %v1769 = vpack.c.bf16 %v1416, %v1413
      %v1770 = vpack.c.bf16 %v1424, %v1421
      %v1771 = vpack.c.bf16 %v1432, %v1429
      %v1772 = vpack.c.bf16 %v1440, %v1437
      %v1773 = vpack.c.bf16 %v1448, %v1445
      %v1774 = vpack.c.bf16 %v1456, %v1453
      %v1775 = vpack.c.bf16 %v1464, %v1461
      %v1776 = vpack.c.bf16 %v1472, %v1469
      %v1777 = vpack.c.bf16 %v1480, %v1477
      %v1778 = vpack.c.bf16 %v1488, %v1485
      %v1779 = vpack.c.bf16 %v1496, %v1493
      %v1780 = vpack.c.bf16 %v1504, %v1501
      %v1781 = vpack.c.bf16 %v1512, %v1509
      %v1782 = vpack.c.bf16 %v1520, %v1517
      %v1783 = vpack.c.bf16 %v1528, %v1525
      %v1784 = vpack.c.bf16 %v1536, %v1533
      %v1785 = vpack.c.bf16 %v1544, %v1541
      %v1786 = vpack.c.bf16 %v1552, %v1549
      %v1787 = vpack.c.bf16 %v1560, %v1557
      %v1788 = vpack.c.bf16 %v1568, %v1565
      %v1789 = vpack.c.bf16 %v1576, %v1573
      %v1790 = vpack.c.bf16 %v1584, %v1581
      %v1791 = vpack.c.bf16 %v1592, %v1589
      %v1792 = vpack.c.bf16 %v1600, %v1597
      %v1793 = vpack.c.bf16 %v1608, %v1605
      %v1794 = vpack.c.bf16 %v1616, %v1613
      %v1795 = vpack.c.bf16 %v1624, %v1621
      %v1796 = vpack.c.bf16 %v1632, %v1629
      %v1797 = vpack.c.bf16 %v1640, %v1637
      %v1798 = vpack.c.bf16 %v1648, %v1645
      %v1799 = vpack.c.bf16 %v1656, %v1653
      %v1800 = vpack.c.bf16 %v1664, %v1661
      %v1801 = vpack.c.bf16 %v1672, %v1669
      %v1802 = vpack.c.bf16 %v1680, %v1677
      %v1803 = vpack.c.bf16 %v1688, %v1685
      %v1804 = vpack.c.bf16 %v1696, %v1693
      %v1805 = vpack.c.bf16 %v1704, %v1701
      %v1806 = vpack.c.bf16 %v1712, %v1709
      %v1807 = vpack.c.bf16 %v1720, %v1717
      %v1808 = vpack.c.bf16 %v1728, %v1725
      %v1809 = vpack.c.bf16 %v1736, %v1733
      %v1810 = vpack.c.bf16 %v1744, %v1741
      %v1875 = vunpack.c.l.b16 %v1747
      %v1876 = vunpack.c.h.b16 %v1747
      %v1877 = vunpack.c.l.b16 %v1748
      %v1878 = vunpack.c.h.b16 %v1748
      %v1879 = vunpack.c.l.b16 %v1749
      %v1880 = vunpack.c.h.b16 %v1749
      %v1881 = vunpack.c.l.b16 %v1750
      %v1882 = vunpack.c.h.b16 %v1750
      %v1883 = vunpack.c.l.b16 %v1751
      %v1884 = vunpack.c.h.b16 %v1751
      %v1885 = vunpack.c.l.b16 %v1752
      %v1886 = vunpack.c.h.b16 %v1752
      %v1887 = vunpack.c.l.b16 %v1753
      %v1888 = vunpack.c.h.b16 %v1753
      %v1889 = vunpack.c.l.b16 %v1754
      %v1890 = vunpack.c.h.b16 %v1754
      %v1891 = vunpack.c.l.b16 %v1755
      %v1892 = vunpack.c.h.b16 %v1755
      %v1893 = vunpack.c.l.b16 %v1756
      %v1894 = vunpack.c.h.b16 %v1756
      %v1895 = vunpack.c.l.b16 %v1757
      %v1896 = vunpack.c.h.b16 %v1757
      %v1897 = vunpack.c.l.b16 %v1758
      %v1898 = vunpack.c.h.b16 %v1758
      %v1899 = vunpack.c.l.b16 %v1759
      %v1900 = vunpack.c.h.b16 %v1759
      %v1901 = vunpack.c.l.b16 %v1760
      %v1902 = vunpack.c.h.b16 %v1760
      %v1903 = vunpack.c.l.b16 %v1761
      %v1904 = vunpack.c.h.b16 %v1761
      %v1905 = vunpack.c.l.b16 %v1762
      %v1906 = vunpack.c.h.b16 %v1762
      %v1907 = vunpack.c.l.b16 %v1763
      %v1908 = vunpack.c.h.b16 %v1763
      %v1909 = vunpack.c.l.b16 %v1764
      %v1910 = vunpack.c.h.b16 %v1764
      %v1911 = vunpack.c.l.b16 %v1765
      %v1912 = vunpack.c.h.b16 %v1765
      %v1913 = vunpack.c.l.b16 %v1766
      %v1914 = vunpack.c.h.b16 %v1766
      %v1915 = vunpack.c.l.b16 %v1767
      %v1916 = vunpack.c.h.b16 %v1767
      %v1917 = vunpack.c.l.b16 %v1768
      %v1918 = vunpack.c.h.b16 %v1768
      %v1919 = vunpack.c.l.b16 %v1769
      %v1920 = vunpack.c.h.b16 %v1769
      %v1921 = vunpack.c.l.b16 %v1770
      %v1922 = vunpack.c.h.b16 %v1770
      %v1923 = vunpack.c.l.b16 %v1771
      %v1924 = vunpack.c.h.b16 %v1771
      %v1925 = vunpack.c.l.b16 %v1772
      %v1926 = vunpack.c.h.b16 %v1772
      %v1927 = vunpack.c.l.b16 %v1773
      %v1928 = vunpack.c.h.b16 %v1773
      %v1929 = vunpack.c.l.b16 %v1774
      %v1930 = vunpack.c.h.b16 %v1774
      %v1931 = vunpack.c.l.b16 %v1775
      %v1932 = vunpack.c.h.b16 %v1775
      %v1933 = vunpack.c.l.b16 %v1776
      %v1934 = vunpack.c.h.b16 %v1776
      %v1935 = vunpack.c.l.b16 %v1777
      %v1936 = vunpack.c.h.b16 %v1777
      %v1937 = vunpack.c.l.b16 %v1778
      %v1938 = vunpack.c.h.b16 %v1778
      %v1939 = vunpack.c.l.b16 %v1779
      %v1940 = vunpack.c.h.b16 %v1779
      %v1941 = vunpack.c.l.b16 %v1780
      %v1942 = vunpack.c.h.b16 %v1780
      %v1943 = vunpack.c.l.b16 %v1781
      %v1944 = vunpack.c.h.b16 %v1781
      %v1945 = vunpack.c.l.b16 %v1782
      %v1946 = vunpack.c.h.b16 %v1782
      %v1947 = vunpack.c.l.b16 %v1783
      %v1948 = vunpack.c.h.b16 %v1783
      %v1949 = vunpack.c.l.b16 %v1784
      %v1950 = vunpack.c.h.b16 %v1784
      %v1951 = vunpack.c.l.b16 %v1785
      %v1952 = vunpack.c.h.b16 %v1785
      %v1953 = vunpack.c.l.b16 %v1786
      %v1954 = vunpack.c.h.b16 %v1786
      %v1955 = vunpack.c.l.b16 %v1787
      %v1956 = vunpack.c.h.b16 %v1787
      %v1957 = vunpack.c.l.b16 %v1788
      %v1958 = vunpack.c.h.b16 %v1788
      %v1959 = vunpack.c.l.b16 %v1789
      %v1960 = vunpack.c.h.b16 %v1789
      %v1961 = vunpack.c.l.b16 %v1790
      %v1962 = vunpack.c.h.b16 %v1790
      %v1963 = vunpack.c.l.b16 %v1791
      %v1964 = vunpack.c.h.b16 %v1791
      %v1965 = vunpack.c.l.b16 %v1792
      %v1966 = vunpack.c.h.b16 %v1792
      %v1967 = vunpack.c.l.b16 %v1793
      %v1968 = vunpack.c.h.b16 %v1793
      %v1969 = vunpack.c.l.b16 %v1794
      %v1970 = vunpack.c.h.b16 %v1794
      %v1971 = vunpack.c.l.b16 %v1795
      %v1972 = vunpack.c.h.b16 %v1795
      %v1973 = vunpack.c.l.b16 %v1796
      %v1974 = vunpack.c.h.b16 %v1796
      %v1975 = vunpack.c.l.b16 %v1797
      %v1976 = vunpack.c.h.b16 %v1797
      %v1977 = vunpack.c.l.b16 %v1798
      %v1978 = vunpack.c.h.b16 %v1798
      %v1979 = vunpack.c.l.b16 %v1799
      %v1980 = vunpack.c.h.b16 %v1799
      %v1981 = vunpack.c.l.b16 %v1800
      %v1982 = vunpack.c.h.b16 %v1800
      %v1983 = vunpack.c.l.b16 %v1801
      %v1984 = vunpack.c.h.b16 %v1801
      %v1985 = vunpack.c.l.b16 %v1802
      %v1986 = vunpack.c.h.b16 %v1802
      %v1987 = vunpack.c.l.b16 %v1803
      %v1988 = vunpack.c.h.b16 %v1803
      %v1989 = vunpack.c.l.b16 %v1804
      %v1990 = vunpack.c.h.b16 %v1804
      %v1991 = vunpack.c.l.b16 %v1805
      %v1992 = vunpack.c.h.b16 %v1805
      %v1993 = vunpack.c.l.b16 %v1806
      %v1994 = vunpack.c.h.b16 %v1806
      %v1995 = vunpack.c.l.b16 %v1807
      %v1996 = vunpack.c.h.b16 %v1807
      %v1997 = vunpack.c.l.b16 %v1808
      %v1998 = vunpack.c.h.b16 %v1808
      %v1999 = vunpack.c.l.b16 %v1809
      %v2000 = vunpack.c.h.b16 %v1809
      %v2001 = vunpack.c.l.b16 %v1810
      %v2002 = vunpack.c.h.b16 %v1810
      %v2003 = vpack.c.b16 %v1875, %v1875
      %v2004 = vpack.c.b16 %v1876, %v1876
      %v2005 = vpack.c.b16 %v1877, %v1877
      %v2006 = vpack.c.b16 %v1878, %v1878
      %v2007 = vpack.c.b16 %v1879, %v1879
      %v2008 = vpack.c.b16 %v1880, %v1880
      %v2009 = vpack.c.b16 %v1881, %v1881
      %v2010 = vpack.c.b16 %v1882, %v1882
      %v2011 = vpack.c.b16 %v1883, %v1883
      %v2012 = vpack.c.b16 %v1884, %v1884
      %v2013 = vpack.c.b16 %v1885, %v1885
      %v2014 = vpack.c.b16 %v1886, %v1886
      %v2015 = vpack.c.b16 %v1887, %v1887
      %v2016 = vpack.c.b16 %v1888, %v1888
      %v2017 = vpack.c.b16 %v1889, %v1889
      %v2018 = vpack.c.b16 %v1890, %v1890
      %v2019 = vpack.c.b16 %v1891, %v1891
      %v2020 = vpack.c.b16 %v1892, %v1892
      %v2021 = vpack.c.b16 %v1893, %v1893
      %v2022 = vpack.c.b16 %v1894, %v1894
      %v2023 = vpack.c.b16 %v1895, %v1895
      %v2024 = vpack.c.b16 %v1896, %v1896
      %v2025 = vpack.c.b16 %v1897, %v1897
      %v2026 = vpack.c.b16 %v1898, %v1898
      %v2027 = vpack.c.b16 %v1899, %v1899
      %v2028 = vpack.c.b16 %v1900, %v1900
      %v2029 = vpack.c.b16 %v1901, %v1901
      %v2030 = vpack.c.b16 %v1902, %v1902
      %v2031 = vpack.c.b16 %v1903, %v1903
      %v2032 = vpack.c.b16 %v1904, %v1904
      %v2033 = vpack.c.b16 %v1905, %v1905
      %v2034 = vpack.c.b16 %v1906, %v1906
      %v2035 = vpack.c.b16 %v1907, %v1907
      %v2036 = vpack.c.b16 %v1908, %v1908
      %v2037 = vpack.c.b16 %v1909, %v1909
      %v2038 = vpack.c.b16 %v1910, %v1910
      %v2039 = vpack.c.b16 %v1911, %v1911
      %v2040 = vpack.c.b16 %v1912, %v1912
      %v2041 = vpack.c.b16 %v1913, %v1913
      %v2042 = vpack.c.b16 %v1914, %v1914
      %v2043 = vpack.c.b16 %v1915, %v1915
      %v2044 = vpack.c.b16 %v1916, %v1916
      %v2045 = vpack.c.b16 %v1917, %v1917
      %v2046 = vpack.c.b16 %v1918, %v1918
      %v2047 = vpack.c.b16 %v1919, %v1919
      %v2048 = vpack.c.b16 %v1920, %v1920
      %v2049 = vpack.c.b16 %v1921, %v1921
      %v2050 = vpack.c.b16 %v1922, %v1922
      %v2051 = vpack.c.b16 %v1923, %v1923
      %v2052 = vpack.c.b16 %v1924, %v1924
      %v2053 = vpack.c.b16 %v1925, %v1925
      %v2054 = vpack.c.b16 %v1926, %v1926
      %v2055 = vpack.c.b16 %v1927, %v1927
      %v2056 = vpack.c.b16 %v1928, %v1928
      %v2057 = vpack.c.b16 %v1929, %v1929
      %v2058 = vpack.c.b16 %v1930, %v1930
      %v2059 = vpack.c.b16 %v1931, %v1931
      %v2060 = vpack.c.b16 %v1932, %v1932
      %v2061 = vpack.c.b16 %v1933, %v1933
      %v2062 = vpack.c.b16 %v1934, %v1934
      %v2063 = vpack.c.b16 %v1935, %v1935
      %v2064 = vpack.c.b16 %v1936, %v1936
      %v2065 = vpack.c.b16 %v1937, %v1937
      %v2066 = vpack.c.b16 %v1938, %v1938
      %v2067 = vpack.c.b16 %v1939, %v1939
      %v2068 = vpack.c.b16 %v1940, %v1940
      %v2069 = vpack.c.b16 %v1941, %v1941
      %v2070 = vpack.c.b16 %v1942, %v1942
      %v2071 = vpack.c.b16 %v1943, %v1943
      %v2072 = vpack.c.b16 %v1944, %v1944
      %v2073 = vpack.c.b16 %v1945, %v1945
      %v2074 = vpack.c.b16 %v1946, %v1946
      %v2075 = vpack.c.b16 %v1947, %v1947
      %v2076 = vpack.c.b16 %v1948, %v1948
      %v2077 = vpack.c.b16 %v1949, %v1949
      %v2078 = vpack.c.b16 %v1950, %v1950
      %v2079 = vpack.c.b16 %v1951, %v1951
      %v2080 = vpack.c.b16 %v1952, %v1952
      %v2081 = vpack.c.b16 %v1953, %v1953
      %v2082 = vpack.c.b16 %v1954, %v1954
      %v2083 = vpack.c.b16 %v1955, %v1955
      %v2084 = vpack.c.b16 %v1956, %v1956
      %v2085 = vpack.c.b16 %v1957, %v1957
      %v2086 = vpack.c.b16 %v1958, %v1958
      %v2087 = vpack.c.b16 %v1959, %v1959
      %v2088 = vpack.c.b16 %v1960, %v1960
      %v2089 = vpack.c.b16 %v1961, %v1961
      %v2090 = vpack.c.b16 %v1962, %v1962
      %v2091 = vpack.c.b16 %v1963, %v1963
      %v2092 = vpack.c.b16 %v1964, %v1964
      %v2093 = vpack.c.b16 %v1965, %v1965
      %v2094 = vpack.c.b16 %v1966, %v1966
      %v2095 = vpack.c.b16 %v1967, %v1967
      %v2096 = vpack.c.b16 %v1968, %v1968
      %v2097 = vpack.c.b16 %v1969, %v1969
      %v2098 = vpack.c.b16 %v1970, %v1970
      %v2099 = vpack.c.b16 %v1971, %v1971
      %v2100 = vpack.c.b16 %v1972, %v1972
      %v2101 = vpack.c.b16 %v1973, %v1973
      %v2102 = vpack.c.b16 %v1974, %v1974
      %v2103 = vpack.c.b16 %v1975, %v1975
      %v2104 = vpack.c.b16 %v1976, %v1976
      %v2105 = vpack.c.b16 %v1977, %v1977
      %v2106 = vpack.c.b16 %v1978, %v1978
      %v2107 = vpack.c.b16 %v1979, %v1979
      %v2108 = vpack.c.b16 %v1980, %v1980
      %v2109 = vpack.c.b16 %v1981, %v1981
      %v2110 = vpack.c.b16 %v1982, %v1982
      %v2111 = vpack.c.b16 %v1983, %v1983
      %v2112 = vpack.c.b16 %v1984, %v1984
      %v2113 = vpack.c.b16 %v1985, %v1985
      %v2114 = vpack.c.b16 %v1986, %v1986
      %v2115 = vpack.c.b16 %v1987, %v1987
      %v2116 = vpack.c.b16 %v1988, %v1988
      %v2117 = vpack.c.b16 %v1989, %v1989
      %v2118 = vpack.c.b16 %v1990, %v1990
      %v2119 = vpack.c.b16 %v1991, %v1991
      %v2120 = vpack.c.b16 %v1992, %v1992
      %v2121 = vpack.c.b16 %v1993, %v1993
      %v2122 = vpack.c.b16 %v1994, %v1994
      %v2123 = vpack.c.b16 %v1995, %v1995
      %v2124 = vpack.c.b16 %v1996, %v1996
      %v2125 = vpack.c.b16 %v1997, %v1997
      %v2126 = vpack.c.b16 %v1998, %v1998
      %v2127 = vpack.c.b16 %v1999, %v1999
      %v2128 = vpack.c.b16 %v2000, %v2000
      %v2129 = vpack.c.b16 %v2001, %v2001
      %v2130 = vpack.c.b16 %v2002, %v2002
      %vm2259 = vcmask 519168
      %2260 = vst.msk [vmem:[%s213] sm:$0xf] %vm2259, %v2003
      %2261 = vst.msk [vmem:[%s213 + $0x4] sm:$0xf] %vm2259, %v2004
      %2262 = vst.msk [vmem:[%s213 + $0x8] sm:$0xf] %vm2259, %v2005
      %2263 = vst.msk [vmem:[%s213 + $0xc] sm:$0xf] %vm2259, %v2006
      %2264 = vst.msk [vmem:[%s213 + $0x10] sm:$0xf] %vm2259, %v2007
      %2265 = vst.msk [vmem:[%s213 + $0x14] sm:$0xf] %vm2259, %v2008
      %2266 = vst.msk [vmem:[%s213 + $0x18] sm:$0xf] %vm2259, %v2009
      %2267 = vst.msk [vmem:[%s213 + $0x1c] sm:$0xf] %vm2259, %v2010
      %2268 = vst.msk [vmem:[%s213 + $0x20] sm:$0xf] %vm2259, %v2011
      %2269 = vst.msk [vmem:[%s213 + $0x24] sm:$0xf] %vm2259, %v2012
      %2270 = vst.msk [vmem:[%s213 + $0x28] sm:$0xf] %vm2259, %v2013
      %2271 = vst.msk [vmem:[%s213 + $0x2c] sm:$0xf] %vm2259, %v2014
      %2272 = vst.msk [vmem:[%s213 + $0x30] sm:$0xf] %vm2259, %v2015
      %2273 = vst.msk [vmem:[%s213 + $0x34] sm:$0xf] %vm2259, %v2016
      %2274 = vst.msk [vmem:[%s213 + $0x38] sm:$0xf] %vm2259, %v2017
      %2275 = vst.msk [vmem:[%s213 + $0x3c] sm:$0xf] %vm2259, %v2018
      %2276 = vst.msk [vmem:[%s213 + $0x40] sm:$0xf] %vm2259, %v2019
      %2277 = vst.msk [vmem:[%s213 + $0x44] sm:$0xf] %vm2259, %v2020
      %2278 = vst.msk [vmem:[%s213 + $0x48] sm:$0xf] %vm2259, %v2021
      %2279 = vst.msk [vmem:[%s213 + $0x4c] sm:$0xf] %vm2259, %v2022
      %2280 = vst.msk [vmem:[%s213 + $0x50] sm:$0xf] %vm2259, %v2023
      %2281 = vst.msk [vmem:[%s213 + $0x54] sm:$0xf] %vm2259, %v2024
      %2282 = vst.msk [vmem:[%s213 + $0x58] sm:$0xf] %vm2259, %v2025
      %2283 = vst.msk [vmem:[%s213 + $0x5c] sm:$0xf] %vm2259, %v2026
      %2284 = vst.msk [vmem:[%s213 + $0x60] sm:$0xf] %vm2259, %v2027
      %2285 = vst.msk [vmem:[%s213 + $0x64] sm:$0xf] %vm2259, %v2028
      %2286 = vst.msk [vmem:[%s213 + $0x68] sm:$0xf] %vm2259, %v2029
      %2287 = vst.msk [vmem:[%s213 + $0x6c] sm:$0xf] %vm2259, %v2030
      %2288 = vst.msk [vmem:[%s213 + $0x70] sm:$0xf] %vm2259, %v2031
      %2289 = vst.msk [vmem:[%s213 + $0x74] sm:$0xf] %vm2259, %v2032
      %2290 = vst.msk [vmem:[%s213 + $0x78] sm:$0xf] %vm2259, %v2033
      %2291 = vst.msk [vmem:[%s213 + $0x7c] sm:$0xf] %vm2259, %v2034
      %2292 = vst.msk [vmem:[%s213 + $0x80] sm:$0xf] %vm2259, %v2035
      %2293 = vst.msk [vmem:[%s213 + $0x84] sm:$0xf] %vm2259, %v2036
      %2294 = vst.msk [vmem:[%s213 + $0x88] sm:$0xf] %vm2259, %v2037
      %2295 = vst.msk [vmem:[%s213 + $0x8c] sm:$0xf] %vm2259, %v2038
      %2296 = vst.msk [vmem:[%s213 + $0x90] sm:$0xf] %vm2259, %v2039
      %2297 = vst.msk [vmem:[%s213 + $0x94] sm:$0xf] %vm2259, %v2040
      %2298 = vst.msk [vmem:[%s213 + $0x98] sm:$0xf] %vm2259, %v2041
      %2299 = vst.msk [vmem:[%s213 + $0x9c] sm:$0xf] %vm2259, %v2042
      %2300 = vst.msk [vmem:[%s213 + $0xa0] sm:$0xf] %vm2259, %v2043
      %2301 = vst.msk [vmem:[%s213 + $0xa4] sm:$0xf] %vm2259, %v2044
      %2302 = vst.msk [vmem:[%s213 + $0xa8] sm:$0xf] %vm2259, %v2045
      %2303 = vst.msk [vmem:[%s213 + $0xac] sm:$0xf] %vm2259, %v2046
      %2304 = vst.msk [vmem:[%s213 + $0xb0] sm:$0xf] %vm2259, %v2047
      %2305 = vst.msk [vmem:[%s213 + $0xb4] sm:$0xf] %vm2259, %v2048
      %2306 = vst.msk [vmem:[%s213 + $0xb8] sm:$0xf] %vm2259, %v2049
      %2307 = vst.msk [vmem:[%s213 + $0xbc] sm:$0xf] %vm2259, %v2050
      %2308 = vst.msk [vmem:[%s213 + $0xc0] sm:$0xf] %vm2259, %v2051
      %2309 = vst.msk [vmem:[%s213 + $0xc4] sm:$0xf] %vm2259, %v2052
      %2310 = vst.msk [vmem:[%s213 + $0xc8] sm:$0xf] %vm2259, %v2053
      %2311 = vst.msk [vmem:[%s213 + $0xcc] sm:$0xf] %vm2259, %v2054
      %2312 = vst.msk [vmem:[%s213 + $0xd0] sm:$0xf] %vm2259, %v2055
      %2313 = vst.msk [vmem:[%s213 + $0xd4] sm:$0xf] %vm2259, %v2056
      %2314 = vst.msk [vmem:[%s213 + $0xd8] sm:$0xf] %vm2259, %v2057
      %2315 = vst.msk [vmem:[%s213 + $0xdc] sm:$0xf] %vm2259, %v2058
      %2316 = vst.msk [vmem:[%s213 + $0xe0] sm:$0xf] %vm2259, %v2059
      %2317 = vst.msk [vmem:[%s213 + $0xe4] sm:$0xf] %vm2259, %v2060
      %2318 = vst.msk [vmem:[%s213 + $0xe8] sm:$0xf] %vm2259, %v2061
      %2319 = vst.msk [vmem:[%s213 + $0xec] sm:$0xf] %vm2259, %v2062
      %2320 = vst.msk [vmem:[%s213 + $0xf0] sm:$0xf] %vm2259, %v2063
      %2321 = vst.msk [vmem:[%s213 + $0xf4] sm:$0xf] %vm2259, %v2064
      %2322 = vst.msk [vmem:[%s213 + $0xf8] sm:$0xf] %vm2259, %v2065
      %2323 = vst.msk [vmem:[%s213 + $0xfc] sm:$0xf] %vm2259, %v2066
      %2324 = vst.msk [vmem:[%s213 + $0x100] sm:$0xf] %vm2259, %v2067
      %2325 = vst.msk [vmem:[%s213 + $0x104] sm:$0xf] %vm2259, %v2068
      %2326 = vst.msk [vmem:[%s213 + $0x108] sm:$0xf] %vm2259, %v2069
      %2327 = vst.msk [vmem:[%s213 + $0x10c] sm:$0xf] %vm2259, %v2070
      %2328 = vst.msk [vmem:[%s213 + $0x110] sm:$0xf] %vm2259, %v2071
      %2329 = vst.msk [vmem:[%s213 + $0x114] sm:$0xf] %vm2259, %v2072
      %2330 = vst.msk [vmem:[%s213 + $0x118] sm:$0xf] %vm2259, %v2073
      %2331 = vst.msk [vmem:[%s213 + $0x11c] sm:$0xf] %vm2259, %v2074
      %2332 = vst.msk [vmem:[%s213 + $0x120] sm:$0xf] %vm2259, %v2075
      %2333 = vst.msk [vmem:[%s213 + $0x124] sm:$0xf] %vm2259, %v2076
      %2334 = vst.msk [vmem:[%s213 + $0x128] sm:$0xf] %vm2259, %v2077
      %2335 = vst.msk [vmem:[%s213 + $0x12c] sm:$0xf] %vm2259, %v2078
      %2336 = vst.msk [vmem:[%s213 + $0x130] sm:$0xf] %vm2259, %v2079
      %2337 = vst.msk [vmem:[%s213 + $0x134] sm:$0xf] %vm2259, %v2080
      %2338 = vst.msk [vmem:[%s213 + $0x138] sm:$0xf] %vm2259, %v2081
      %2339 = vst.msk [vmem:[%s213 + $0x13c] sm:$0xf] %vm2259, %v2082
      %2340 = vst.msk [vmem:[%s213 + $0x140] sm:$0xf] %vm2259, %v2083
      %2341 = vst.msk [vmem:[%s213 + $0x144] sm:$0xf] %vm2259, %v2084
      %2342 = vst.msk [vmem:[%s213 + $0x148] sm:$0xf] %vm2259, %v2085
      %2343 = vst.msk [vmem:[%s213 + $0x14c] sm:$0xf] %vm2259, %v2086
      %2344 = vst.msk [vmem:[%s213 + $0x150] sm:$0xf] %vm2259, %v2087
      %2345 = vst.msk [vmem:[%s213 + $0x154] sm:$0xf] %vm2259, %v2088
      %2346 = vst.msk [vmem:[%s213 + $0x158] sm:$0xf] %vm2259, %v2089
      %2347 = vst.msk [vmem:[%s213 + $0x15c] sm:$0xf] %vm2259, %v2090
      %2348 = vst.msk [vmem:[%s213 + $0x160] sm:$0xf] %vm2259, %v2091
      %2349 = vst.msk [vmem:[%s213 + $0x164] sm:$0xf] %vm2259, %v2092
      %2350 = vst.msk [vmem:[%s213 + $0x168] sm:$0xf] %vm2259, %v2093
      %2351 = vst.msk [vmem:[%s213 + $0x16c] sm:$0xf] %vm2259, %v2094
      %2352 = vst.msk [vmem:[%s213 + $0x170] sm:$0xf] %vm2259, %v2095
      %2353 = vst.msk [vmem:[%s213 + $0x174] sm:$0xf] %vm2259, %v2096
      %2354 = vst.msk [vmem:[%s213 + $0x178] sm:$0xf] %vm2259, %v2097
      %2355 = vst.msk [vmem:[%s213 + $0x17c] sm:$0xf] %vm2259, %v2098
      %2356 = vst.msk [vmem:[%s213 + $0x180] sm:$0xf] %vm2259, %v2099
      %2357 = vst.msk [vmem:[%s213 + $0x184] sm:$0xf] %vm2259, %v2100
      %2358 = vst.msk [vmem:[%s213 + $0x188] sm:$0xf] %vm2259, %v2101
      %2359 = vst.msk [vmem:[%s213 + $0x18c] sm:$0xf] %vm2259, %v2102
      %2360 = vst.msk [vmem:[%s213 + $0x190] sm:$0xf] %vm2259, %v2103
      %2361 = vst.msk [vmem:[%s213 + $0x194] sm:$0xf] %vm2259, %v2104
      %2362 = vst.msk [vmem:[%s213 + $0x198] sm:$0xf] %vm2259, %v2105
      %2363 = vst.msk [vmem:[%s213 + $0x19c] sm:$0xf] %vm2259, %v2106
      %2364 = vst.msk [vmem:[%s213 + $0x1a0] sm:$0xf] %vm2259, %v2107
      %2365 = vst.msk [vmem:[%s213 + $0x1a4] sm:$0xf] %vm2259, %v2108
      %2366 = vst.msk [vmem:[%s213 + $0x1a8] sm:$0xf] %vm2259, %v2109
      %2367 = vst.msk [vmem:[%s213 + $0x1ac] sm:$0xf] %vm2259, %v2110
      %2368 = vst.msk [vmem:[%s213 + $0x1b0] sm:$0xf] %vm2259, %v2111
      %2369 = vst.msk [vmem:[%s213 + $0x1b4] sm:$0xf] %vm2259, %v2112
      %2370 = vst.msk [vmem:[%s213 + $0x1b8] sm:$0xf] %vm2259, %v2113
      %2371 = vst.msk [vmem:[%s213 + $0x1bc] sm:$0xf] %vm2259, %v2114
      %2372 = vst.msk [vmem:[%s213 + $0x1c0] sm:$0xf] %vm2259, %v2115
      %2373 = vst.msk [vmem:[%s213 + $0x1c4] sm:$0xf] %vm2259, %v2116
      %2374 = vst.msk [vmem:[%s213 + $0x1c8] sm:$0xf] %vm2259, %v2117
      %2375 = vst.msk [vmem:[%s213 + $0x1cc] sm:$0xf] %vm2259, %v2118
      %2376 = vst.msk [vmem:[%s213 + $0x1d0] sm:$0xf] %vm2259, %v2119
      %2377 = vst.msk [vmem:[%s213 + $0x1d4] sm:$0xf] %vm2259, %v2120
      %2378 = vst.msk [vmem:[%s213 + $0x1d8] sm:$0xf] %vm2259, %v2121
      %2379 = vst.msk [vmem:[%s213 + $0x1dc] sm:$0xf] %vm2259, %v2122
      %2380 = vst.msk [vmem:[%s213 + $0x1e0] sm:$0xf] %vm2259, %v2123
      %2381 = vst.msk [vmem:[%s213 + $0x1e4] sm:$0xf] %vm2259, %v2124
      %2382 = vst.msk [vmem:[%s213 + $0x1e8] sm:$0xf] %vm2259, %v2125
      %2383 = vst.msk [vmem:[%s213 + $0x1ec] sm:$0xf] %vm2259, %v2126
      %2384 = vst.msk [vmem:[%s213 + $0x1f0] sm:$0xf] %vm2259, %v2127
      %2385 = vst.msk [vmem:[%s213 + $0x1f4] sm:$0xf] %vm2259, %v2128
      %2386 = vst.msk [vmem:[%s213 + $0x1f8] sm:$0xf] %vm2259, %v2129
      %2387 = vst.msk [vmem:[%s213 + $0x1fc] sm:$0xf] %vm2259, %v2130
      %vm2388 = vcmask 523264
      %v2389 = vsel %vm2388, %v1237, 0.0
      %v2390 = vsel %vm2388, %v1240, 0.0
      %v2391 = vadd.f32 %v2389, %v2390
      %v2392 = vsel %vm2388, %v1245, 0.0
      %v2393 = vadd.f32 %v2391, %v2392
      %v2394 = vsel %vm2388, %v1248, 0.0
      %v2395 = vadd.f32 %v2393, %v2394
      %v2396 = vsel %vm2388, %v1253, 0.0
      %v2397 = vadd.f32 %v2395, %v2396
      %v2398 = vsel %vm2388, %v1256, 0.0
      %v2399 = vadd.f32 %v2397, %v2398
      %v2400 = vsel %vm2388, %v1261, 0.0
      %v2401 = vadd.f32 %v2399, %v2400
      %v2402 = vsel %vm2388, %v1264, 0.0
      %v2403 = vadd.f32 %v2401, %v2402
      %v2404 = vsel %vm2388, %v1269, 0.0
      %v2405 = vadd.f32 %v2403, %v2404
      %v2406 = vsel %vm2388, %v1272, 0.0
      %v2407 = vadd.f32 %v2405, %v2406
      %v2408 = vsel %vm2388, %v1277, 0.0
      %v2409 = vadd.f32 %v2407, %v2408
      %v2410 = vsel %vm2388, %v1280, 0.0
      %v2411 = vadd.f32 %v2409, %v2410
      %v2412 = vsel %vm2388, %v1285, 0.0
      %v2413 = vadd.f32 %v2411, %v2412
      %v2414 = vsel %vm2388, %v1288, 0.0
      %v2415 = vadd.f32 %v2413, %v2414
      %v2416 = vsel %vm2388, %v1293, 0.0
      %v2417 = vadd.f32 %v2415, %v2416
      %v2418 = vsel %vm2388, %v1296, 0.0
      %v2419 = vadd.f32 %v2417, %v2418
      %v2420 = vsel %vm2388, %v1301, 0.0
      %v2421 = vadd.f32 %v2419, %v2420
      %v2422 = vsel %vm2388, %v1304, 0.0
      %v2423 = vadd.f32 %v2421, %v2422
      %v2424 = vsel %vm2388, %v1309, 0.0
      %v2425 = vadd.f32 %v2423, %v2424
      %v2426 = vsel %vm2388, %v1312, 0.0
      %v2427 = vadd.f32 %v2425, %v2426
      %v2428 = vsel %vm2388, %v1317, 0.0
      %v2429 = vadd.f32 %v2427, %v2428
      %v2430 = vsel %vm2388, %v1320, 0.0
      %v2431 = vadd.f32 %v2429, %v2430
      %v2432 = vsel %vm2388, %v1325, 0.0
      %v2433 = vadd.f32 %v2431, %v2432
      %v2434 = vsel %vm2388, %v1328, 0.0
      %v2435 = vadd.f32 %v2433, %v2434
      %v2436 = vsel %vm2388, %v1333, 0.0
      %v2437 = vadd.f32 %v2435, %v2436
      %v2438 = vsel %vm2388, %v1336, 0.0
      %v2439 = vadd.f32 %v2437, %v2438
      %v2440 = vsel %vm2388, %v1341, 0.0
      %v2441 = vadd.f32 %v2439, %v2440
      %v2442 = vsel %vm2388, %v1344, 0.0
      %v2443 = vadd.f32 %v2441, %v2442
      %v2444 = vsel %vm2388, %v1349, 0.0
      %v2445 = vadd.f32 %v2443, %v2444
      %v2446 = vsel %vm2388, %v1352, 0.0
      %v2447 = vadd.f32 %v2445, %v2446
      %v2448 = vsel %vm2388, %v1357, 0.0
      %v2449 = vadd.f32 %v2447, %v2448
      %v2450 = vsel %vm2388, %v1360, 0.0
      %v2451 = vadd.f32 %v2449, %v2450
      %v2452 = vsel %vm2388, %v1365, 0.0
      %v2453 = vadd.f32 %v2451, %v2452
      %v2454 = vsel %vm2388, %v1368, 0.0
      %v2455 = vadd.f32 %v2453, %v2454
      %v2456 = vsel %vm2388, %v1373, 0.0
      %v2457 = vadd.f32 %v2455, %v2456
      %v2458 = vsel %vm2388, %v1376, 0.0
      %v2459 = vadd.f32 %v2457, %v2458
      %v2460 = vsel %vm2388, %v1381, 0.0
      %v2461 = vadd.f32 %v2459, %v2460
      %v2462 = vsel %vm2388, %v1384, 0.0
      %v2463 = vadd.f32 %v2461, %v2462
      %v2464 = vsel %vm2388, %v1389, 0.0
      %v2465 = vadd.f32 %v2463, %v2464
      %v2466 = vsel %vm2388, %v1392, 0.0
      %v2467 = vadd.f32 %v2465, %v2466
      %v2468 = vsel %vm2388, %v1397, 0.0
      %v2469 = vadd.f32 %v2467, %v2468
      %v2470 = vsel %vm2388, %v1400, 0.0
      %v2471 = vadd.f32 %v2469, %v2470
      %v2472 = vsel %vm2388, %v1405, 0.0
      %v2473 = vadd.f32 %v2471, %v2472
      %v2474 = vsel %vm2388, %v1408, 0.0
      %v2475 = vadd.f32 %v2473, %v2474
      %v2476 = vsel %vm2388, %v1413, 0.0
      %v2477 = vadd.f32 %v2475, %v2476
      %v2478 = vsel %vm2388, %v1416, 0.0
      %v2479 = vadd.f32 %v2477, %v2478
      %v2480 = vsel %vm2388, %v1421, 0.0
      %v2481 = vadd.f32 %v2479, %v2480
      %v2482 = vsel %vm2388, %v1424, 0.0
      %v2483 = vadd.f32 %v2481, %v2482
      %v2484 = vsel %vm2388, %v1429, 0.0
      %v2485 = vadd.f32 %v2483, %v2484
      %v2486 = vsel %vm2388, %v1432, 0.0
      %v2487 = vadd.f32 %v2485, %v2486
      %v2488 = vsel %vm2388, %v1437, 0.0
      %v2489 = vadd.f32 %v2487, %v2488
      %v2490 = vsel %vm2388, %v1440, 0.0
      %v2491 = vadd.f32 %v2489, %v2490
      %v2492 = vsel %vm2388, %v1445, 0.0
      %v2493 = vadd.f32 %v2491, %v2492
      %v2494 = vsel %vm2388, %v1448, 0.0
      %v2495 = vadd.f32 %v2493, %v2494
      %v2496 = vsel %vm2388, %v1453, 0.0
      %v2497 = vadd.f32 %v2495, %v2496
      %v2498 = vsel %vm2388, %v1456, 0.0
      %v2499 = vadd.f32 %v2497, %v2498
      %v2500 = vsel %vm2388, %v1461, 0.0
      %v2501 = vadd.f32 %v2499, %v2500
      %v2502 = vsel %vm2388, %v1464, 0.0
      %v2503 = vadd.f32 %v2501, %v2502
      %v2504 = vsel %vm2388, %v1469, 0.0
      %v2505 = vadd.f32 %v2503, %v2504
      %v2506 = vsel %vm2388, %v1472, 0.0
      %v2507 = vadd.f32 %v2505, %v2506
      %v2508 = vsel %vm2388, %v1477, 0.0
      %v2509 = vadd.f32 %v2507, %v2508
      %v2510 = vsel %vm2388, %v1480, 0.0
      %v2511 = vadd.f32 %v2509, %v2510
      %v2512 = vsel %vm2388, %v1485, 0.0
      %v2513 = vadd.f32 %v2511, %v2512
      %v2514 = vsel %vm2388, %v1488, 0.0
      %v2515 = vadd.f32 %v2513, %v2514
      %v2516 = vsel %vm2388, %v1493, 0.0
      %v2517 = vadd.f32 %v2515, %v2516
      %v2518 = vsel %vm2388, %v1496, 0.0
      %v2519 = vadd.f32 %v2517, %v2518
      %v2520 = vsel %vm2388, %v1501, 0.0
      %v2521 = vadd.f32 %v2519, %v2520
      %v2522 = vsel %vm2388, %v1504, 0.0
      %v2523 = vadd.f32 %v2521, %v2522
      %v2524 = vsel %vm2388, %v1509, 0.0
      %v2525 = vadd.f32 %v2523, %v2524
      %v2526 = vsel %vm2388, %v1512, 0.0
      %v2527 = vadd.f32 %v2525, %v2526
      %v2528 = vsel %vm2388, %v1517, 0.0
      %v2529 = vadd.f32 %v2527, %v2528
      %v2530 = vsel %vm2388, %v1520, 0.0
      %v2531 = vadd.f32 %v2529, %v2530
      %v2532 = vsel %vm2388, %v1525, 0.0
      %v2533 = vadd.f32 %v2531, %v2532
      %v2534 = vsel %vm2388, %v1528, 0.0
      %v2535 = vadd.f32 %v2533, %v2534
      %v2536 = vsel %vm2388, %v1533, 0.0
      %v2537 = vadd.f32 %v2535, %v2536
      %v2538 = vsel %vm2388, %v1536, 0.0
      %v2539 = vadd.f32 %v2537, %v2538
      %v2540 = vsel %vm2388, %v1541, 0.0
      %v2541 = vadd.f32 %v2539, %v2540
      %v2542 = vsel %vm2388, %v1544, 0.0
      %v2543 = vadd.f32 %v2541, %v2542
      %v2544 = vsel %vm2388, %v1549, 0.0
      %v2545 = vadd.f32 %v2543, %v2544
      %v2546 = vsel %vm2388, %v1552, 0.0
      %v2547 = vadd.f32 %v2545, %v2546
      %v2548 = vsel %vm2388, %v1557, 0.0
      %v2549 = vadd.f32 %v2547, %v2548
      %v2550 = vsel %vm2388, %v1560, 0.0
      %v2551 = vadd.f32 %v2549, %v2550
      %v2552 = vsel %vm2388, %v1565, 0.0
      %v2553 = vadd.f32 %v2551, %v2552
      %v2554 = vsel %vm2388, %v1568, 0.0
      %v2555 = vadd.f32 %v2553, %v2554
      %v2556 = vsel %vm2388, %v1573, 0.0
      %v2557 = vadd.f32 %v2555, %v2556
      %v2558 = vsel %vm2388, %v1576, 0.0
      %v2559 = vadd.f32 %v2557, %v2558
      %v2560 = vsel %vm2388, %v1581, 0.0
      %v2561 = vadd.f32 %v2559, %v2560
      %v2562 = vsel %vm2388, %v1584, 0.0
      %v2563 = vadd.f32 %v2561, %v2562
      %v2564 = vsel %vm2388, %v1589, 0.0
      %v2565 = vadd.f32 %v2563, %v2564
      %v2566 = vsel %vm2388, %v1592, 0.0
      %v2567 = vadd.f32 %v2565, %v2566
      %v2568 = vsel %vm2388, %v1597, 0.0
      %v2569 = vadd.f32 %v2567, %v2568
      %v2570 = vsel %vm2388, %v1600, 0.0
      %v2571 = vadd.f32 %v2569, %v2570
      %v2572 = vsel %vm2388, %v1605, 0.0
      %v2573 = vadd.f32 %v2571, %v2572
      %v2574 = vsel %vm2388, %v1608, 0.0
      %v2575 = vadd.f32 %v2573, %v2574
      %v2576 = vsel %vm2388, %v1613, 0.0
      %v2577 = vadd.f32 %v2575, %v2576
      %v2578 = vsel %vm2388, %v1616, 0.0
      %v2579 = vadd.f32 %v2577, %v2578
      %v2580 = vsel %vm2388, %v1621, 0.0
      %v2581 = vadd.f32 %v2579, %v2580
      %v2582 = vsel %vm2388, %v1624, 0.0
      %v2583 = vadd.f32 %v2581, %v2582
      %v2584 = vsel %vm2388, %v1629, 0.0
      %v2585 = vadd.f32 %v2583, %v2584
      %v2586 = vsel %vm2388, %v1632, 0.0
      %v2587 = vadd.f32 %v2585, %v2586
      %v2588 = vsel %vm2388, %v1637, 0.0
      %v2589 = vadd.f32 %v2587, %v2588
      %v2590 = vsel %vm2388, %v1640, 0.0
      %v2591 = vadd.f32 %v2589, %v2590
      %v2592 = vsel %vm2388, %v1645, 0.0
      %v2593 = vadd.f32 %v2591, %v2592
      %v2594 = vsel %vm2388, %v1648, 0.0
      %v2595 = vadd.f32 %v2593, %v2594
      %v2596 = vsel %vm2388, %v1653, 0.0
      %v2597 = vadd.f32 %v2595, %v2596
      %v2598 = vsel %vm2388, %v1656, 0.0
      %v2599 = vadd.f32 %v2597, %v2598
      %v2600 = vsel %vm2388, %v1661, 0.0
      %v2601 = vadd.f32 %v2599, %v2600
      %v2602 = vsel %vm2388, %v1664, 0.0
      %v2603 = vadd.f32 %v2601, %v2602
      %v2604 = vsel %vm2388, %v1669, 0.0
      %v2605 = vadd.f32 %v2603, %v2604
      %v2606 = vsel %vm2388, %v1672, 0.0
      %v2607 = vadd.f32 %v2605, %v2606
      %v2608 = vsel %vm2388, %v1677, 0.0
      %v2609 = vadd.f32 %v2607, %v2608
      %v2610 = vsel %vm2388, %v1680, 0.0
      %v2611 = vadd.f32 %v2609, %v2610
      %v2612 = vsel %vm2388, %v1685, 0.0
      %v2613 = vadd.f32 %v2611, %v2612
      %v2614 = vsel %vm2388, %v1688, 0.0
      %v2615 = vadd.f32 %v2613, %v2614
      %v2616 = vsel %vm2388, %v1693, 0.0
      %v2617 = vadd.f32 %v2615, %v2616
      %v2618 = vsel %vm2388, %v1696, 0.0
      %v2619 = vadd.f32 %v2617, %v2618
      %v2620 = vsel %vm2388, %v1701, 0.0
      %v2621 = vadd.f32 %v2619, %v2620
      %v2622 = vsel %vm2388, %v1704, 0.0
      %v2623 = vadd.f32 %v2621, %v2622
      %v2624 = vsel %vm2388, %v1709, 0.0
      %v2625 = vadd.f32 %v2623, %v2624
      %v2626 = vsel %vm2388, %v1712, 0.0
      %v2627 = vadd.f32 %v2625, %v2626
      %v2628 = vsel %vm2388, %v1717, 0.0
      %v2629 = vadd.f32 %v2627, %v2628
      %v2630 = vsel %vm2388, %v1720, 0.0
      %v2631 = vadd.f32 %v2629, %v2630
      %v2632 = vsel %vm2388, %v1725, 0.0
      %v2633 = vadd.f32 %v2631, %v2632
      %v2634 = vsel %vm2388, %v1728, 0.0
      %v2635 = vadd.f32 %v2633, %v2634
      %v2636 = vsel %vm2388, %v1733, 0.0
      %v2637 = vadd.f32 %v2635, %v2636
      %v2638 = vsel %vm2388, %v1736, 0.0
      %v2639 = vadd.f32 %v2637, %v2638
      %v2640 = vsel %vm2388, %v1741, 0.0
      %v2641 = vadd.f32 %v2639, %v2640
      %v2642 = vsel %vm2388, %v1744, 0.0
      %v2643 = vadd.f32 %v2641, %v2642
      %v2644 = vrot.slane %v2643, 4
      %v2645 = vadd.f32 %v2643, %v2644
      %v2646 = vrot.slane %v2645, 2
      %v2647 = vadd.f32 %v2645, %v2646
      %v2648 = vrot.slane %v2647, 1
      %v2649 = vadd.f32 %v2647, %v2648
      %vm2650 = vcmask 516096
      %2651 = vst.msk [vmem:[%s217] sm:$0x1] %vm2650, %v2649
      %v2652 = vmul.f32 %v1237, %v1237
      %v2653 = vmul.f32 %v1240, %v1240
      %v2654 = vmul.f32 %v1245, %v1245
      %v2655 = vmul.f32 %v1248, %v1248
      %v2656 = vmul.f32 %v1253, %v1253
      %v2657 = vmul.f32 %v1256, %v1256
      %v2658 = vmul.f32 %v1261, %v1261
      %v2659 = vmul.f32 %v1264, %v1264
      %v2660 = vmul.f32 %v1269, %v1269
      %v2661 = vmul.f32 %v1272, %v1272
      %v2662 = vmul.f32 %v1277, %v1277
      %v2663 = vmul.f32 %v1280, %v1280
      %v2664 = vmul.f32 %v1285, %v1285
      %v2665 = vmul.f32 %v1288, %v1288
      %v2666 = vmul.f32 %v1293, %v1293
      %v2667 = vmul.f32 %v1296, %v1296
      %v2668 = vmul.f32 %v1301, %v1301
      %v2669 = vmul.f32 %v1304, %v1304
      %v2670 = vmul.f32 %v1309, %v1309
      %v2671 = vmul.f32 %v1312, %v1312
      %v2672 = vmul.f32 %v1317, %v1317
      %v2673 = vmul.f32 %v1320, %v1320
      %v2674 = vmul.f32 %v1325, %v1325
      %v2675 = vmul.f32 %v1328, %v1328
      %v2676 = vmul.f32 %v1333, %v1333
      %v2677 = vmul.f32 %v1336, %v1336
      %v2678 = vmul.f32 %v1341, %v1341
      %v2679 = vmul.f32 %v1344, %v1344
      %v2680 = vmul.f32 %v1349, %v1349
      %v2681 = vmul.f32 %v1352, %v1352
      %v2682 = vmul.f32 %v1357, %v1357
      %v2683 = vmul.f32 %v1360, %v1360
      %v2684 = vmul.f32 %v1365, %v1365
      %v2685 = vmul.f32 %v1368, %v1368
      %v2686 = vmul.f32 %v1373, %v1373
      %v2687 = vmul.f32 %v1376, %v1376
      %v2688 = vmul.f32 %v1381, %v1381
      %v2689 = vmul.f32 %v1384, %v1384
      %v2690 = vmul.f32 %v1389, %v1389
      %v2691 = vmul.f32 %v1392, %v1392
      %v2692 = vmul.f32 %v1397, %v1397
      %v2693 = vmul.f32 %v1400, %v1400
      %v2694 = vmul.f32 %v1405, %v1405
      %v2695 = vmul.f32 %v1408, %v1408
      %v2696 = vmul.f32 %v1413, %v1413
      %v2697 = vmul.f32 %v1416, %v1416
      %v2698 = vmul.f32 %v1421, %v1421
      %v2699 = vmul.f32 %v1424, %v1424
      %v2700 = vmul.f32 %v1429, %v1429
      %v2701 = vmul.f32 %v1432, %v1432
      %v2702 = vmul.f32 %v1437, %v1437
      %v2703 = vmul.f32 %v1440, %v1440
      %v2704 = vmul.f32 %v1445, %v1445
      %v2705 = vmul.f32 %v1448, %v1448
      %v2706 = vmul.f32 %v1453, %v1453
      %v2707 = vmul.f32 %v1456, %v1456
      %v2708 = vmul.f32 %v1461, %v1461
      %v2709 = vmul.f32 %v1464, %v1464
      %v2710 = vmul.f32 %v1469, %v1469
      %v2711 = vmul.f32 %v1472, %v1472
      %v2712 = vmul.f32 %v1477, %v1477
      %v2713 = vmul.f32 %v1480, %v1480
      %v2714 = vmul.f32 %v1485, %v1485
      %v2715 = vmul.f32 %v1488, %v1488
      %v2716 = vmul.f32 %v1493, %v1493
      %v2717 = vmul.f32 %v1496, %v1496
      %v2718 = vmul.f32 %v1501, %v1501
      %v2719 = vmul.f32 %v1504, %v1504
      %v2720 = vmul.f32 %v1509, %v1509
      %v2721 = vmul.f32 %v1512, %v1512
      %v2722 = vmul.f32 %v1517, %v1517
      %v2723 = vmul.f32 %v1520, %v1520
      %v2724 = vmul.f32 %v1525, %v1525
      %v2725 = vmul.f32 %v1528, %v1528
      %v2726 = vmul.f32 %v1533, %v1533
      %v2727 = vmul.f32 %v1536, %v1536
      %v2728 = vmul.f32 %v1541, %v1541
      %v2729 = vmul.f32 %v1544, %v1544
      %v2730 = vmul.f32 %v1549, %v1549
      %v2731 = vmul.f32 %v1552, %v1552
      %v2732 = vmul.f32 %v1557, %v1557
      %v2733 = vmul.f32 %v1560, %v1560
      %v2734 = vmul.f32 %v1565, %v1565
      %v2735 = vmul.f32 %v1568, %v1568
      %v2736 = vmul.f32 %v1573, %v1573
      %v2737 = vmul.f32 %v1576, %v1576
      %v2738 = vmul.f32 %v1581, %v1581
      %v2739 = vmul.f32 %v1584, %v1584
      %v2740 = vmul.f32 %v1589, %v1589
      %v2741 = vmul.f32 %v1592, %v1592
      %v2742 = vmul.f32 %v1597, %v1597
      %v2743 = vmul.f32 %v1600, %v1600
      %v2744 = vmul.f32 %v1605, %v1605
      %v2745 = vmul.f32 %v1608, %v1608
      %v2746 = vmul.f32 %v1613, %v1613
      %v2747 = vmul.f32 %v1616, %v1616
      %v2748 = vmul.f32 %v1621, %v1621
      %v2749 = vmul.f32 %v1624, %v1624
      %v2750 = vmul.f32 %v1629, %v1629
      %v2751 = vmul.f32 %v1632, %v1632
      %v2752 = vmul.f32 %v1637, %v1637
      %v2753 = vmul.f32 %v1640, %v1640
      %v2754 = vmul.f32 %v1645, %v1645
      %v2755 = vmul.f32 %v1648, %v1648
      %v2756 = vmul.f32 %v1653, %v1653
      %v2757 = vmul.f32 %v1656, %v1656
      %v2758 = vmul.f32 %v1661, %v1661
      %v2759 = vmul.f32 %v1664, %v1664
      %v2760 = vmul.f32 %v1669, %v1669
      %v2761 = vmul.f32 %v1672, %v1672
      %v2762 = vmul.f32 %v1677, %v1677
      %v2763 = vmul.f32 %v1680, %v1680
      %v2764 = vmul.f32 %v1685, %v1685
      %v2765 = vmul.f32 %v1688, %v1688
      %v2766 = vmul.f32 %v1693, %v1693
      %v2767 = vmul.f32 %v1696, %v1696
      %v2768 = vmul.f32 %v1701, %v1701
      %v2769 = vmul.f32 %v1704, %v1704
      %v2770 = vmul.f32 %v1709, %v1709
      %v2771 = vmul.f32 %v1712, %v1712
      %v2772 = vmul.f32 %v1717, %v1717
      %v2773 = vmul.f32 %v1720, %v1720
      %v2774 = vmul.f32 %v1725, %v1725
      %v2775 = vmul.f32 %v1728, %v1728
      %v2776 = vmul.f32 %v1733, %v1733
      %v2777 = vmul.f32 %v1736, %v1736
      %v2778 = vmul.f32 %v1741, %v1741
      %v2779 = vmul.f32 %v1744, %v1744
      %v2780 = vsel %vm2388, %v2652, 0.0
      %v2781 = vsel %vm2388, %v2653, 0.0
      %v2782 = vadd.f32 %v2780, %v2781
      %v2783 = vsel %vm2388, %v2654, 0.0
      %v2784 = vadd.f32 %v2782, %v2783
      %v2785 = vsel %vm2388, %v2655, 0.0
      %v2786 = vadd.f32 %v2784, %v2785
      %v2787 = vsel %vm2388, %v2656, 0.0
      %v2788 = vadd.f32 %v2786, %v2787
      %v2789 = vsel %vm2388, %v2657, 0.0
      %v2790 = vadd.f32 %v2788, %v2789
      %v2791 = vsel %vm2388, %v2658, 0.0
      %v2792 = vadd.f32 %v2790, %v2791
      %v2793 = vsel %vm2388, %v2659, 0.0
      %v2794 = vadd.f32 %v2792, %v2793
      %v2795 = vsel %vm2388, %v2660, 0.0
      %v2796 = vadd.f32 %v2794, %v2795
      %v2797 = vsel %vm2388, %v2661, 0.0
      %v2798 = vadd.f32 %v2796, %v2797
      %v2799 = vsel %vm2388, %v2662, 0.0
      %v2800 = vadd.f32 %v2798, %v2799
      %v2801 = vsel %vm2388, %v2663, 0.0
      %v2802 = vadd.f32 %v2800, %v2801
      %v2803 = vsel %vm2388, %v2664, 0.0
      %v2804 = vadd.f32 %v2802, %v2803
      %v2805 = vsel %vm2388, %v2665, 0.0
      %v2806 = vadd.f32 %v2804, %v2805
      %v2807 = vsel %vm2388, %v2666, 0.0
      %v2808 = vadd.f32 %v2806, %v2807
      %v2809 = vsel %vm2388, %v2667, 0.0
      %v2810 = vadd.f32 %v2808, %v2809
      %v2811 = vsel %vm2388, %v2668, 0.0
      %v2812 = vadd.f32 %v2810, %v2811
      %v2813 = vsel %vm2388, %v2669, 0.0
      %v2814 = vadd.f32 %v2812, %v2813
      %v2815 = vsel %vm2388, %v2670, 0.0
      %v2816 = vadd.f32 %v2814, %v2815
      %v2817 = vsel %vm2388, %v2671, 0.0
      %v2818 = vadd.f32 %v2816, %v2817
      %v2819 = vsel %vm2388, %v2672, 0.0
      %v2820 = vadd.f32 %v2818, %v2819
      %v2821 = vsel %vm2388, %v2673, 0.0
      %v2822 = vadd.f32 %v2820, %v2821
      %v2823 = vsel %vm2388, %v2674, 0.0
      %v2824 = vadd.f32 %v2822, %v2823
      %v2825 = vsel %vm2388, %v2675, 0.0
      %v2826 = vadd.f32 %v2824, %v2825
      %v2827 = vsel %vm2388, %v2676, 0.0
      %v2828 = vadd.f32 %v2826, %v2827
      %v2829 = vsel %vm2388, %v2677, 0.0
      %v2830 = vadd.f32 %v2828, %v2829
      %v2831 = vsel %vm2388, %v2678, 0.0
      %v2832 = vadd.f32 %v2830, %v2831
      %v2833 = vsel %vm2388, %v2679, 0.0
      %v2834 = vadd.f32 %v2832, %v2833
      %v2835 = vsel %vm2388, %v2680, 0.0
      %v2836 = vadd.f32 %v2834, %v2835
      %v2837 = vsel %vm2388, %v2681, 0.0
      %v2838 = vadd.f32 %v2836, %v2837
      %v2839 = vsel %vm2388, %v2682, 0.0
      %v2840 = vadd.f32 %v2838, %v2839
      %v2841 = vsel %vm2388, %v2683, 0.0
      %v2842 = vadd.f32 %v2840, %v2841
      %v2843 = vsel %vm2388, %v2684, 0.0
      %v2844 = vadd.f32 %v2842, %v2843
      %v2845 = vsel %vm2388, %v2685, 0.0
      %v2846 = vadd.f32 %v2844, %v2845
      %v2847 = vsel %vm2388, %v2686, 0.0
      %v2848 = vadd.f32 %v2846, %v2847
      %v2849 = vsel %vm2388, %v2687, 0.0
      %v2850 = vadd.f32 %v2848, %v2849
      %v2851 = vsel %vm2388, %v2688, 0.0
      %v2852 = vadd.f32 %v2850, %v2851
      %v2853 = vsel %vm2388, %v2689, 0.0
      %v2854 = vadd.f32 %v2852, %v2853
      %v2855 = vsel %vm2388, %v2690, 0.0
      %v2856 = vadd.f32 %v2854, %v2855
      %v2857 = vsel %vm2388, %v2691, 0.0
      %v2858 = vadd.f32 %v2856, %v2857
      %v2859 = vsel %vm2388, %v2692, 0.0
      %v2860 = vadd.f32 %v2858, %v2859
      %v2861 = vsel %vm2388, %v2693, 0.0
      %v2862 = vadd.f32 %v2860, %v2861
      %v2863 = vsel %vm2388, %v2694, 0.0
      %v2864 = vadd.f32 %v2862, %v2863
      %v2865 = vsel %vm2388, %v2695, 0.0
      %v2866 = vadd.f32 %v2864, %v2865
      %v2867 = vsel %vm2388, %v2696, 0.0
      %v2868 = vadd.f32 %v2866, %v2867
      %v2869 = vsel %vm2388, %v2697, 0.0
      %v2870 = vadd.f32 %v2868, %v2869
      %v2871 = vsel %vm2388, %v2698, 0.0
      %v2872 = vadd.f32 %v2870, %v2871
      %v2873 = vsel %vm2388, %v2699, 0.0
      %v2874 = vadd.f32 %v2872, %v2873
      %v2875 = vsel %vm2388, %v2700, 0.0
      %v2876 = vadd.f32 %v2874, %v2875
      %v2877 = vsel %vm2388, %v2701, 0.0
      %v2878 = vadd.f32 %v2876, %v2877
      %v2879 = vsel %vm2388, %v2702, 0.0
      %v2880 = vadd.f32 %v2878, %v2879
      %v2881 = vsel %vm2388, %v2703, 0.0
      %v2882 = vadd.f32 %v2880, %v2881
      %v2883 = vsel %vm2388, %v2704, 0.0
      %v2884 = vadd.f32 %v2882, %v2883
      %v2885 = vsel %vm2388, %v2705, 0.0
      %v2886 = vadd.f32 %v2884, %v2885
      %v2887 = vsel %vm2388, %v2706, 0.0
      %v2888 = vadd.f32 %v2886, %v2887
      %v2889 = vsel %vm2388, %v2707, 0.0
      %v2890 = vadd.f32 %v2888, %v2889
      %v2891 = vsel %vm2388, %v2708, 0.0
      %v2892 = vadd.f32 %v2890, %v2891
      %v2893 = vsel %vm2388, %v2709, 0.0
      %v2894 = vadd.f32 %v2892, %v2893
      %v2895 = vsel %vm2388, %v2710, 0.0
      %v2896 = vadd.f32 %v2894, %v2895
      %v2897 = vsel %vm2388, %v2711, 0.0
      %v2898 = vadd.f32 %v2896, %v2897
      %v2899 = vsel %vm2388, %v2712, 0.0
      %v2900 = vadd.f32 %v2898, %v2899
      %v2901 = vsel %vm2388, %v2713, 0.0
      %v2902 = vadd.f32 %v2900, %v2901
      %v2903 = vsel %vm2388, %v2714, 0.0
      %v2904 = vadd.f32 %v2902, %v2903
      %v2905 = vsel %vm2388, %v2715, 0.0
      %v2906 = vadd.f32 %v2904, %v2905
      %v2907 = vsel %vm2388, %v2716, 0.0
      %v2908 = vadd.f32 %v2906, %v2907
      %v2909 = vsel %vm2388, %v2717, 0.0
      %v2910 = vadd.f32 %v2908, %v2909
      %v2911 = vsel %vm2388, %v2718, 0.0
      %v2912 = vadd.f32 %v2910, %v2911
      %v2913 = vsel %vm2388, %v2719, 0.0
      %v2914 = vadd.f32 %v2912, %v2913
      %v2915 = vsel %vm2388, %v2720, 0.0
      %v2916 = vadd.f32 %v2914, %v2915
      %v2917 = vsel %vm2388, %v2721, 0.0
      %v2918 = vadd.f32 %v2916, %v2917
      %v2919 = vsel %vm2388, %v2722, 0.0
      %v2920 = vadd.f32 %v2918, %v2919
      %v2921 = vsel %vm2388, %v2723, 0.0
      %v2922 = vadd.f32 %v2920, %v2921
      %v2923 = vsel %vm2388, %v2724, 0.0
      %v2924 = vadd.f32 %v2922, %v2923
      %v2925 = vsel %vm2388, %v2725, 0.0
      %v2926 = vadd.f32 %v2924, %v2925
      %v2927 = vsel %vm2388, %v2726, 0.0
      %v2928 = vadd.f32 %v2926, %v2927
      %v2929 = vsel %vm2388, %v2727, 0.0
      %v2930 = vadd.f32 %v2928, %v2929
      %v2931 = vsel %vm2388, %v2728, 0.0
      %v2932 = vadd.f32 %v2930, %v2931
      %v2933 = vsel %vm2388, %v2729, 0.0
      %v2934 = vadd.f32 %v2932, %v2933
      %v2935 = vsel %vm2388, %v2730, 0.0
      %v2936 = vadd.f32 %v2934, %v2935
      %v2937 = vsel %vm2388, %v2731, 0.0
      %v2938 = vadd.f32 %v2936, %v2937
      %v2939 = vsel %vm2388, %v2732, 0.0
      %v2940 = vadd.f32 %v2938, %v2939
      %v2941 = vsel %vm2388, %v2733, 0.0
      %v2942 = vadd.f32 %v2940, %v2941
      %v2943 = vsel %vm2388, %v2734, 0.0
      %v2944 = vadd.f32 %v2942, %v2943
      %v2945 = vsel %vm2388, %v2735, 0.0
      %v2946 = vadd.f32 %v2944, %v2945
      %v2947 = vsel %vm2388, %v2736, 0.0
      %v2948 = vadd.f32 %v2946, %v2947
      %v2949 = vsel %vm2388, %v2737, 0.0
      %v2950 = vadd.f32 %v2948, %v2949
      %v2951 = vsel %vm2388, %v2738, 0.0
      %v2952 = vadd.f32 %v2950, %v2951
      %v2953 = vsel %vm2388, %v2739, 0.0
      %v2954 = vadd.f32 %v2952, %v2953
      %v2955 = vsel %vm2388, %v2740, 0.0
      %v2956 = vadd.f32 %v2954, %v2955
      %v2957 = vsel %vm2388, %v2741, 0.0
      %v2958 = vadd.f32 %v2956, %v2957
      %v2959 = vsel %vm2388, %v2742, 0.0
      %v2960 = vadd.f32 %v2958, %v2959
      %v2961 = vsel %vm2388, %v2743, 0.0
      %v2962 = vadd.f32 %v2960, %v2961
      %v2963 = vsel %vm2388, %v2744, 0.0
      %v2964 = vadd.f32 %v2962, %v2963
      %v2965 = vsel %vm2388, %v2745, 0.0
      %v2966 = vadd.f32 %v2964, %v2965
      %v2967 = vsel %vm2388, %v2746, 0.0
      %v2968 = vadd.f32 %v2966, %v2967
      %v2969 = vsel %vm2388, %v2747, 0.0
      %v2970 = vadd.f32 %v2968, %v2969
      %v2971 = vsel %vm2388, %v2748, 0.0
      %v2972 = vadd.f32 %v2970, %v2971
      %v2973 = vsel %vm2388, %v2749, 0.0
      %v2974 = vadd.f32 %v2972, %v2973
      %v2975 = vsel %vm2388, %v2750, 0.0
      %v2976 = vadd.f32 %v2974, %v2975
      %v2977 = vsel %vm2388, %v2751, 0.0
      %v2978 = vadd.f32 %v2976, %v2977
      %v2979 = vsel %vm2388, %v2752, 0.0
      %v2980 = vadd.f32 %v2978, %v2979
      %v2981 = vsel %vm2388, %v2753, 0.0
      %v2982 = vadd.f32 %v2980, %v2981
      %v2983 = vsel %vm2388, %v2754, 0.0
      %v2984 = vadd.f32 %v2982, %v2983
      %v2985 = vsel %vm2388, %v2755, 0.0
      %v2986 = vadd.f32 %v2984, %v2985
      %v2987 = vsel %vm2388, %v2756, 0.0
      %v2988 = vadd.f32 %v2986, %v2987
      %v2989 = vsel %vm2388, %v2757, 0.0
      %v2990 = vadd.f32 %v2988, %v2989
      %v2991 = vsel %vm2388, %v2758, 0.0
      %v2992 = vadd.f32 %v2990, %v2991
      %v2993 = vsel %vm2388, %v2759, 0.0
      %v2994 = vadd.f32 %v2992, %v2993
      %v2995 = vsel %vm2388, %v2760, 0.0
      %v2996 = vadd.f32 %v2994, %v2995
      %v2997 = vsel %vm2388, %v2761, 0.0
      %v2998 = vadd.f32 %v2996, %v2997
      %v2999 = vsel %vm2388, %v2762, 0.0
      %v3000 = vadd.f32 %v2998, %v2999
      %v3001 = vsel %vm2388, %v2763, 0.0
      %v3002 = vadd.f32 %v3000, %v3001
      %v3003 = vsel %vm2388, %v2764, 0.0
      %v3004 = vadd.f32 %v3002, %v3003
      %v3005 = vsel %vm2388, %v2765, 0.0
      %v3006 = vadd.f32 %v3004, %v3005
      %v3007 = vsel %vm2388, %v2766, 0.0
      %v3008 = vadd.f32 %v3006, %v3007
      %v3009 = vsel %vm2388, %v2767, 0.0
      %v3010 = vadd.f32 %v3008, %v3009
      %v3011 = vsel %vm2388, %v2768, 0.0
      %v3012 = vadd.f32 %v3010, %v3011
      %v3013 = vsel %vm2388, %v2769, 0.0
      %v3014 = vadd.f32 %v3012, %v3013
      %v3015 = vsel %vm2388, %v2770, 0.0
      %v3016 = vadd.f32 %v3014, %v3015
      %v3017 = vsel %vm2388, %v2771, 0.0
      %v3018 = vadd.f32 %v3016, %v3017
      %v3019 = vsel %vm2388, %v2772, 0.0
      %v3020 = vadd.f32 %v3018, %v3019
      %v3021 = vsel %vm2388, %v2773, 0.0
      %v3022 = vadd.f32 %v3020, %v3021
      %v3023 = vsel %vm2388, %v2774, 0.0
      %v3024 = vadd.f32 %v3022, %v3023
      %v3025 = vsel %vm2388, %v2775, 0.0
      %v3026 = vadd.f32 %v3024, %v3025
      %v3027 = vsel %vm2388, %v2776, 0.0
      %v3028 = vadd.f32 %v3026, %v3027
      %v3029 = vsel %vm2388, %v2777, 0.0
      %v3030 = vadd.f32 %v3028, %v3029
      %v3031 = vsel %vm2388, %v2778, 0.0
      %v3032 = vadd.f32 %v3030, %v3031
      %v3033 = vsel %vm2388, %v2779, 0.0
      %v3034 = vadd.f32 %v3032, %v3033
      %v3035 = vrot.slane %v3034, 4
      %v3036 = vadd.f32 %v3034, %v3035
      %v3037 = vrot.slane %v3036, 2
      %v3038 = vadd.f32 %v3036, %v3037
      %v3039 = vrot.slane %v3038, 1
      %v3040 = vadd.f32 %v3038, %v3039
      %3041 = vst.msk [vmem:[%s220] sm:$0x1] %vm2650, %v3040
      %s3042 = smul.u32 128, %s16
      %p3043 = scmp.lt.s32.totalorder %s3042, 255
      %s3044 = scalar_select %p3043, %s3042, 255
      %s3045 = smul.addr %s3044, 4
      %s3046 = scalar_lea.vmem %s2, %s3045
      %p3047 = scmp.lt.s32.totalorder %s16, 1
      %s3048 = scalar_select %p3047, %s16, 1
      %s3049 = scalar_lea.vmem %s3, %s3048
      %p3050 = scmp.lt.s32.totalorder %s16, 1
      %s3051 = scalar_select %p3050, %s16, 1
      %s3052 = scalar_lea.vmem %s4, %s3051
      // Predicated region
      $region29: #{resnet_client_forward.2} parent=27 // pred_check
        %p3053 = pneg %p81
      $region30: #{resnet_client_forward.2} parent=27 // pred_check_branch
        %3055 = sbr.rel (%p3053) target = $region32
      $region31: #{resnet_client_forward.2} parent=27 // pred_region
        %s3056 = smul.u32 128, %s16
      $region32: #{resnet_client_forward.2} parent=27 // pred_fallthru
        _
      // Predicated region
      $region33: #{resnet_client_forward.2} parent=27 // pred_check
        %p3057 = pneg %p107
      $region34: #{resnet_client_forward.2} parent=27 // pred_check_branch
        %3059 = sbr.rel (%p3057) target = $region36
      $region35: #{resnet_client_forward.2} parent=27 // pred_region
        _
      $region36: #{resnet_client_forward.2} parent=27 // pred_fallthru
        _
      // Predicated region
      $region37: #{resnet_client_forward.2} parent=27 // pred_check
        %p3060 = pneg %p133
      $region38: #{resnet_client_forward.2} parent=27 // pred_check_branch
        %3062 = sbr.rel (%p3060) target = $region40
      $region39: #{resnet_client_forward.2} parent=27 // pred_region
        _
      $region40: #{resnet_client_forward.2} parent=27 // pred_fallthru
        _
    $region28: #{resnet_client_forward.2} parent=5 // pred_fallthru
      _
    %p3063 = scmp.le.s32.totalorder 2, %s11
    // Predicated region
    $region41: #{resnet_client_forward.2} parent=5 // pred_check
      %p3064 = pneg %p3063
    $region42: #{resnet_client_forward.2} parent=5 // pred_check_branch
      %3066 = sbr.rel (%p3064) target = $region44
    $region43: #{resnet_client_forward.2} parent=5 // pred_region
      %s3067 = ssub.s32 %s11, 2
      // Predicated region
      $region45: #{resnet_client_forward.2} parent=43 // pred_check
        %p3068 = pneg %p87
      $region46: #{resnet_client_forward.2} parent=43 // pred_check_branch
        %3070 = sbr.rel (%p3068) target = $region48
      $region47: #{resnet_client_forward.2} parent=43 // pred_region
        %s3071 = smul.u32 128, %s17
        %p3072 = scmp.lt.s32.totalorder %s3071, 255
        %s3073 = scalar_select %p3072, %s3071, 255
        %s3074 = smul.addr %s3073, 4
        %s3075 = scalar_lea.vmem %s2, %s3074
      $region48: #{resnet_client_forward.2} parent=43 // pred_fallthru
        _
      // Predicated region
      $region49: #{resnet_client_forward.2} parent=43 // pred_check
        %p3076 = pneg %p113
      $region50: #{resnet_client_forward.2} parent=43 // pred_check_branch
        %3078 = sbr.rel (%p3076) target = $region52
      $region51: #{resnet_client_forward.2} parent=43 // pred_region
        %p3079 = scmp.lt.s32.totalorder %s17, 1
        %s3080 = scalar_select %p3079, %s17, 1
        %s3081 = scalar_lea.vmem %s3, %s3080
      $region52: #{resnet_client_forward.2} parent=43 // pred_fallthru
        _
      // Predicated region
      $region53: #{resnet_client_forward.2} parent=43 // pred_check
        %p3082 = pneg %p139
      $region54: #{resnet_client_forward.2} parent=43 // pred_check_branch
        %3084 = sbr.rel (%p3082) target = $region56
      $region55: #{resnet_client_forward.2} parent=43 // pred_region
        %p3085 = scmp.lt.s32.totalorder %s17, 1
        %s3086 = scalar_select %p3085, %s17, 1
        %s3087 = scalar_lea.vmem %s4, %s3086
      $region56: #{resnet_client_forward.2} parent=43 // pred_fallthru
        _
    $region44: #{resnet_client_forward.2} parent=5 // pred_fallthru
      _
  $region6: #{resnet_client_forward.2} parent=0 // loop_footer
    %s15 = sadd.s32 1, %s11
  $region7: #{resnet_client_forward.2} parent=0 // loop_footer_branch
    %10 = sbr.rel target = $region3
  $region8: #{resnet_client_forward.2} parent=0 // loop_exit
    _

</llo_original>
